<compile_context>
chip_gen: v7x
topology: tpu7x:2x2x1
jax: 0.10.0
libtpu: 0.0.40
codegen_flags: <defaults>
</compile_context>

<pallas_src>
import functools

import jax
import jax.numpy as jnp
from jax.experimental import pallas as pl
from jax.experimental.pallas import tpu as pltpu

BN_EPS = 1e-5
MAX_TM = 512            # max lane tile of the fused GEMM (multiple of 128)


# ---------------------------------------------------------------------------
# Pallas kernel: fused transposed GEMM + bias (+ residual) (+ ReLU)
# ---------------------------------------------------------------------------
def _make_fused_kernel(apply_relu: bool, has_residual: bool):
    if has_residual:
        def kernel(b_ref, a_ref, bias_ref, res_ref, o_ref):
            acc = jnp.dot(b_ref[...], a_ref[...],
                          preferred_element_type=jnp.float32)
            acc = acc + bias_ref[...]                       # (Cout,1) bcast
            acc = acc + res_ref[...].astype(jnp.float32)    # f32 epilogue
            if apply_relu:
                acc = jnp.maximum(acc, 0.0)
            o_ref[...] = acc.astype(o_ref.dtype)
    else:
        def kernel(b_ref, a_ref, bias_ref, o_ref):
            acc = jnp.dot(b_ref[...], a_ref[...],
                          preferred_element_type=jnp.float32)
            acc = acc + bias_ref[...]
            if apply_relu:
                acc = jnp.maximum(acc, 0.0)
            o_ref[...] = acc.astype(o_ref.dtype)
    return kernel


def _pick_tm(m: int) -> int:
    """Large tile to amortize grid overhead, but keep >=2 steps when possible."""
    m128 = max(128, ((m + 127) // 128) * 128)
    half = max(128, ((pl.cdiv(m, 2) + 127) // 128) * 128)
    return min(MAX_TM, half, m128)


def fused_gemm_bn(b_t, a_t, bias, residual=None, relu=True,
                  out_dtype=jnp.bfloat16):
    """out^T[Nc, M] = maybe_relu(b_t[Nc,K] @ a_t[K,M] + bias[Nc,1] (+ res))."""
    nc, k = b_t.shape
    k2, m = a_t.shape
    assert k == k2
    tm = _pick_tm(m)
    grid = (pl.cdiv(m, tm),)

    args = [b_t, a_t, bias]
    in_specs = [
        pl.BlockSpec((nc, k), lambda i: (0, 0)),   # scale-folded weights
        pl.BlockSpec((k, tm), lambda i: (0, i)),   # im2col^T, lane tile of M
        pl.BlockSpec((nc, 1), lambda i: (0, 0)),   # bias column
    ]
    if residual is not None:
        args.append(residual)
        in_specs.append(pl.BlockSpec((nc, tm), lambda i: (0, i)))

    return pl.pallas_call(
        _make_fused_kernel(relu, residual is not None),
        out_shape=jax.ShapeDtypeStruct((nc, m), out_dtype),
        grid=grid,
        in_specs=in_specs,
        out_specs=pl.BlockSpec((nc, tm), lambda i: (0, i)),
        compiler_params=pltpu.CompilerParams(
            dimension_semantics=("parallel",),
            vmem_limit_bytes=32 * 1024 * 1024),
    )(*args)


# ---------------------------------------------------------------------------
# Conv3d (+BN+ReLU+residual) via transposed im2col + fused Pallas GEMM
# ---------------------------------------------------------------------------
def _im2col_t(xp, ksize, stride):
    """xp: (C, N, Dp, Hp, Wp) padded -> ([taps*C, N*Do*Ho*Wo], (N,Do,Ho,Wo))."""
    kt, kh, kw = ksize
    sd, sh, sw = stride
    c, n, dp, hp, wp = xp.shape
    do = (dp - kt) // sd + 1
    ho = (hp - kh) // sh + 1
    wo = (wp - kw) // sw + 1
    taps = []
    for a in range(kt):
        for b in range(kh):
            for cc in range(kw):
                taps.append(xp[:, :,
                               a:a + (do - 1) * sd + 1:sd,
                               b:b + (ho - 1) * sh + 1:sh,
                               cc:cc + (wo - 1) * sw + 1:sw])
    # TODO(synk): fold the tap loop into the Pallas grid (implicit im2col with
    # an "arbitrary" reduction axis + f32 VMEM accumulator) to avoid
    # materialising the taps*C matrix in HBM; kept as plain-JAX glue for now.
    a_t = jnp.stack(taps, axis=0)                  # (taps, C, N, Do, Ho, Wo)
    a_t = a_t.reshape(kt * kh * kw * c, n * do * ho * wo)
    return a_t, (n, do, ho, wo)


def conv3d_bn(x, w, bn, stride, padding, relu=True, residual=None):
    """x: (Cin, N, D, H, W) bf16; w: PyTorch layout [Cout, Cin, kt, kh, kw]."""
    cout, cin, kt, kh, kw = w.shape
    assert x.shape[0] == cin
    pd, ph, pw = padding
    xp = jnp.pad(x, ((0, 0), (0, 0), (pd, pd), (ph, ph), (pw, pw)))
    a_t, (n, do, ho, wo) = _im2col_t(xp, (kt, kh, kw), stride)

    gamma, beta, mean, var = bn
    scale = gamma / jnp.sqrt(var + BN_EPS)
    bias = (beta - mean * scale).reshape(cout, 1).astype(jnp.float32)
    # Fold BN scale into the weight matrix; feed the MXU bf16 operands.
    # Feature ordering is (kt, kh, kw) major, Cin minor -> matches _im2col_t.
    b_t = jnp.transpose(w, (0, 2, 3, 4, 1)).reshape(cout, kt * kh * kw * cin)
    b_t = (b_t * scale[:, None]).astype(jnp.bfloat16)

    out = fused_gemm_bn(b_t, a_t.astype(jnp.bfloat16), bias,
                        residual=residual, relu=relu)
    return out.reshape(cout, n, do, ho, wo)


# ---------------------------------------------------------------------------
# Parameter init (deterministic, matches shapes of the PyTorch module)
# ---------------------------------------------------------------------------
def _kaiming(key, shape):
    # nn.init.kaiming_normal_ default: fan_in mode, gain = sqrt(2)
    cout, cin, kt, kh, kw = shape
    fan_in = cin * kt * kh * kw
    std = (2.0 / fan_in) ** 0.5
    return jax.random.normal(key, shape, dtype=jnp.float32) * std


def _bn_params(c):
    return (jnp.ones((c,), jnp.float32),   # gamma
            jnp.zeros((c,), jnp.float32),  # beta
            jnp.zeros((c,), jnp.float32),  # running mean
            jnp.ones((c,), jnp.float32))   # running var


def make_basic_block_params(key, in_planes, planes, t_size, with_downsample):
    k1, k2, k3 = jax.random.split(key, 3)
    p = {
        "conv1_w": _kaiming(k1, (planes, in_planes, t_size, 3, 3)),
        "bn1": _bn_params(planes),
        "conv2_w": _kaiming(k2, (planes, planes, t_size, 3, 3)),
        "bn2": _bn_params(planes),
    }
    if with_downsample:
        p["down_w"] = _kaiming(k3, (planes, in_planes, 1, 1, 1))
        p["down_bn"] = _bn_params(planes)
    return p


def make_resnet_params(key, block_inplanes, n_input_channels, conv1_t_size):
    ks = jax.random.split(key, 8)
    in_planes = block_inplanes[0]
    params = {
        "conv1_w": _kaiming(ks[0], (in_planes, n_input_channels,
                                    conv1_t_size, 3, 3)),
        "bn1": _bn_params(in_planes),
    }
    # layer1: planes = block_inplanes[0], stride (1,2,2) -> downsample needed
    params["layer1"] = [make_basic_block_params(
        ks[1], in_planes, block_inplanes[0], conv1_t_size, True)]
    in_planes = block_inplanes[0]
    # layer2: planes = block_inplanes[1], stride (1,2,2) -> downsample needed
    params["layer2"] = [make_basic_block_params(
        ks[2], in_planes, block_inplanes[1], conv1_t_size, True)]
    return params


# ---------------------------------------------------------------------------
# Forward pass (matches ResNet.forward: conv1->bn1->relu->layer1->layer2)
# ---------------------------------------------------------------------------
def basic_block_forward(x, p, t_pad, stride):
    out = conv3d_bn(x, p["conv1_w"], p["bn1"],
                    stride, (t_pad, 1, 1), relu=True)
    if "down_w" in p:
        residual = conv3d_bn(x, p["down_w"], p["down_bn"],
                             stride, (0, 0, 0), relu=False)
    else:
        residual = x
    # residual add in the same (Cout, M) transposed layout as the GEMM output
    res_flat = residual.reshape(residual.shape[0], -1)
    # conv2 + bn2 + residual add + final relu fused in one Pallas call
    out = conv3d_bn(out, p["conv2_w"], p["bn2"],
                    (1, 1, 1), (t_pad, 1, 1), relu=True, residual=res_flat)
    return out


def resnet_forward(x_ncdhw, params, conv1_t_size=5):
    t_pad = conv1_t_size // 2
    # NCDHW -> (C, N, D, H, W) channels-first layout for lane-dense GEMMs;
    # bf16 activations halve HBM traffic (matmuls accumulate in f32).
    x = jnp.transpose(x_ncdhw, (1, 0, 2, 3, 4)).astype(jnp.bfloat16)

    x = conv3d_bn(x, params["conv1_w"], params["bn1"],
                  (1, 1, 1), (t_pad, 1, 1), relu=True)
    for p in params["layer1"]:
        x = basic_block_forward(x, p, t_pad, (1, 2, 2))
    low_level_feat = x
    for p in params["layer2"]:
        x = basic_block_forward(x, p, t_pad, (1, 2, 2))

    # back to NCDHW, f32 like PyTorch
    out = jnp.transpose(x, (1, 0, 2, 3, 4)).astype(jnp.float32)
    low = jnp.transpose(low_level_feat, (1, 0, 2, 3, 4)).astype(jnp.float32)
    return out, low


# ---------------------------------------------------------------------------
if __name__ == "__main__":
    key = jax.random.PRNGKey(0)
    kx, kp = jax.random.split(key)

    # small instantiation: block_inplanes=[8,16,32,64], layers=[1,1,1,1]
    # (only layer1/layer2 are used by forward), n_input_channels=3,
    # conv1_t_size=5
    block_inplanes = [8, 16, 32, 64]
    n_input_channels = 3
    conv1_t_size = 5

    # input: NCDHW = [2, 3, 4, 16, 16]
    x = jax.random.normal(kx, (2, n_input_channels, 4, 16, 16),
                          dtype=jnp.float32)
    params = make_resnet_params(kp, block_inplanes, n_input_channels,
                                conv1_t_size)

    fwd = jax.jit(functools.partial(resnet_forward,
                                    conv1_t_size=conv1_t_size))
    out, low_level_feat = fwd(x, params)
    jax.block_until_ready(out)
    jax.block_until_ready(low_level_feat)

    assert out.shape == (2, block_inplanes[1], 4, 4, 4), out.shape
    assert low_level_feat.shape == (2, block_inplanes[0], 4, 8, 8), \
        low_level_feat.shape
    assert jnp.all(jnp.isfinite(out)) and jnp.all(jnp.isfinite(low_level_feat))

    # TODO(synk): `block` is an injected ctor in the reference; a standard 3-D
    # BasicBlock (expansion=1) with shortcut_type='B' is assumed here.
    print("KERNEL_OK")
</pallas_src>

<mosaic_0001>
module attributes {stable_mosaic.version = 11 : i64} {
  func.func @kernel(%arg0: i32, %arg1: memref<8x135xbf16, #tpu.memory_space<vmem>>, %arg2: memref<135x512xbf16, #tpu.memory_space<vmem>>, %arg3: memref<8x1xf32, #tpu.memory_space<vmem>>, %arg4: memref<8x512xbf16, #tpu.memory_space<vmem>>) attributes {dimension_semantics = [#tpu.dimension_semantics<parallel>], iteration_bounds = array<i64: 4>, scalar_prefetch = 0 : i64, scratch_operands = 0 : i64, tpu.core_type = #tpu.core_type<tc>, window_params = [{pipeline_mode = #tpu.pipeline_mode<synchronous>, transform_indices = @transform_0, window_bounds = array<i64: 8, 135>}, {transform_indices = @transform_1, window_bounds = array<i64: 135, 512>}, {pipeline_mode = #tpu.pipeline_mode<synchronous>, transform_indices = @transform_2, window_bounds = array<i64: 8, 1>}, {transform_indices = @transform_3, window_bounds = array<i64: 8, 512>}]} {
    %c0 = arith.constant 0 : index
    %c0_0 = arith.constant 0 : index
    %0 = vector.load %arg1[%c0, %c0_0] : memref<8x135xbf16, #tpu.memory_space<vmem>>, vector<8x135xbf16>
    %c0_1 = arith.constant 0 : index
    %c0_2 = arith.constant 0 : index
    %1 = vector.load %arg2[%c0_1, %c0_2] : memref<135x512xbf16, #tpu.memory_space<vmem>>, vector<135x512xbf16>
    %cst = arith.constant dense<0.000000e+00> : vector<8x512xf32>
    %2 = tpu.matmul %0, %1, %cst {dimension_numbers = #tpu.dot_dimension_numbers<[1], [0], [0], [1], [0, 0, 1, 1], [], []>} : vector<8x135xbf16>, vector<135x512xbf16>, vector<8x512xf32> -> vector<8x512xf32>
    %c0_3 = arith.constant 0 : index
    %c0_4 = arith.constant 0 : index
    %3 = vector.load %arg3[%c0_3, %c0_4] : memref<8x1xf32, #tpu.memory_space<vmem>>, vector<8x1xf32>
    %4 = vector.broadcast %3 : vector<8x1xf32> to vector<8x512xf32>
    %5 = arith.addf %2, %4 : vector<8x512xf32>
    %cst_5 = arith.constant 0.000000e+00 : f32
    %6 = vector.broadcast %cst_5 : f32 to vector<8x512xf32>
    %7 = arith.maximumf %5, %6 : vector<8x512xf32>
    %8 = arith.truncf %7 : vector<8x512xf32> to vector<8x512xbf16>
    %c0_6 = arith.constant 0 : index
    %c0_7 = arith.constant 0 : index
    %9 = vector.load %arg4[%c0_6, %c0_7] : memref<8x512xbf16, #tpu.memory_space<vmem>>, vector<8x512xbf16>
    tpu.vector_store %arg4[%c0_6, %c0_7], %8 {strides = array<i32>} : memref<8x512xbf16, #tpu.memory_space<vmem>>, vector<8x512xbf16>,
    return
  }
  func.func @transform_0(%arg0: i32) -> (i32, i32) {
    %c0_i32 = arith.constant 0 : i32
    %c0_i32_0 = arith.constant 0 : i32
    %c0_i32_1 = arith.constant 0 : i32
    return %c0_i32, %c0_i32_0 : i32, i32
  }
  func.func @transform_1(%arg0: i32) -> (i32, i32) {
    %c0_i32 = arith.constant 0 : i32
    %c0_i32_0 = arith.constant 0 : i32
    return %c0_i32, %arg0 : i32, i32
  }
  func.func @transform_2(%arg0: i32) -> (i32, i32) {
    %c0_i32 = arith.constant 0 : i32
    %c0_i32_0 = arith.constant 0 : i32
    %c0_i32_1 = arith.constant 0 : i32
    return %c0_i32, %c0_i32_0 : i32, i32
  }
  func.func @transform_3(%arg0: i32) -> (i32, i32) {
    %c0_i32 = arith.constant 0 : i32
    %c0_i32_0 = arith.constant 0 : i32
    return %c0_i32, %arg0 : i32, i32
  }
}

module attributes {stable_mosaic.version = 11 : i64} {
  func.func @kernel(%arg0: i32, %arg1: memref<8x360xbf16, #tpu.memory_space<vmem>>, %arg2: memref<360x256xbf16, #tpu.memory_space<vmem>>, %arg3: memref<8x1xf32, #tpu.memory_space<vmem>>, %arg4: memref<8x256xbf16, #tpu.memory_space<vmem>>) attributes {dimension_semantics = [#tpu.dimension_semantics<parallel>], iteration_bounds = array<i64: 2>, scalar_prefetch = 0 : i64, scratch_operands = 0 : i64, tpu.core_type = #tpu.core_type<tc>, window_params = [{pipeline_mode = #tpu.pipeline_mode<synchronous>, transform_indices = @transform_0, window_bounds = array<i64: 8, 360>}, {transform_indices = @transform_1, window_bounds = array<i64: 360, 256>}, {pipeline_mode = #tpu.pipeline_mode<synchronous>, transform_indices = @transform_2, window_bounds = array<i64: 8, 1>}, {transform_indices = @transform_3, window_bounds = array<i64: 8, 256>}]} {
    %c0 = arith.constant 0 : index
    %c0_0 = arith.constant 0 : index
    %0 = vector.load %arg1[%c0, %c0_0] : memref<8x360xbf16, #tpu.memory_space<vmem>>, vector<8x360xbf16>
    %c0_1 = arith.constant 0 : index
    %c0_2 = arith.constant 0 : index
    %1 = vector.load %arg2[%c0_1, %c0_2] : memref<360x256xbf16, #tpu.memory_space<vmem>>, vector<360x256xbf16>
    %cst = arith.constant dense<0.000000e+00> : vector<8x256xf32>
    %2 = tpu.matmul %0, %1, %cst {dimension_numbers = #tpu.dot_dimension_numbers<[1], [0], [0], [1], [0, 0, 1, 1], [], []>} : vector<8x360xbf16>, vector<360x256xbf16>, vector<8x256xf32> -> vector<8x256xf32>
    %c0_3 = arith.constant 0 : index
    %c0_4 = arith.constant 0 : index
    %3 = vector.load %arg3[%c0_3, %c0_4] : memref<8x1xf32, #tpu.memory_space<vmem>>, vector<8x1xf32>
    %4 = vector.broadcast %3 : vector<8x1xf32> to vector<8x256xf32>
    %5 = arith.addf %2, %4 : vector<8x256xf32>
    %cst_5 = arith.constant 0.000000e+00 : f32
    %6 = vector.broadcast %cst_5 : f32 to vector<8x256xf32>
    %7 = arith.maximumf %5, %6 : vector<8x256xf32>
    %8 = arith.truncf %7 : vector<8x256xf32> to vector<8x256xbf16>
    %c0_6 = arith.constant 0 : index
    %c0_7 = arith.constant 0 : index
    %9 = vector.load %arg4[%c0_6, %c0_7] : memref<8x256xbf16, #tpu.memory_space<vmem>>, vector<8x256xbf16>
    tpu.vector_store %arg4[%c0_6, %c0_7], %8 {strides = array<i32>} : memref<8x256xbf16, #tpu.memory_space<vmem>>, vector<8x256xbf16>,
    return
  }
  func.func @transform_0(%arg0: i32) -> (i32, i32) {
    %c0_i32 = arith.constant 0 : i32
    %c0_i32_0 = arith.constant 0 : i32
    %c0_i32_1 = arith.constant 0 : i32
    return %c0_i32, %c0_i32_0 : i32, i32
  }
  func.func @transform_1(%arg0: i32) -> (i32, i32) {
    %c0_i32 = arith.constant 0 : i32
    %c0_i32_0 = arith.constant 0 : i32
    return %c0_i32, %arg0 : i32, i32
  }
  func.func @transform_2(%arg0: i32) -> (i32, i32) {
    %c0_i32 = arith.constant 0 : i32
    %c0_i32_0 = arith.constant 0 : i32
    %c0_i32_1 = arith.constant 0 : i32
    return %c0_i32, %c0_i32_0 : i32, i32
  }
  func.func @transform_3(%arg0: i32) -> (i32, i32) {
    %c0_i32 = arith.constant 0 : i32
    %c0_i32_0 = arith.constant 0 : i32
    return %c0_i32, %arg0 : i32, i32
  }
}

module attributes {stable_mosaic.version = 11 : i64} {
  func.func @kernel(%arg0: i32, %arg1: memref<8x8xbf16, #tpu.memory_space<vmem>>, %arg2: memref<8x256xbf16, #tpu.memory_space<vmem>>, %arg3: memref<8x1xf32, #tpu.memory_space<vmem>>, %arg4: memref<8x256xbf16, #tpu.memory_space<vmem>>) attributes {dimension_semantics = [#tpu.dimension_semantics<parallel>], iteration_bounds = array<i64: 2>, scalar_prefetch = 0 : i64, scratch_operands = 0 : i64, tpu.core_type = #tpu.core_type<tc>, window_params = [{pipeline_mode = #tpu.pipeline_mode<synchronous>, transform_indices = @transform_0, window_bounds = array<i64: 8, 8>}, {transform_indices = @transform_1, window_bounds = array<i64: 8, 256>}, {pipeline_mode = #tpu.pipeline_mode<synchronous>, transform_indices = @transform_2, window_bounds = array<i64: 8, 1>}, {transform_indices = @transform_3, window_bounds = array<i64: 8, 256>}]} {
    %c0 = arith.constant 0 : index
    %c0_0 = arith.constant 0 : index
    %0 = vector.load %arg1[%c0, %c0_0] : memref<8x8xbf16, #tpu.memory_space<vmem>>, vector<8x8xbf16>
    %c0_1 = arith.constant 0 : index
    %c0_2 = arith.constant 0 : index
    %1 = vector.load %arg2[%c0_1, %c0_2] : memref<8x256xbf16, #tpu.memory_space<vmem>>, vector<8x256xbf16>
    %cst = arith.constant dense<0.000000e+00> : vector<8x256xf32>
    %2 = tpu.matmul %0, %1, %cst {dimension_numbers = #tpu.dot_dimension_numbers<[1], [0], [0], [1], [0, 0, 1, 1], [], []>} : vector<8x8xbf16>, vector<8x256xbf16>, vector<8x256xf32> -> vector<8x256xf32>
    %c0_3 = arith.constant 0 : index
    %c0_4 = arith.constant 0 : index
    %3 = vector.load %arg3[%c0_3, %c0_4] : memref<8x1xf32, #tpu.memory_space<vmem>>, vector<8x1xf32>
    %4 = vector.broadcast %3 : vector<8x1xf32> to vector<8x256xf32>
    %5 = arith.addf %2, %4 : vector<8x256xf32>
    %6 = arith.truncf %5 : vector<8x256xf32> to vector<8x256xbf16>
    %c0_5 = arith.constant 0 : index
    %c0_6 = arith.constant 0 : index
    %7 = vector.load %arg4[%c0_5, %c0_6] : memref<8x256xbf16, #tpu.memory_space<vmem>>, vector<8x256xbf16>
    tpu.vector_store %arg4[%c0_5, %c0_6], %6 {strides = array<i32>} : memref<8x256xbf16, #tpu.memory_space<vmem>>, vector<8x256xbf16>,
    return
  }
  func.func @transform_0(%arg0: i32) -> (i32, i32) {
    %c0_i32 = arith.constant 0 : i32
    %c0_i32_0 = arith.constant 0 : i32
    %c0_i32_1 = arith.constant 0 : i32
    return %c0_i32, %c0_i32_0 : i32, i32
  }
  func.func @transform_1(%arg0: i32) -> (i32, i32) {
    %c0_i32 = arith.constant 0 : i32
    %c0_i32_0 = arith.constant 0 : i32
    return %c0_i32, %arg0 : i32, i32
  }
  func.func @transform_2(%arg0: i32) -> (i32, i32) {
    %c0_i32 = arith.constant 0 : i32
    %c0_i32_0 = arith.constant 0 : i32
    %c0_i32_1 = arith.constant 0 : i32
    return %c0_i32, %c0_i32_0 : i32, i32
  }
  func.func @transform_3(%arg0: i32) -> (i32, i32) {
    %c0_i32 = arith.constant 0 : i32
    %c0_i32_0 = arith.constant 0 : i32
    return %c0_i32, %arg0 : i32, i32
  }
}

module attributes {stable_mosaic.version = 11 : i64} {
  func.func @kernel(%arg0: i32, %arg1: memref<8x360xbf16, #tpu.memory_space<vmem>>, %arg2: memref<360x256xbf16, #tpu.memory_space<vmem>>, %arg3: memref<8x1xf32, #tpu.memory_space<vmem>>, %arg4: memref<8x256xbf16, #tpu.memory_space<vmem>>, %arg5: memref<8x256xbf16, #tpu.memory_space<vmem>>) attributes {dimension_semantics = [#tpu.dimension_semantics<parallel>], iteration_bounds = array<i64: 2>, scalar_prefetch = 0 : i64, scratch_operands = 0 : i64, tpu.core_type = #tpu.core_type<tc>, window_params = [{pipeline_mode = #tpu.pipeline_mode<synchronous>, transform_indices = @transform_0, window_bounds = array<i64: 8, 360>}, {transform_indices = @transform_1, window_bounds = array<i64: 360, 256>}, {pipeline_mode = #tpu.pipeline_mode<synchronous>, transform_indices = @transform_2, window_bounds = array<i64: 8, 1>}, {transform_indices = @transform_3, window_bounds = array<i64: 8, 256>}, {transform_indices = @transform_4, window_bounds = array<i64: 8, 256>}]} {
    %c0 = arith.constant 0 : index
    %c0_0 = arith.constant 0 : index
    %0 = vector.load %arg1[%c0, %c0_0] : memref<8x360xbf16, #tpu.memory_space<vmem>>, vector<8x360xbf16>
    %c0_1 = arith.constant 0 : index
    %c0_2 = arith.constant 0 : index
    %1 = vector.load %arg2[%c0_1, %c0_2] : memref<360x256xbf16, #tpu.memory_space<vmem>>, vector<360x256xbf16>
    %cst = arith.constant dense<0.000000e+00> : vector<8x256xf32>
    %2 = tpu.matmul %0, %1, %cst {dimension_numbers = #tpu.dot_dimension_numbers<[1], [0], [0], [1], [0, 0, 1, 1], [], []>} : vector<8x360xbf16>, vector<360x256xbf16>, vector<8x256xf32> -> vector<8x256xf32>
    %c0_3 = arith.constant 0 : index
    %c0_4 = arith.constant 0 : index
    %3 = vector.load %arg3[%c0_3, %c0_4] : memref<8x1xf32, #tpu.memory_space<vmem>>, vector<8x1xf32>
    %4 = vector.broadcast %3 : vector<8x1xf32> to vector<8x256xf32>
    %5 = arith.addf %2, %4 : vector<8x256xf32>
    %c0_5 = arith.constant 0 : index
    %c0_6 = arith.constant 0 : index
    %6 = vector.load %arg4[%c0_5, %c0_6] : memref<8x256xbf16, #tpu.memory_space<vmem>>, vector<8x256xbf16>
    %7 = arith.extf %6 : vector<8x256xbf16> to vector<8x256xf32>
    %8 = arith.addf %5, %7 : vector<8x256xf32>
    %cst_7 = arith.constant 0.000000e+00 : f32
    %9 = vector.broadcast %cst_7 : f32 to vector<8x256xf32>
    %10 = arith.maximumf %8, %9 : vector<8x256xf32>
    %11 = arith.truncf %10 : vector<8x256xf32> to vector<8x256xbf16>
    %c0_8 = arith.constant 0 : index
    %c0_9 = arith.constant 0 : index
    %12 = vector.load %arg5[%c0_8, %c0_9] : memref<8x256xbf16, #tpu.memory_space<vmem>>, vector<8x256xbf16>
    tpu.vector_store %arg5[%c0_8, %c0_9], %11 {strides = array<i32>} : memref<8x256xbf16, #tpu.memory_space<vmem>>, vector<8x256xbf16>,
    return
  }
  func.func @transform_0(%arg0: i32) -> (i32, i32) {
    %c0_i32 = arith.constant 0 : i32
    %c0_i32_0 = arith.constant 0 : i32
    %c0_i32_1 = arith.constant 0 : i32
    return %c0_i32, %c0_i32_0 : i32, i32
  }
  func.func @transform_1(%arg0: i32) -> (i32, i32) {
    %c0_i32 = arith.constant 0 : i32
    %c0_i32_0 = arith.constant 0 : i32
    return %c0_i32, %arg0 : i32, i32
  }
  func.func @transform_2(%arg0: i32) -> (i32, i32) {
    %c0_i32 = arith.constant 0 : i32
    %c0_i32_0 = arith.constant 0 : i32
    %c0_i32_1 = arith.constant 0 : i32
    return %c0_i32, %c0_i32_0 : i32, i32
  }
  func.func @transform_3(%arg0: i32) -> (i32, i32) {
    %c0_i32 = arith.constant 0 : i32
    %c0_i32_0 = arith.constant 0 : i32
    return %c0_i32, %arg0 : i32, i32
  }
  func.func @transform_4(%arg0: i32) -> (i32, i32) {
    %c0_i32 = arith.constant 0 : i32
    %c0_i32_0 = arith.constant 0 : i32
    return %c0_i32, %arg0 : i32, i32
  }
}

module attributes {stable_mosaic.version = 11 : i64} {
  func.func @kernel(%arg0: i32, %arg1: memref<16x360xbf16, #tpu.memory_space<vmem>>, %arg2: memref<360x128xbf16, #tpu.memory_space<vmem>>, %arg3: memref<16x1xf32, #tpu.memory_space<vmem>>, %arg4: memref<16x128xbf16, #tpu.memory_space<vmem>>) attributes {dimension_semantics = [#tpu.dimension_semantics<parallel>], iteration_bounds = array<i64: 1>, scalar_prefetch = 0 : i64, scratch_operands = 0 : i64, tpu.core_type = #tpu.core_type<tc>, window_params = [{pipeline_mode = #tpu.pipeline_mode<synchronous>, transform_indices = @transform_0, window_bounds = array<i64: 16, 360>}, {transform_indices = @transform_1, window_bounds = array<i64: 360, 128>}, {pipeline_mode = #tpu.pipeline_mode<synchronous>, transform_indices = @transform_2, window_bounds = array<i64: 16, 1>}, {transform_indices = @transform_3, window_bounds = array<i64: 16, 128>}]} {
    %c0 = arith.constant 0 : index
    %c0_0 = arith.constant 0 : index
    %0 = vector.load %arg1[%c0, %c0_0] : memref<16x360xbf16, #tpu.memory_space<vmem>>, vector<16x360xbf16>
    %c0_1 = arith.constant 0 : index
    %c0_2 = arith.constant 0 : index
    %1 = vector.load %arg2[%c0_1, %c0_2] : memref<360x128xbf16, #tpu.memory_space<vmem>>, vector<360x128xbf16>
    %cst = arith.constant dense<0.000000e+00> : vector<16x128xf32>
    %2 = tpu.matmul %0, %1, %cst {dimension_numbers = #tpu.dot_dimension_numbers<[1], [0], [0], [1], [0, 0, 1, 1], [], []>} : vector<16x360xbf16>, vector<360x128xbf16>, vector<16x128xf32> -> vector<16x128xf32>
    %c0_3 = arith.constant 0 : index
    %c0_4 = arith.constant 0 : index
    %3 = vector.load %arg3[%c0_3, %c0_4] : memref<16x1xf32, #tpu.memory_space<vmem>>, vector<16x1xf32>
    %4 = vector.broadcast %3 : vector<16x1xf32> to vector<16x128xf32>
    %5 = arith.addf %2, %4 : vector<16x128xf32>
    %cst_5 = arith.constant 0.000000e+00 : f32
    %6 = vector.broadcast %cst_5 : f32 to vector<16x128xf32>
    %7 = arith.maximumf %5, %6 : vector<16x128xf32>
    %8 = arith.truncf %7 : vector<16x128xf32> to vector<16x128xbf16>
    %c0_6 = arith.constant 0 : index
    %c0_7 = arith.constant 0 : index
    %9 = vector.load %arg4[%c0_6, %c0_7] : memref<16x128xbf16, #tpu.memory_space<vmem>>, vector<16x128xbf16>
    tpu.vector_store %arg4[%c0_6, %c0_7], %8 {strides = array<i32>} : memref<16x128xbf16, #tpu.memory_space<vmem>>, vector<16x128xbf16>,
    return
  }
  func.func @transform_0(%arg0: i32) -> (i32, i32) {
    %c0_i32 = arith.constant 0 : i32
    %c0_i32_0 = arith.constant 0 : i32
    %c0_i32_1 = arith.constant 0 : i32
    return %c0_i32, %c0_i32_0 : i32, i32
  }
  func.func @transform_1(%arg0: i32) -> (i32, i32) {
    %c0_i32 = arith.constant 0 : i32
    %c0_i32_0 = arith.constant 0 : i32
    return %c0_i32, %arg0 : i32, i32
  }
  func.func @transform_2(%arg0: i32) -> (i32, i32) {
    %c0_i32 = arith.constant 0 : i32
    %c0_i32_0 = arith.constant 0 : i32
    %c0_i32_1 = arith.constant 0 : i32
    return %c0_i32, %c0_i32_0 : i32, i32
  }
  func.func @transform_3(%arg0: i32) -> (i32, i32) {
    %c0_i32 = arith.constant 0 : i32
    %c0_i32_0 = arith.constant 0 : i32
    return %c0_i32, %arg0 : i32, i32
  }
}

module attributes {stable_mosaic.version = 11 : i64} {
  func.func @kernel(%arg0: i32, %arg1: memref<16x8xbf16, #tpu.memory_space<vmem>>, %arg2: memref<8x128xbf16, #tpu.memory_space<vmem>>, %arg3: memref<16x1xf32, #tpu.memory_space<vmem>>, %arg4: memref<16x128xbf16, #tpu.memory_space<vmem>>) attributes {dimension_semantics = [#tpu.dimension_semantics<parallel>], iteration_bounds = array<i64: 1>, scalar_prefetch = 0 : i64, scratch_operands = 0 : i64, tpu.core_type = #tpu.core_type<tc>, window_params = [{pipeline_mode = #tpu.pipeline_mode<synchronous>, transform_indices = @transform_0, window_bounds = array<i64: 16, 8>}, {transform_indices = @transform_1, window_bounds = array<i64: 8, 128>}, {pipeline_mode = #tpu.pipeline_mode<synchronous>, transform_indices = @transform_2, window_bounds = array<i64: 16, 1>}, {transform_indices = @transform_3, window_bounds = array<i64: 16, 128>}]} {
    %c0 = arith.constant 0 : index
    %c0_0 = arith.constant 0 : index
    %0 = vector.load %arg1[%c0, %c0_0] : memref<16x8xbf16, #tpu.memory_space<vmem>>, vector<16x8xbf16>
    %c0_1 = arith.constant 0 : index
    %c0_2 = arith.constant 0 : index
    %1 = vector.load %arg2[%c0_1, %c0_2] : memref<8x128xbf16, #tpu.memory_space<vmem>>, vector<8x128xbf16>
    %cst = arith.constant dense<0.000000e+00> : vector<16x128xf32>
    %2 = tpu.matmul %0, %1, %cst {dimension_numbers = #tpu.dot_dimension_numbers<[1], [0], [0], [1], [0, 0, 1, 1], [], []>} : vector<16x8xbf16>, vector<8x128xbf16>, vector<16x128xf32> -> vector<16x128xf32>
    %c0_3 = arith.constant 0 : index
    %c0_4 = arith.constant 0 : index
    %3 = vector.load %arg3[%c0_3, %c0_4] : memref<16x1xf32, #tpu.memory_space<vmem>>, vector<16x1xf32>
    %4 = vector.broadcast %3 : vector<16x1xf32> to vector<16x128xf32>
    %5 = arith.addf %2, %4 : vector<16x128xf32>
    %6 = arith.truncf %5 : vector<16x128xf32> to vector<16x128xbf16>
    %c0_5 = arith.constant 0 : index
    %c0_6 = arith.constant 0 : index
    %7 = vector.load %arg4[%c0_5, %c0_6] : memref<16x128xbf16, #tpu.memory_space<vmem>>, vector<16x128xbf16>
    tpu.vector_store %arg4[%c0_5, %c0_6], %6 {strides = array<i32>} : memref<16x128xbf16, #tpu.memory_space<vmem>>, vector<16x128xbf16>,
    return
  }
  func.func @transform_0(%arg0: i32) -> (i32, i32) {
    %c0_i32 = arith.constant 0 : i32
    %c0_i32_0 = arith.constant 0 : i32
    %c0_i32_1 = arith.constant 0 : i32
    return %c0_i32, %c0_i32_0 : i32, i32
  }
  func.func @transform_1(%arg0: i32) -> (i32, i32) {
    %c0_i32 = arith.constant 0 : i32
    %c0_i32_0 = arith.constant 0 : i32
    return %c0_i32, %arg0 : i32, i32
  }
  func.func @transform_2(%arg0: i32) -> (i32, i32) {
    %c0_i32 = arith.constant 0 : i32
    %c0_i32_0 = arith.constant 0 : i32
    %c0_i32_1 = arith.constant 0 : i32
    return %c0_i32, %c0_i32_0 : i32, i32
  }
  func.func @transform_3(%arg0: i32) -> (i32, i32) {
    %c0_i32 = arith.constant 0 : i32
    %c0_i32_0 = arith.constant 0 : i32
    return %c0_i32, %arg0 : i32, i32
  }
}

module attributes {stable_mosaic.version = 11 : i64} {
  func.func @kernel(%arg0: i32, %arg1: memref<16x720xbf16, #tpu.memory_space<vmem>>, %arg2: memref<720x128xbf16, #tpu.memory_space<vmem>>, %arg3: memref<16x1xf32, #tpu.memory_space<vmem>>, %arg4: memref<16x128xbf16, #tpu.memory_space<vmem>>, %arg5: memref<16x128xbf16, #tpu.memory_space<vmem>>) attributes {dimension_semantics = [#tpu.dimension_semantics<parallel>], iteration_bounds = array<i64: 1>, scalar_prefetch = 0 : i64, scratch_operands = 0 : i64, tpu.core_type = #tpu.core_type<tc>, window_params = [{pipeline_mode = #tpu.pipeline_mode<synchronous>, transform_indices = @transform_0, window_bounds = array<i64: 16, 720>}, {transform_indices = @transform_1, window_bounds = array<i64: 720, 128>}, {pipeline_mode = #tpu.pipeline_mode<synchronous>, transform_indices = @transform_2, window_bounds = array<i64: 16, 1>}, {transform_indices = @transform_3, window_bounds = array<i64: 16, 128>}, {transform_indices = @transform_4, window_bounds = array<i64: 16, 128>}]} {
    %c0 = arith.constant 0 : index
    %c0_0 = arith.constant 0 : index
    %0 = vector.load %arg1[%c0, %c0_0] : memref<16x720xbf16, #tpu.memory_space<vmem>>, vector<16x720xbf16>
    %c0_1 = arith.constant 0 : index
    %c0_2 = arith.constant 0 : index
    %1 = vector.load %arg2[%c0_1, %c0_2] : memref<720x128xbf16, #tpu.memory_space<vmem>>, vector<720x128xbf16>
    %cst = arith.constant dense<0.000000e+00> : vector<16x128xf32>
    %2 = tpu.matmul %0, %1, %cst {dimension_numbers = #tpu.dot_dimension_numbers<[1], [0], [0], [1], [0, 0, 1, 1], [], []>} : vector<16x720xbf16>, vector<720x128xbf16>, vector<16x128xf32> -> vector<16x128xf32>
    %c0_3 = arith.constant 0 : index
    %c0_4 = arith.constant 0 : index
    %3 = vector.load %arg3[%c0_3, %c0_4] : memref<16x1xf32, #tpu.memory_space<vmem>>, vector<16x1xf32>
    %4 = vector.broadcast %3 : vector<16x1xf32> to vector<16x128xf32>
    %5 = arith.addf %2, %4 : vector<16x128xf32>
    %c0_5 = arith.constant 0 : index
    %c0_6 = arith.constant 0 : index
    %6 = vector.load %arg4[%c0_5, %c0_6] : memref<16x128xbf16, #tpu.memory_space<vmem>>, vector<16x128xbf16>
    %7 = arith.extf %6 : vector<16x128xbf16> to vector<16x128xf32>
    %8 = arith.addf %5, %7 : vector<16x128xf32>
    %cst_7 = arith.constant 0.000000e+00 : f32
    %9 = vector.broadcast %cst_7 : f32 to vector<16x128xf32>
    %10 = arith.maximumf %8, %9 : vector<16x128xf32>
    %11 = arith.truncf %10 : vector<16x128xf32> to vector<16x128xbf16>
    %c0_8 = arith.constant 0 : index
    %c0_9 = arith.constant 0 : index
    %12 = vector.load %arg5[%c0_8, %c0_9] : memref<16x128xbf16, #tpu.memory_space<vmem>>, vector<16x128xbf16>
    tpu.vector_store %arg5[%c0_8, %c0_9], %11 {strides = array<i32>} : memref<16x128xbf16, #tpu.memory_space<vmem>>, vector<16x128xbf16>,
    return
  }
  func.func @transform_0(%arg0: i32) -> (i32, i32) {
    %c0_i32 = arith.constant 0 : i32
    %c0_i32_0 = arith.constant 0 : i32
    %c0_i32_1 = arith.constant 0 : i32
    return %c0_i32, %c0_i32_0 : i32, i32
  }
  func.func @transform_1(%arg0: i32) -> (i32, i32) {
    %c0_i32 = arith.constant 0 : i32
    %c0_i32_0 = arith.constant 0 : i32
    return %c0_i32, %arg0 : i32, i32
  }
  func.func @transform_2(%arg0: i32) -> (i32, i32) {
    %c0_i32 = arith.constant 0 : i32
    %c0_i32_0 = arith.constant 0 : i32
    %c0_i32_1 = arith.constant 0 : i32
    return %c0_i32, %c0_i32_0 : i32, i32
  }
  func.func @transform_3(%arg0: i32) -> (i32, i32) {
    %c0_i32 = arith.constant 0 : i32
    %c0_i32_0 = arith.constant 0 : i32
    return %c0_i32, %arg0 : i32, i32
  }
  func.func @transform_4(%arg0: i32) -> (i32, i32) {
    %c0_i32 = arith.constant 0 : i32
    %c0_i32_0 = arith.constant 0 : i32
    return %c0_i32, %arg0 : i32, i32
  }
}

</mosaic_0001>

<llo_original>
// kernel: resnet_forward.7
$region0: #{resnet_forward.7}
  #allocation0 [shape = 'u32[]', space=smem, size = 0x4, offset = 0x4, fixed_abs, tag = 'smem constant byte address 0x4 - core index']
  #allocation1 [shape = 'u32[144,128]{1,0:T(1,128)}', space=vmem, size = 0x12000, scoped, tag = 'internal scratch']
  %s0 = inlined_call_operand.vmem [shape: bf16[8,135], index: 0, kind: input, shape index: {}]
  %s1 = inlined_call_operand.vmem [shape: bf16[135,2048], index: 1, kind: input, shape index: {}]
  %s2 = inlined_call_operand.vmem [shape: f32[8,1], index: 2, kind: input, shape index: {}]
  %s3 = inlined_call_operand.vmem [shape: bf16[8,2048], index: 3, kind: output, shape index: {}]
  %s4 = sld [smem:[#allocation0]]
  $region68: #{resnet_forward.7} parent=0
    _
  %s6 = ssub.s32 1, %s4
  %s7 = scalar_select 0, %s6, %s4
  $region1: #{resnet_forward.7} parent=0
    #allocation2 [shape = 'u8[278528]{0}', space=vmem, size = 0x44000, scoped, tag = 'input window, operand 1']
    loop: start=0, step=1, limit=6
    $region2: #{resnet_forward.7} parent=1 // loop_pre_header
      _
    $region3: #{resnet_forward.7} parent=1 // loop_header
      %s9 = sphi 0, %s13
      %p10 = scmp.ge.s32.totalorder %s9, 6
      %s17 = sphi 0, %s17
      %s19 = sphi 0, %s17
      %s20 = sphi 0, %s19
      %s34 = sphi 0, %s20
      %s40 = sphi 0, %s42
      %s43 = sphi 0, %s40
      %s44 = sphi 0, %s43
      %s60 = sphi 0, %s44
      %s64 = sphi 0, %s64
      %s66 = sphi 0, %s64
      %s67 = sphi 0, %s66
      %s81 = sphi 0, %s67
      %s87 = sphi 0, %s89
      %s90 = sphi 0, %s87
      %s91 = sphi 0, %s90
      %s107 = sphi 0, %s91
    $region4: #{resnet_forward.7} parent=1 // loop_header_branch
      %12 = sbr.rel (%p10) target = $region8
    $region5: #{resnet_forward.7} parent=1 // loop_body
      %s14 = ssub.s32 %s9, 1
      %s15 = ssub.s32 %s9, 2
      %s16 = sadd.s32 %s9, 1
      %s18 = sadd.s32 %s17, 1
      %p21 = scmp.eq.s32.totalorder %s9, 3
      %p22 = scmp.ne.s32.totalorder %s17, %s19
      %p23 = scmp.eq.s32.totalorder %s9, 0
      %p24 = por %p22, %p23
      %p25 = scmp.ne.s32.totalorder %s17, %s19
      %p26 = scmp.eq.s32.totalorder %s14, 3
      %p27 = por %p25, %p26
      %p28 = scmp.ne.s32.totalorder %s19, %s20
      %p29 = scmp.eq.s32.totalorder %s14, 0
      %p30 = por %p28, %p29
      %p31 = scmp.ne.s32.totalorder %s19, %s20
      %p32 = scmp.eq.s32.totalorder %s15, 3
      %p33 = por %p31, %p32
      %p35 = scmp.ne.s32.totalorder %s20, %s34
      %p36 = scmp.eq.s32.totalorder %s15, 0
      %p37 = por %p35, %p36
      %s38 = ssub.s32 %s9, %s16
      %p39 = scmp.eq.s32.totalorder %s38, 0
      %s41 = sadd.s32 %s40, 1
      %s42 = scalar_select %p39, %s40, %s41
      %p45 = pneg %p39
      %p46 = scmp.eq.s32.totalorder %s9, 3
      %p47 = por %p45, %p46
      %p48 = scmp.ne.s32.totalorder %s40, %s43
      %p49 = scmp.eq.s32.totalorder %s9, 0
      %p50 = por %p48, %p49
      %p51 = scmp.ne.s32.totalorder %s40, %s43
      %p52 = scmp.eq.s32.totalorder %s14, 3
      %p53 = por %p51, %p52
      %p54 = scmp.ne.s32.totalorder %s43, %s44
      %p55 = scmp.eq.s32.totalorder %s14, 0
      %p56 = por %p54, %p55
      %p57 = scmp.ne.s32.totalorder %s43, %s44
      %p58 = scmp.eq.s32.totalorder %s15, 3
      %p59 = por %p57, %p58
      %p61 = scmp.ne.s32.totalorder %s44, %s60
      %p62 = scmp.eq.s32.totalorder %s15, 0
      %p63 = por %p61, %p62
      %s65 = sadd.s32 %s64, 1
      %p68 = scmp.eq.s32.totalorder %s9, 3
      %p69 = scmp.ne.s32.totalorder %s64, %s66
      %p70 = scmp.eq.s32.totalorder %s9, 0
      %p71 = por %p69, %p70
      %p72 = scmp.ne.s32.totalorder %s64, %s66
      %p73 = scmp.eq.s32.totalorder %s14, 3
      %p74 = por %p72, %p73
      %p75 = scmp.ne.s32.totalorder %s66, %s67
      %p76 = scmp.eq.s32.totalorder %s14, 0
      %p77 = por %p75, %p76
      %p78 = scmp.ne.s32.totalorder %s66, %s67
      %p79 = scmp.eq.s32.totalorder %s15, 3
      %p80 = por %p78, %p79
      %p82 = scmp.ne.s32.totalorder %s67, %s81
      %p83 = scmp.eq.s32.totalorder %s15, 0
      %p84 = por %p82, %p83
      %s85 = ssub.s32 %s9, %s16
      %p86 = scmp.eq.s32.totalorder %s85, 0
      %s88 = sadd.s32 %s87, 1
      %s89 = scalar_select %p86, %s87, %s88
      %p92 = pneg %p86
      %p93 = scmp.eq.s32.totalorder %s9, 3
      %p94 = por %p92, %p93
      %p95 = scmp.ne.s32.totalorder %s87, %s90
      %p96 = scmp.eq.s32.totalorder %s9, 0
      %p97 = por %p95, %p96
      %p98 = scmp.ne.s32.totalorder %s87, %s90
      %p99 = scmp.eq.s32.totalorder %s14, 3
      %p100 = por %p98, %p99
      %p101 = scmp.ne.s32.totalorder %s90, %s91
      %p102 = scmp.eq.s32.totalorder %s14, 0
      %p103 = por %p101, %p102
      %p104 = scmp.ne.s32.totalorder %s90, %s91
      %p105 = scmp.eq.s32.totalorder %s15, 3
      %p106 = por %p104, %p105
      %p108 = scmp.ne.s32.totalorder %s91, %s107
      %p109 = scmp.eq.s32.totalorder %s15, 0
      %p110 = por %p108, %p109
      %p111 = scmp.le.s32.totalorder 1, %s9
      %p112 = scmp.lt.s32.totalorder %s9, 5
      %p113 = pnand %p111, %p112
      %p114 = pneg %p113
      // Predicated region
      $region9: #{resnet_forward.7} parent=5 // pred_check
        _
      $region10: #{resnet_forward.7} parent=5 // pred_check_branch
        %116 = sbr.rel (%p113) target = $region12
      $region11: #{resnet_forward.7} parent=5 // pred_region
        %s117 = ssub.s32 %s9, 1
        // Predicated region
        $region13: #{resnet_forward.7} parent=11 // pred_check
          %p118 = pneg %p30
        $region14: #{resnet_forward.7} parent=11 // pred_check_branch
          %120 = sbr.rel (%p118) target = $region16
        $region15: #{resnet_forward.7} parent=11 // pred_region
          _
        $region16: #{resnet_forward.7} parent=11 // pred_fallthru
          _
        // Predicated region
        $region17: #{resnet_forward.7} parent=11 // pred_check
          %p121 = pneg %p77
        $region18: #{resnet_forward.7} parent=11 // pred_check_branch
          %123 = sbr.rel (%p121) target = $region20
        $region19: #{resnet_forward.7} parent=11 // pred_region
          _
        $region20: #{resnet_forward.7} parent=11 // pred_fallthru
          _
      $region12: #{resnet_forward.7} parent=5 // pred_fallthru
        _
      %p124 = scmp.lt.s32.totalorder %s9, 4
      // Predicated region
      $region21: #{resnet_forward.7} parent=5 // pred_check
        %p125 = pneg %p124
      $region22: #{resnet_forward.7} parent=5 // pred_check_branch
        %127 = sbr.rel (%p125) target = $region24
      $region23: #{resnet_forward.7} parent=5 // pred_region
        // Predicated region
        $region25: #{resnet_forward.7} parent=23 // pred_check
          %p128 = pneg %p50
        $region26: #{resnet_forward.7} parent=23 // pred_check_branch
          %130 = sbr.rel (%p128) target = $region28
        $region27: #{resnet_forward.7} parent=23 // pred_region
          %s131 = sand.u32 %s40, 1
          %s132 = sand.u32 %s40, 1
          %s133 = smul.addr %s132, 272
          %s134 = scalar_lea.vmem [#allocation2], %s133
          %s135 = smul.u32 4, %s9
          %s136 = smul.addr %s135, 4
          %s137 = scalar_lea.vmem %s1, %s136
          // Predicated region
          $region29: #{resnet_forward.7} parent=27 // pred_check
            _
          $region30: #{resnet_forward.7} parent=27 // pred_check_branch
            %139 = sbr.rel (0) target = $region32
          $region31: #{resnet_forward.7} parent=27 // pred_region
            // Predicated region
            $region33: #{resnet_forward.7} parent=31 // pred_check
              _
            $region34: #{resnet_forward.7} parent=31 // pred_check_branch
              %141 = sbr.rel (0) target = $region36
            $region35: #{resnet_forward.7} parent=31 // pred_region
              loop: start=0, step=1, limit=1
              $region37: #{resnet_forward.7} parent=35 // loop_pre_header
                _
              $region38: #{resnet_forward.7} parent=35 // loop_header
                %s143 = sphi 0, %s147
                %p144 = scmp.ge.s32.totalorder %s143, 1
                %s148 = sphi %s137, %s137
                %s149 = sphi %s134, %s134
              $region39: #{resnet_forward.7} parent=35 // loop_header_branch
                %146 = sbr.rel (%p144) target = $region43
              $region40: #{resnet_forward.7} parent=35 // loop_body
                %v150 = vld [vmem:[%s148] sm:$0xff]
                %151 = vst [vmem:[%s149] sm:$0xff] %v150
                %v152 = vld [vmem:[%s148 + $0x8] sm:$0xff]
                %153 = vst [vmem:[%s149 + $0x8] sm:$0xff] %v152
                %v154 = vld [vmem:[%s148 + $0x40] sm:$0xff]
                %155 = vst [vmem:[%s149 + $0x10] sm:$0xff] %v154
                %v156 = vld [vmem:[%s148 + $0x48] sm:$0xff]
                %157 = vst [vmem:[%s149 + $0x18] sm:$0xff] %v156
                %v158 = vld [vmem:[%s148 + $0x80] sm:$0xff]
                %159 = vst [vmem:[%s149 + $0x20] sm:$0xff] %v158
                %v160 = vld [vmem:[%s148 + $0x88] sm:$0xff]
                %161 = vst [vmem:[%s149 + $0x28] sm:$0xff] %v160
                %v162 = vld [vmem:[%s148 + $0xc0] sm:$0xff]
                %163 = vst [vmem:[%s149 + $0x30] sm:$0xff] %v162
                %v164 = vld [vmem:[%s148 + $0xc8] sm:$0xff]
                %165 = vst [vmem:[%s149 + $0x38] sm:$0xff] %v164
                %v166 = vld [vmem:[%s148 + $0x100] sm:$0xff]
                %167 = vst [vmem:[%s149 + $0x40] sm:$0xff] %v166
                %v168 = vld [vmem:[%s148 + $0x108] sm:$0xff]
                %169 = vst [vmem:[%s149 + $0x48] sm:$0xff] %v168
                %v170 = vld [vmem:[%s148 + $0x140] sm:$0xff]
                %171 = vst [vmem:[%s149 + $0x50] sm:$0xff] %v170
                %v172 = vld [vmem:[%s148 + $0x148] sm:$0xff]
                %173 = vst [vmem:[%s149 + $0x58] sm:$0xff] %v172
                %v174 = vld [vmem:[%s148 + $0x180] sm:$0xff]
                %175 = vst [vmem:[%s149 + $0x60] sm:$0xff] %v174
                %v176 = vld [vmem:[%s148 + $0x188] sm:$0xff]
                %177 = vst [vmem:[%s149 + $0x68] sm:$0xff] %v176
                %v178 = vld [vmem:[%s148 + $0x1c0] sm:$0xff]
                %179 = vst [vmem:[%s149 + $0x70] sm:$0xff] %v178
                %v180 = vld [vmem:[%s148 + $0x1c8] sm:$0xff]
                %181 = vst [vmem:[%s149 + $0x78] sm:$0xff] %v180
                %v182 = vld [vmem:[%s148 + $0x200] sm:$0xff]
                %183 = vst [vmem:[%s149 + $0x80] sm:$0xff] %v182
                %v184 = vld [vmem:[%s148 + $0x208] sm:$0xff]
                %185 = vst [vmem:[%s149 + $0x88] sm:$0xff] %v184
                %v186 = vld [vmem:[%s148 + $0x240] sm:$0xff]
                %187 = vst [vmem:[%s149 + $0x90] sm:$0xff] %v186
                %v188 = vld [vmem:[%s148 + $0x248] sm:$0xff]
                %189 = vst [vmem:[%s149 + $0x98] sm:$0xff] %v188
                %v190 = vld [vmem:[%s148 + $0x280] sm:$0xff]
                %191 = vst [vmem:[%s149 + $0xa0] sm:$0xff] %v190
                %v192 = vld [vmem:[%s148 + $0x288] sm:$0xff]
                %193 = vst [vmem:[%s149 + $0xa8] sm:$0xff] %v192
                %v194 = vld [vmem:[%s148 + $0x2c0] sm:$0xff]
                %195 = vst [vmem:[%s149 + $0xb0] sm:$0xff] %v194
                %v196 = vld [vmem:[%s148 + $0x2c8] sm:$0xff]
                %197 = vst [vmem:[%s149 + $0xb8] sm:$0xff] %v196
                %v198 = vld [vmem:[%s148 + $0x300] sm:$0xff]
                %199 = vst [vmem:[%s149 + $0xc0] sm:$0xff] %v198
                %v200 = vld [vmem:[%s148 + $0x308] sm:$0xff]
                %201 = vst [vmem:[%s149 + $0xc8] sm:$0xff] %v200
                %v202 = vld [vmem:[%s148 + $0x340] sm:$0xff]
                %203 = vst [vmem:[%s149 + $0xd0] sm:$0xff] %v202
                %v204 = vld [vmem:[%s148 + $0x348] sm:$0xff]
                %205 = vst [vmem:[%s149 + $0xd8] sm:$0xff] %v204
                %v206 = vld [vmem:[%s148 + $0x380] sm:$0xff]
                %207 = vst [vmem:[%s149 + $0xe0] sm:$0xff] %v206
                %v208 = vld [vmem:[%s148 + $0x388] sm:$0xff]
                %209 = vst [vmem:[%s149 + $0xe8] sm:$0xff] %v208
                %v210 = vld [vmem:[%s148 + $0x3c0] sm:$0xff]
                %211 = vst [vmem:[%s149 + $0xf0] sm:$0xff] %v210
                %v212 = vld [vmem:[%s148 + $0x3c8] sm:$0xff]
                %213 = vst [vmem:[%s149 + $0xf8] sm:$0xff] %v212
                %v214 = vld [vmem:[%s148 + $0x400] sm:$0xff]
                %215 = vst [vmem:[%s149 + $0x100] sm:$0xff] %v214
                %v216 = vld [vmem:[%s148 + $0x408] sm:$0xff]
                %217 = vst [vmem:[%s149 + $0x108] sm:$0xff] %v216
              $region41: #{resnet_forward.7} parent=35 // loop_footer
                %s147 = sadd.s32 1, %s143
              $region42: #{resnet_forward.7} parent=35 // loop_footer_branch
                %142 = sbr.rel target = $region38
              $region43: #{resnet_forward.7} parent=35 // loop_exit
                _
            $region36: #{resnet_forward.7} parent=31 // pred_fallthru
              _
            // Predicated region
            $region44: #{resnet_forward.7} parent=31 // pred_check
              _
            $region45: #{resnet_forward.7} parent=31 // pred_check_branch
              %219 = sbr.rel target = $region47
            $region46: #{resnet_forward.7} parent=31 // pred_region
              _
            $region47: #{resnet_forward.7} parent=31 // pred_fallthru
              _
          $region32: #{resnet_forward.7} parent=27 // pred_fallthru
            _
          %220 = vnop
        $region28: #{resnet_forward.7} parent=23 // pred_fallthru
          _
      $region24: #{resnet_forward.7} parent=5 // pred_fallthru
        _
      %p221 = scmp.le.s32.totalorder 1, %s9
      %p222 = scmp.lt.s32.totalorder %s9, 5
      %p223 = pnand %p221, %p222
      %p224 = pneg %p223
      // Predicated region
      $region48: #{resnet_forward.7} parent=5 // pred_check
        _
      $region49: #{resnet_forward.7} parent=5 // pred_check_branch
        %226 = sbr.rel (%p223) target = $region51
      $region50: #{resnet_forward.7} parent=5 // pred_region
        %s227 = ssub.s32 %s9, 1
        %s228 = sand.u32 %s43, 1
        %s229 = sand.u32 %s43, 1
        %s230 = smul.addr %s229, 272
        %s231 = scalar_lea.vmem [#allocation2], %s230
        // Predicated region
        $region52: #{resnet_forward.7} parent=50 // pred_check
          %p232 = pneg %p56
        $region53: #{resnet_forward.7} parent=50 // pred_check_branch
          %234 = sbr.rel (%p232) target = $region55
        $region54: #{resnet_forward.7} parent=50 // pred_region
          _
        $region55: #{resnet_forward.7} parent=50 // pred_fallthru
          _
        %p235 = pneg %p30
        %p236 = pneg %p27
        %s237 = sand.u32 %s43, 1
        %s238 = sand.u32 %s43, 1
        %s239 = smul.addr %s238, 272
        %s240 = scalar_lea.vmem [#allocation2], %s239
        %p241 = pneg %p56
        %p242 = pneg %p53
        %p243 = pneg %p77
        %p244 = pneg %p74
        %p245 = pneg %p103
        %p246 = pneg %p100
        %s247 = smul.u32 4, %s14
        %p248 = scmp.lt.s32.totalorder %s247, 15
        %s249 = scalar_select %p248, %s247, 15
        %s250 = smul.addr %s249, 4
        %s251 = scalar_lea.vmem %s3, %s250
        %s252 = smul.u32 4, %s14
        %s253 = smul.u32 4, %s14
        %p254 = scmp.lt.s32.totalorder %s253, 15
        %s255 = scalar_select %p254, %s253, 15
        %s256 = smul.addr %s255, 4
        %s257 = scalar_lea.vmem %s3, %s256
        %s258 = smul.u32 4, %s14
        %v260 = vld [vmem:[%s0] sm:$0xff]
        %v261 = vld [vmem:[%s231] sm:$0xff]
        %v262 = vld [vmem:[%s231 + $0x8] sm:$0xff]
        %v263 = vld [vmem:[%s231 + $0x10] sm:$0xff]
        %v264 = vld [vmem:[%s231 + $0x18] sm:$0xff]
        %v265 = vld [vmem:[%s231 + $0x20] sm:$0xff]
        %v266 = vld [vmem:[%s231 + $0x28] sm:$0xff]
        %v267 = vld [vmem:[%s231 + $0x30] sm:$0xff]
        %v268 = vld [vmem:[%s231 + $0x38] sm:$0xff]
        %v269 = vld [vmem:[%s231 + $0x40] sm:$0xff]
        %v270 = vld [vmem:[%s231 + $0x48] sm:$0xff]
        %v271 = vld [vmem:[%s231 + $0x50] sm:$0xff]
        %v272 = vld [vmem:[%s231 + $0x58] sm:$0xff]
        %v273 = vld [vmem:[%s231 + $0x60] sm:$0xff]
        %v274 = vld [vmem:[%s231 + $0x68] sm:$0xff]
        %v275 = vld [vmem:[%s231 + $0x70] sm:$0xff]
        %v276 = vld [vmem:[%s231 + $0x78] sm:$0xff]
        %v277 = vld [vmem:[%s231 + $0x80] sm:$0xff]
        %v278 = vld [vmem:[%s231 + $0x88] sm:$0xff]
        %v279 = vld [vmem:[%s231 + $0x90] sm:$0xff]
        %v280 = vld [vmem:[%s231 + $0x98] sm:$0xff]
        %v281 = vld [vmem:[%s231 + $0xa0] sm:$0xff]
        %v282 = vld [vmem:[%s231 + $0xa8] sm:$0xff]
        %v283 = vld [vmem:[%s231 + $0xb0] sm:$0xff]
        %v284 = vld [vmem:[%s231 + $0xb8] sm:$0xff]
        %v285 = vld [vmem:[%s231 + $0xc0] sm:$0xff]
        %v286 = vld [vmem:[%s231 + $0xc8] sm:$0xff]
        %v287 = vld [vmem:[%s231 + $0xd0] sm:$0xff]
        %v288 = vld [vmem:[%s231 + $0xd8] sm:$0xff]
        %v289 = vld [vmem:[%s231 + $0xe0] sm:$0xff]
        %v290 = vld [vmem:[%s231 + $0xe8] sm:$0xff]
        %v291 = vld [vmem:[%s231 + $0xf0] sm:$0xff]
        %v292 = vld [vmem:[%s231 + $0xf8] sm:$0xff]
        %v293 = vld [vmem:[%s231 + $0x100] sm:$0xff]
        %v294 = vld [vmem:[%s231 + $0x108] sm:$0xff]
        %v295 = vld [vmem:[%s2] sm:$0xff]
        %297 = vset.pattern.permute.xlu0 0
        %298 = vperm.xlu0 %297, %v295
        %v299 = vpop.permute.xlu0 %298
        %v302 = vunpack.c.l.b16 %v260
        %v303 = vunpack.c.h.b16 %v260
        %v304 = vpack.c.b16 %v302, %v302
        %v305 = vpack.c.b16 %v303, %v303
        %v341 = vunpack.c.l.b16 %v261
        %v342 = vunpack.c.h.b16 %v261
        %v343 = vunpack.c.l.b16 %v262
        %v344 = vunpack.c.h.b16 %v262
        %v345 = vunpack.c.l.b16 %v263
        %v346 = vunpack.c.h.b16 %v263
        %v347 = vunpack.c.l.b16 %v264
        %v348 = vunpack.c.h.b16 %v264
        %v349 = vunpack.c.l.b16 %v265
        %v350 = vunpack.c.h.b16 %v265
        %v351 = vunpack.c.l.b16 %v266
        %v352 = vunpack.c.h.b16 %v266
        %v353 = vunpack.c.l.b16 %v267
        %v354 = vunpack.c.h.b16 %v267
        %v355 = vunpack.c.l.b16 %v268
        %v356 = vunpack.c.h.b16 %v268
        %v357 = vunpack.c.l.b16 %v269
        %v358 = vunpack.c.h.b16 %v269
        %v359 = vunpack.c.l.b16 %v270
        %v360 = vunpack.c.h.b16 %v270
        %v361 = vunpack.c.l.b16 %v271
        %v362 = vunpack.c.h.b16 %v271
        %v363 = vunpack.c.l.b16 %v272
        %v364 = vunpack.c.h.b16 %v272
        %v365 = vunpack.c.l.b16 %v273
        %v366 = vunpack.c.h.b16 %v273
        %v367 = vunpack.c.l.b16 %v274
        %v368 = vunpack.c.h.b16 %v274
        %v369 = vunpack.c.l.b16 %v275
        %v370 = vunpack.c.h.b16 %v275
        %v371 = vunpack.c.l.b16 %v276
        %v372 = vunpack.c.h.b16 %v276
        %v373 = vunpack.c.l.b16 %v277
        %v374 = vunpack.c.h.b16 %v277
        %v375 = vunpack.c.l.b16 %v278
        %v376 = vunpack.c.h.b16 %v278
        %v377 = vunpack.c.l.b16 %v279
        %v378 = vunpack.c.h.b16 %v279
        %v379 = vunpack.c.l.b16 %v280
        %v380 = vunpack.c.h.b16 %v280
        %v381 = vunpack.c.l.b16 %v281
        %v382 = vunpack.c.h.b16 %v281
        %v383 = vunpack.c.l.b16 %v282
        %v384 = vunpack.c.h.b16 %v282
        %v385 = vunpack.c.l.b16 %v283
        %v386 = vunpack.c.h.b16 %v283
        %v387 = vunpack.c.l.b16 %v284
        %v388 = vunpack.c.h.b16 %v284
        %v389 = vunpack.c.l.b16 %v285
        %v390 = vunpack.c.h.b16 %v285
        %v391 = vunpack.c.l.b16 %v286
        %v392 = vunpack.c.h.b16 %v286
        %v393 = vunpack.c.l.b16 %v287
        %v394 = vunpack.c.h.b16 %v287
        %v395 = vunpack.c.l.b16 %v288
        %v396 = vunpack.c.h.b16 %v288
        %v397 = vunpack.c.l.b16 %v289
        %v398 = vunpack.c.h.b16 %v289
        %v399 = vunpack.c.l.b16 %v290
        %v400 = vunpack.c.h.b16 %v290
        %v401 = vunpack.c.l.b16 %v291
        %v402 = vunpack.c.h.b16 %v291
        %v403 = vunpack.c.l.b16 %v292
        %v404 = vunpack.c.h.b16 %v292
        %v405 = vunpack.c.l.b16 %v293
        %v406 = vunpack.c.h.b16 %v293
        %v407 = vunpack.c.l.b16 %v294
        %v408 = vunpack.c.h.b16 %v294
        %v409 = vpack.c.b16 %v345, %v341
        %v410 = vpack.c.b16 %v346, %v342
        %v411 = vpack.c.b16 %v347, %v343
        %v412 = vpack.c.b16 %v348, %v344
        %v413 = vpack.c.b16 %v353, %v349
        %v414 = vpack.c.b16 %v354, %v350
        %v415 = vpack.c.b16 %v355, %v351
        %v416 = vpack.c.b16 %v356, %v352
        %v417 = vpack.c.b16 %v361, %v357
        %v418 = vpack.c.b16 %v362, %v358
        %v419 = vpack.c.b16 %v363, %v359
        %v420 = vpack.c.b16 %v364, %v360
        %v421 = vpack.c.b16 %v369, %v365
        %v422 = vpack.c.b16 %v370, %v366
        %v423 = vpack.c.b16 %v371, %v367
        %v424 = vpack.c.b16 %v372, %v368
        %v425 = vpack.c.b16 %v377, %v373
        %v426 = vpack.c.b16 %v378, %v374
        %v427 = vpack.c.b16 %v379, %v375
        %v428 = vpack.c.b16 %v380, %v376
        %v429 = vpack.c.b16 %v385, %v381
        %v430 = vpack.c.b16 %v386, %v382
        %v431 = vpack.c.b16 %v387, %v383
        %v432 = vpack.c.b16 %v388, %v384
        %v433 = vpack.c.b16 %v393, %v389
        %v434 = vpack.c.b16 %v394, %v390
        %v435 = vpack.c.b16 %v395, %v391
        %v436 = vpack.c.b16 %v396, %v392
        %v437 = vpack.c.b16 %v401, %v397
        %v438 = vpack.c.b16 %v402, %v398
        %v439 = vpack.c.b16 %v403, %v399
        %v440 = vpack.c.b16 %v404, %v400
        %v441 = vpack.c.b16 %v405, %v405
        %v442 = vpack.c.b16 %v406, %v406
        %v443 = vpack.c.b16 %v407, %v407
        %v444 = vpack.c.b16 %v408, %v408
        %vm477 = vcmask 56320
        %v479 = vsel %vm477, %v305, 0
        %vm481 = vcmask 1042432
        %vm482 = vcmask 1043456
        %v483 = vsel %vm481, 4294967295, 65535
        %v484 = vsel %vm482, %v483, 0
        %v486 = vand.u32 %v441, %v484
        %v489 = vand.u32 %v442, %v484
        %v492 = vand.u32 %v443, %v484
        %v495 = vand.u32 %v444, %v484
        %497 = vmatprep.subr.bf16.mxu0 %v410
        %498 = vmatpush1.bf16.msra.mxu0 %v409
        %499 = vmatprep.subr.bf16.mxu0 %v414
        %500 = vmatpush1.bf16.msra.mxu0 %v413
        %501 = vmatprep.subr.bf16.mxu0 %v418
        %502 = vmatpush1.bf16.msra.mxu0 %v417
        %503 = vmatprep.subr.bf16.mxu0 %v422
        %504 = vmatpush1.bf16.msra.mxu0 %v421
        %505 = vmatprep.subr.bf16.mxu0 %v426
        %506 = vmatpush1.bf16.msra.mxu0 %v425
        %507 = vmatprep.subr.bf16.mxu0 %v430
        %508 = vmatpush1.bf16.msra.mxu0 %v429
        %509 = vmatprep.subr.bf16.mxu0 %v434
        %510 = vmatpush1.bf16.msra.mxu0 %v433
        %511 = vmatprep.subr.bf16.mxu0 %v438
        %512 = vmatpush1.bf16.msra.mxu0 %v437
        %513 = vmatprep.subr.bf16.mxu0 %v489
        %514 = vmatpush1.bf16.msra.mxu0 %v486
        %515 = vmatprep.subr.bf16.mxu0 0
        %516 = vmatpush1.bf16.msra.mxu0 0
        %517 = vmatprep.subr.bf16.mxu0 0
        %518 = vmatpush1.bf16.msra.mxu0 0
        %519 = vmatprep.subr.bf16.mxu0 0
        %520 = vmatpush1.bf16.msra.mxu0 0
        %521 = vmatprep.subr.bf16.mxu0 0
        %522 = vmatpush1.bf16.msra.mxu0 0
        %523 = vmatprep.subr.bf16.mxu0 0
        %524 = vmatpush1.bf16.msra.mxu0 0
        %525 = vmatprep.subr.bf16.mxu0 0
        %526 = vmatpush1.bf16.msra.mxu0 0
        %527 = vmatprep.subr.bf16.mxu0 0
        %528 = vmatpush1.bf16.msra.mxu0 0
        %529 = vmatprep.mubr.bf16.mxu0 %v479
        %530 = vmatmul.mubr.bf16.gmra.mrb[0].mxu0 %v304
        %v531 = vpop.f32.mrb[0].mxu0
        %v532 = vadd.f32 %v299, %v531
        %v533 = vpop.f32.mrb[0].mxu0
        %v534 = vadd.f32 %v299, %v533
        %v535 = vpop.f32.mrb[0].mxu0
        %v536 = vpop.f32.mrb[0].mxu0
        %537 = vdwg.mxu0
        %538 = vmatprep.subr.bf16.mxu0 %v412
        %539 = vmatpush1.bf16.msra.mxu0 %v411
        %540 = vmatprep.subr.bf16.mxu0 %v416
        %541 = vmatpush1.bf16.msra.mxu0 %v415
        %542 = vmatprep.subr.bf16.mxu0 %v420
        %543 = vmatpush1.bf16.msra.mxu0 %v419
        %544 = vmatprep.subr.bf16.mxu0 %v424
        %545 = vmatpush1.bf16.msra.mxu0 %v423
        %546 = vmatprep.subr.bf16.mxu0 %v428
        %547 = vmatpush1.bf16.msra.mxu0 %v427
        %548 = vmatprep.subr.bf16.mxu0 %v432
        %549 = vmatpush1.bf16.msra.mxu0 %v431
        %550 = vmatprep.subr.bf16.mxu0 %v436
        %551 = vmatpush1.bf16.msra.mxu0 %v435
        %552 = vmatprep.subr.bf16.mxu0 %v440
        %553 = vmatpush1.bf16.msra.mxu0 %v439
        %554 = vmatprep.subr.bf16.mxu0 %v495
        %555 = vmatpush1.bf16.msra.mxu0 %v492
        %556 = vmatprep.subr.bf16.mxu0 0
        %557 = vmatpush1.bf16.msra.mxu0 0
        %558 = vmatprep.subr.bf16.mxu0 0
        %559 = vmatpush1.bf16.msra.mxu0 0
        %560 = vmatprep.subr.bf16.mxu0 0
        %561 = vmatpush1.bf16.msra.mxu0 0
        %562 = vmatprep.subr.bf16.mxu0 0
        %563 = vmatpush1.bf16.msra.mxu0 0
        %564 = vmatprep.subr.bf16.mxu0 0
        %565 = vmatpush1.bf16.msra.mxu0 0
        %566 = vmatprep.subr.bf16.mxu0 0
        %567 = vmatpush1.bf16.msra.mxu0 0
        %568 = vmatprep.subr.bf16.mxu0 0
        %569 = vmatpush1.bf16.msra.mxu0 0
        %570 = vmatprep.mubr.bf16.mxu0 %v479
        %571 = vmatmul.mubr.bf16.gmra.mrb[0].mxu0 %v304
        %v572 = vpop.f32.mrb[0].mxu0
        %v573 = vadd.f32 %v299, %v572
        %v574 = vpop.f32.mrb[0].mxu0
        %v575 = vadd.f32 %v299, %v574
        %v576 = vpop.f32.mrb[0].mxu0
        %v577 = vpop.f32.mrb[0].mxu0
        %578 = vdwg.mxu0
        %v579 = vmax.f32 %v532, 0.0
        %v580 = vmax.f32 %v534, 0.0
        %v581 = vmax.f32 %v573, 0.0
        %v582 = vmax.f32 %v575, 0.0
        %v583 = vpack.c.bf16 %v579, %v579
        %v584 = vpack.c.bf16 %v580, %v580
        %v585 = vpack.c.bf16 %v581, %v581
        %v586 = vpack.c.bf16 %v582, %v582
        %v591 = vunpack.c.l.b16 %v583
        %v592 = vunpack.c.l.b16 %v584
        %v593 = vunpack.c.l.b16 %v585
        %v594 = vunpack.c.l.b16 %v586
        %v595 = vpack.c.b16 %v592, %v591
        %v596 = vpack.c.b16 %v594, %v593
        %599 = vst [vmem:[%s257] sm:$0xff] %v595
        %600 = vst [vmem:[%s257 + $0x8] sm:$0xff] %v596
        %s601 = smul.u32 4, %s14
        %p602 = scmp.lt.s32.totalorder %s601, 15
        %s603 = scalar_select %p602, %s601, 15
        %s604 = smul.addr %s603, 4
        %s605 = scalar_lea.vmem %s3, %s604
        // Predicated region
        $region56: #{resnet_forward.7} parent=50 // pred_check
          %p606 = pneg %p100
        $region57: #{resnet_forward.7} parent=50 // pred_check_branch
          %608 = sbr.rel (%p606) target = $region59
        $region58: #{resnet_forward.7} parent=50 // pred_region
          %s609 = smul.u32 4, %s14
        $region59: #{resnet_forward.7} parent=50 // pred_fallthru
          _
      $region51: #{resnet_forward.7} parent=5 // pred_fallthru
        _
      %p610 = scmp.le.s32.totalorder 2, %s9
      // Predicated region
      $region60: #{resnet_forward.7} parent=5 // pred_check
        %p611 = pneg %p610
      $region61: #{resnet_forward.7} parent=5 // pred_check_branch
        %613 = sbr.rel (%p611) target = $region63
      $region62: #{resnet_forward.7} parent=5 // pred_region
        %s614 = ssub.s32 %s9, 2
        // Predicated region
        $region64: #{resnet_forward.7} parent=62 // pred_check
          %p615 = pneg %p106
        $region65: #{resnet_forward.7} parent=62 // pred_check_branch
          %617 = sbr.rel (%p615) target = $region67
        $region66: #{resnet_forward.7} parent=62 // pred_region
          %s618 = smul.u32 4, %s15
          %p619 = scmp.lt.s32.totalorder %s618, 15
          %s620 = scalar_select %p619, %s618, 15
          %s621 = smul.addr %s620, 4
          %s622 = scalar_lea.vmem %s3, %s621
        $region67: #{resnet_forward.7} parent=62 // pred_fallthru
          _
      $region63: #{resnet_forward.7} parent=5 // pred_fallthru
        _
    $region6: #{resnet_forward.7} parent=1 // loop_footer
      %s13 = sadd.s32 1, %s9
    $region7: #{resnet_forward.7} parent=1 // loop_footer_branch
      %8 = sbr.rel target = $region3
    $region8: #{resnet_forward.7} parent=1 // loop_exit
      _

// kernel: resnet_forward.8
$region0: #{resnet_forward.8}
  #allocation0 [shape = 'u32[]', space=smem, size = 0x4, offset = 0x4, fixed_abs, tag = 'smem constant byte address 0x4 - core index']
  #allocation1 [shape = 'u32[144,128]{1,0:T(1,128)}', space=vmem, size = 0x12000, scoped, tag = 'internal scratch']
  %s0 = inlined_call_operand.vmem [shape: bf16[8,360], index: 0, kind: input, shape index: {}]
  %s1 = inlined_call_operand.vmem [shape: bf16[360,512], index: 1, kind: input, shape index: {}]
  %s2 = inlined_call_operand.vmem [shape: f32[8,1], index: 2, kind: input, shape index: {}]
  %s3 = inlined_call_operand.vmem [shape: bf16[8,512], index: 3, kind: output, shape index: {}]
  %s4 = sld [smem:[#allocation0]]
  $region83: #{resnet_forward.8} parent=0
    _
  %s6 = ssub.s32 1, %s4
  %s7 = scalar_select 0, %s6, %s4
  $region1: #{resnet_forward.8} parent=0
    #allocation2 [shape = 'u8[368640]{0}', space=vmem, size = 0x5a000, scoped, tag = 'input window, operand 1']
    loop: start=0, step=1, limit=4
    $region2: #{resnet_forward.8} parent=1 // loop_pre_header
      _
    $region3: #{resnet_forward.8} parent=1 // loop_header
      %s9 = sphi 0, %s13
      %p10 = scmp.ge.s32.totalorder %s9, 4
      %s17 = sphi 0, %s17
      %s19 = sphi 0, %s17
      %s20 = sphi 0, %s19
      %s34 = sphi 0, %s20
      %s40 = sphi 0, %s42
      %s43 = sphi 0, %s40
      %s44 = sphi 0, %s43
      %s60 = sphi 0, %s44
      %s64 = sphi 0, %s64
      %s66 = sphi 0, %s64
      %s67 = sphi 0, %s66
      %s81 = sphi 0, %s67
      %s87 = sphi 0, %s89
      %s90 = sphi 0, %s87
      %s91 = sphi 0, %s90
      %s107 = sphi 0, %s91
    $region4: #{resnet_forward.8} parent=1 // loop_header_branch
      %12 = sbr.rel (%p10) target = $region8
    $region5: #{resnet_forward.8} parent=1 // loop_body
      %s14 = ssub.s32 %s9, 1
      %s15 = ssub.s32 %s9, 2
      %s16 = sadd.s32 %s9, 1
      %s18 = sadd.s32 %s17, 1
      %p21 = scmp.eq.s32.totalorder %s9, 1
      %p22 = scmp.ne.s32.totalorder %s17, %s19
      %p23 = scmp.eq.s32.totalorder %s9, 0
      %p24 = por %p22, %p23
      %p25 = scmp.ne.s32.totalorder %s17, %s19
      %p26 = scmp.eq.s32.totalorder %s14, 1
      %p27 = por %p25, %p26
      %p28 = scmp.ne.s32.totalorder %s19, %s20
      %p29 = scmp.eq.s32.totalorder %s14, 0
      %p30 = por %p28, %p29
      %p31 = scmp.ne.s32.totalorder %s19, %s20
      %p32 = scmp.eq.s32.totalorder %s15, 1
      %p33 = por %p31, %p32
      %p35 = scmp.ne.s32.totalorder %s20, %s34
      %p36 = scmp.eq.s32.totalorder %s15, 0
      %p37 = por %p35, %p36
      %s38 = ssub.s32 %s9, %s16
      %p39 = scmp.eq.s32.totalorder %s38, 0
      %s41 = sadd.s32 %s40, 1
      %s42 = scalar_select %p39, %s40, %s41
      %p45 = pneg %p39
      %p46 = scmp.eq.s32.totalorder %s9, 1
      %p47 = por %p45, %p46
      %p48 = scmp.ne.s32.totalorder %s40, %s43
      %p49 = scmp.eq.s32.totalorder %s9, 0
      %p50 = por %p48, %p49
      %p51 = scmp.ne.s32.totalorder %s40, %s43
      %p52 = scmp.eq.s32.totalorder %s14, 1
      %p53 = por %p51, %p52
      %p54 = scmp.ne.s32.totalorder %s43, %s44
      %p55 = scmp.eq.s32.totalorder %s14, 0
      %p56 = por %p54, %p55
      %p57 = scmp.ne.s32.totalorder %s43, %s44
      %p58 = scmp.eq.s32.totalorder %s15, 1
      %p59 = por %p57, %p58
      %p61 = scmp.ne.s32.totalorder %s44, %s60
      %p62 = scmp.eq.s32.totalorder %s15, 0
      %p63 = por %p61, %p62
      %s65 = sadd.s32 %s64, 1
      %p68 = scmp.eq.s32.totalorder %s9, 1
      %p69 = scmp.ne.s32.totalorder %s64, %s66
      %p70 = scmp.eq.s32.totalorder %s9, 0
      %p71 = por %p69, %p70
      %p72 = scmp.ne.s32.totalorder %s64, %s66
      %p73 = scmp.eq.s32.totalorder %s14, 1
      %p74 = por %p72, %p73
      %p75 = scmp.ne.s32.totalorder %s66, %s67
      %p76 = scmp.eq.s32.totalorder %s14, 0
      %p77 = por %p75, %p76
      %p78 = scmp.ne.s32.totalorder %s66, %s67
      %p79 = scmp.eq.s32.totalorder %s15, 1
      %p80 = por %p78, %p79
      %p82 = scmp.ne.s32.totalorder %s67, %s81
      %p83 = scmp.eq.s32.totalorder %s15, 0
      %p84 = por %p82, %p83
      %s85 = ssub.s32 %s9, %s16
      %p86 = scmp.eq.s32.totalorder %s85, 0
      %s88 = sadd.s32 %s87, 1
      %s89 = scalar_select %p86, %s87, %s88
      %p92 = pneg %p86
      %p93 = scmp.eq.s32.totalorder %s9, 1
      %p94 = por %p92, %p93
      %p95 = scmp.ne.s32.totalorder %s87, %s90
      %p96 = scmp.eq.s32.totalorder %s9, 0
      %p97 = por %p95, %p96
      %p98 = scmp.ne.s32.totalorder %s87, %s90
      %p99 = scmp.eq.s32.totalorder %s14, 1
      %p100 = por %p98, %p99
      %p101 = scmp.ne.s32.totalorder %s90, %s91
      %p102 = scmp.eq.s32.totalorder %s14, 0
      %p103 = por %p101, %p102
      %p104 = scmp.ne.s32.totalorder %s90, %s91
      %p105 = scmp.eq.s32.totalorder %s15, 1
      %p106 = por %p104, %p105
      %p108 = scmp.ne.s32.totalorder %s91, %s107
      %p109 = scmp.eq.s32.totalorder %s15, 0
      %p110 = por %p108, %p109
      %p111 = scmp.le.s32.totalorder 1, %s9
      %p112 = scmp.lt.s32.totalorder %s9, 3
      %p113 = pnand %p111, %p112
      %p114 = pneg %p113
      // Predicated region
      $region9: #{resnet_forward.8} parent=5 // pred_check
        _
      $region10: #{resnet_forward.8} parent=5 // pred_check_branch
        %116 = sbr.rel (%p113) target = $region12
      $region11: #{resnet_forward.8} parent=5 // pred_region
        %s117 = ssub.s32 %s9, 1
        // Predicated region
        $region13: #{resnet_forward.8} parent=11 // pred_check
          %p118 = pneg %p30
        $region14: #{resnet_forward.8} parent=11 // pred_check_branch
          %120 = sbr.rel (%p118) target = $region16
        $region15: #{resnet_forward.8} parent=11 // pred_region
          _
        $region16: #{resnet_forward.8} parent=11 // pred_fallthru
          _
        // Predicated region
        $region17: #{resnet_forward.8} parent=11 // pred_check
          %p121 = pneg %p77
        $region18: #{resnet_forward.8} parent=11 // pred_check_branch
          %123 = sbr.rel (%p121) target = $region20
        $region19: #{resnet_forward.8} parent=11 // pred_region
          _
        $region20: #{resnet_forward.8} parent=11 // pred_fallthru
          _
      $region12: #{resnet_forward.8} parent=5 // pred_fallthru
        _
      %p124 = scmp.lt.s32.totalorder %s9, 2
      // Predicated region
      $region21: #{resnet_forward.8} parent=5 // pred_check
        %p125 = pneg %p124
      $region22: #{resnet_forward.8} parent=5 // pred_check_branch
        %127 = sbr.rel (%p125) target = $region24
      $region23: #{resnet_forward.8} parent=5 // pred_region
        // Predicated region
        $region25: #{resnet_forward.8} parent=23 // pred_check
          %p128 = pneg %p50
        $region26: #{resnet_forward.8} parent=23 // pred_check_branch
          %130 = sbr.rel (%p128) target = $region28
        $region27: #{resnet_forward.8} parent=23 // pred_region
          %s131 = sand.u32 %s40, 1
          %s132 = sand.u32 %s40, 1
          %s133 = smul.addr %s132, 360
          %s134 = scalar_lea.vmem [#allocation2], %s133
          %s135 = smul.u32 2, %s9
          %s136 = smul.addr %s135, 4
          %s137 = scalar_lea.vmem %s1, %s136
          // Predicated region
          $region29: #{resnet_forward.8} parent=27 // pred_check
            _
          $region30: #{resnet_forward.8} parent=27 // pred_check_branch
            %139 = sbr.rel (0) target = $region32
          $region31: #{resnet_forward.8} parent=27 // pred_region
            // Predicated region
            $region33: #{resnet_forward.8} parent=31 // pred_check
              _
            $region34: #{resnet_forward.8} parent=31 // pred_check_branch
              %141 = sbr.rel (0) target = $region36
            $region35: #{resnet_forward.8} parent=31 // pred_region
              // Predicated region
              $region48: #{resnet_forward.8} parent=35 // pred_check
                _
              $region49: #{resnet_forward.8} parent=35 // pred_check_branch
                %244 = sbr.rel (0) target = $region51
              $region50: #{resnet_forward.8} parent=35 // pred_region
                loop: start=0, step=1, limit=1
                $region52: #{resnet_forward.8} parent=50 // loop_pre_header
                  _
                $region53: #{resnet_forward.8} parent=50 // loop_header
                  %s246 = sphi 0, %s250
                  %p247 = scmp.ge.s32.totalorder %s246, 1
                  %s251 = sphi %s137, %s137
                  %s252 = sphi %s134, %s134
                $region54: #{resnet_forward.8} parent=50 // loop_header_branch
                  %249 = sbr.rel (%p247) target = $region58
                $region55: #{resnet_forward.8} parent=50 // loop_body
                  %v253 = vld [vmem:[%s251] sm:$0xff]
                  %254 = vst [vmem:[%s252] sm:$0xff] %v253
                  %v255 = vld [vmem:[%s251 + $0x10] sm:$0xff]
                  %256 = vst [vmem:[%s252 + $0x8] sm:$0xff] %v255
                  %v257 = vld [vmem:[%s251 + $0x20] sm:$0xff]
                  %258 = vst [vmem:[%s252 + $0x10] sm:$0xff] %v257
                  %v259 = vld [vmem:[%s251 + $0x30] sm:$0xff]
                  %260 = vst [vmem:[%s252 + $0x18] sm:$0xff] %v259
                  %v261 = vld [vmem:[%s251 + $0x40] sm:$0xff]
                  %262 = vst [vmem:[%s252 + $0x20] sm:$0xff] %v261
                  %v263 = vld [vmem:[%s251 + $0x50] sm:$0xff]
                  %264 = vst [vmem:[%s252 + $0x28] sm:$0xff] %v263
                  %v265 = vld [vmem:[%s251 + $0x60] sm:$0xff]
                  %266 = vst [vmem:[%s252 + $0x30] sm:$0xff] %v265
                  %v267 = vld [vmem:[%s251 + $0x70] sm:$0xff]
                  %268 = vst [vmem:[%s252 + $0x38] sm:$0xff] %v267
                  %v269 = vld [vmem:[%s251 + $0x80] sm:$0xff]
                  %270 = vst [vmem:[%s252 + $0x40] sm:$0xff] %v269
                  %v271 = vld [vmem:[%s251 + $0x90] sm:$0xff]
                  %272 = vst [vmem:[%s252 + $0x48] sm:$0xff] %v271
                  %v273 = vld [vmem:[%s251 + $0xa0] sm:$0xff]
                  %274 = vst [vmem:[%s252 + $0x50] sm:$0xff] %v273
                  %v275 = vld [vmem:[%s251 + $0xb0] sm:$0xff]
                  %276 = vst [vmem:[%s252 + $0x58] sm:$0xff] %v275
                  %v277 = vld [vmem:[%s251 + $0xc0] sm:$0xff]
                  %278 = vst [vmem:[%s252 + $0x60] sm:$0xff] %v277
                  %v279 = vld [vmem:[%s251 + $0xd0] sm:$0xff]
                  %280 = vst [vmem:[%s252 + $0x68] sm:$0xff] %v279
                  %v281 = vld [vmem:[%s251 + $0xe0] sm:$0xff]
                  %282 = vst [vmem:[%s252 + $0x70] sm:$0xff] %v281
                  %v283 = vld [vmem:[%s251 + $0xf0] sm:$0xff]
                  %284 = vst [vmem:[%s252 + $0x78] sm:$0xff] %v283
                  %v285 = vld [vmem:[%s251 + $0x100] sm:$0xff]
                  %286 = vst [vmem:[%s252 + $0x80] sm:$0xff] %v285
                  %v287 = vld [vmem:[%s251 + $0x110] sm:$0xff]
                  %288 = vst [vmem:[%s252 + $0x88] sm:$0xff] %v287
                  %v289 = vld [vmem:[%s251 + $0x120] sm:$0xff]
                  %290 = vst [vmem:[%s252 + $0x90] sm:$0xff] %v289
                  %v291 = vld [vmem:[%s251 + $0x130] sm:$0xff]
                  %292 = vst [vmem:[%s252 + $0x98] sm:$0xff] %v291
                  %v293 = vld [vmem:[%s251 + $0x140] sm:$0xff]
                  %294 = vst [vmem:[%s252 + $0xa0] sm:$0xff] %v293
                  %v295 = vld [vmem:[%s251 + $0x150] sm:$0xff]
                  %296 = vst [vmem:[%s252 + $0xa8] sm:$0xff] %v295
                  %v297 = vld [vmem:[%s251 + $0x160] sm:$0xff]
                  %298 = vst [vmem:[%s252 + $0xb0] sm:$0xff] %v297
                  %v299 = vld [vmem:[%s251 + $0x170] sm:$0xff]
                  %300 = vst [vmem:[%s252 + $0xb8] sm:$0xff] %v299
                  %v301 = vld [vmem:[%s251 + $0x180] sm:$0xff]
                  %302 = vst [vmem:[%s252 + $0xc0] sm:$0xff] %v301
                  %v303 = vld [vmem:[%s251 + $0x190] sm:$0xff]
                  %304 = vst [vmem:[%s252 + $0xc8] sm:$0xff] %v303
                  %v305 = vld [vmem:[%s251 + $0x1a0] sm:$0xff]
                  %306 = vst [vmem:[%s252 + $0xd0] sm:$0xff] %v305
                  %v307 = vld [vmem:[%s251 + $0x1b0] sm:$0xff]
                  %308 = vst [vmem:[%s252 + $0xd8] sm:$0xff] %v307
                  %v309 = vld [vmem:[%s251 + $0x1c0] sm:$0xff]
                  %310 = vst [vmem:[%s252 + $0xe0] sm:$0xff] %v309
                  %v311 = vld [vmem:[%s251 + $0x1d0] sm:$0xff]
                  %312 = vst [vmem:[%s252 + $0xe8] sm:$0xff] %v311
                  %v313 = vld [vmem:[%s251 + $0x1e0] sm:$0xff]
                  %314 = vst [vmem:[%s252 + $0xf0] sm:$0xff] %v313
                  %v315 = vld [vmem:[%s251 + $0x1f0] sm:$0xff]
                  %316 = vst [vmem:[%s252 + $0xf8] sm:$0xff] %v315
                  %v317 = vld [vmem:[%s251 + $0x200] sm:$0xff]
                  %318 = vst [vmem:[%s252 + $0x100] sm:$0xff] %v317
                  %v319 = vld [vmem:[%s251 + $0x210] sm:$0xff]
                  %320 = vst [vmem:[%s252 + $0x108] sm:$0xff] %v319
                  %v321 = vld [vmem:[%s251 + $0x220] sm:$0xff]
                  %322 = vst [vmem:[%s252 + $0x110] sm:$0xff] %v321
                  %v323 = vld [vmem:[%s251 + $0x230] sm:$0xff]
                  %324 = vst [vmem:[%s252 + $0x118] sm:$0xff] %v323
                  %v325 = vld [vmem:[%s251 + $0x240] sm:$0xff]
                  %326 = vst [vmem:[%s252 + $0x120] sm:$0xff] %v325
                  %v327 = vld [vmem:[%s251 + $0x250] sm:$0xff]
                  %328 = vst [vmem:[%s252 + $0x128] sm:$0xff] %v327
                  %v329 = vld [vmem:[%s251 + $0x260] sm:$0xff]
                  %330 = vst [vmem:[%s252 + $0x130] sm:$0xff] %v329
                  %v331 = vld [vmem:[%s251 + $0x270] sm:$0xff]
                  %332 = vst [vmem:[%s252 + $0x138] sm:$0xff] %v331
                  %v333 = vld [vmem:[%s251 + $0x280] sm:$0xff]
                  %334 = vst [vmem:[%s252 + $0x140] sm:$0xff] %v333
                  %v335 = vld [vmem:[%s251 + $0x290] sm:$0xff]
                  %336 = vst [vmem:[%s252 + $0x148] sm:$0xff] %v335
                  %v337 = vld [vmem:[%s251 + $0x2a0] sm:$0xff]
                  %338 = vst [vmem:[%s252 + $0x150] sm:$0xff] %v337
                  %v339 = vld [vmem:[%s251 + $0x2b0] sm:$0xff]
                  %340 = vst [vmem:[%s252 + $0x158] sm:$0xff] %v339
                  %v341 = vld [vmem:[%s251 + $0x2c0] sm:$0xff]
                  %342 = vst [vmem:[%s252 + $0x160] sm:$0xff] %v341
                $region56: #{resnet_forward.8} parent=50 // loop_footer
                  %s250 = sadd.s32 1, %s246
                $region57: #{resnet_forward.8} parent=50 // loop_footer_branch
                  %245 = sbr.rel target = $region53
                $region58: #{resnet_forward.8} parent=50 // loop_exit
                  _
              $region51: #{resnet_forward.8} parent=35 // pred_fallthru
                _
              // Predicated region
              $region59: #{resnet_forward.8} parent=35 // pred_check
                _
              $region60: #{resnet_forward.8} parent=35 // pred_check_branch
                %344 = sbr.rel target = $region62
              $region61: #{resnet_forward.8} parent=35 // pred_region
                _
              $region62: #{resnet_forward.8} parent=35 // pred_fallthru
                _
            $region36: #{resnet_forward.8} parent=31 // pred_fallthru
              _
            // Predicated region
            $region37: #{resnet_forward.8} parent=31 // pred_check
              _
            $region38: #{resnet_forward.8} parent=31 // pred_check_branch
              %143 = sbr.rel target = $region40
            $region39: #{resnet_forward.8} parent=31 // pred_region
              loop: start=0, step=1, limit=1
              $region41: #{resnet_forward.8} parent=39 // loop_pre_header
                _
              $region42: #{resnet_forward.8} parent=39 // loop_header
                %s146 = sphi 0, %s150
                %p147 = scmp.ge.s32.totalorder %s146, 1
                %s151 = sphi %s137, %s137
                %s152 = sphi %s134, %s134
              $region43: #{resnet_forward.8} parent=39 // loop_header_branch
                %149 = sbr.rel (%p147) target = $region47
              $region44: #{resnet_forward.8} parent=39 // loop_body
                %v153 = vld [vmem:[%s151] sm:$0xff]
                %154 = vst [vmem:[%s152] sm:$0xff] %v153
                %v155 = vld [vmem:[%s151 + $0x10] sm:$0xff]
                %156 = vst [vmem:[%s152 + $0x8] sm:$0xff] %v155
                %v157 = vld [vmem:[%s151 + $0x20] sm:$0xff]
                %158 = vst [vmem:[%s152 + $0x10] sm:$0xff] %v157
                %v159 = vld [vmem:[%s151 + $0x30] sm:$0xff]
                %160 = vst [vmem:[%s152 + $0x18] sm:$0xff] %v159
                %v161 = vld [vmem:[%s151 + $0x40] sm:$0xff]
                %162 = vst [vmem:[%s152 + $0x20] sm:$0xff] %v161
                %v163 = vld [vmem:[%s151 + $0x50] sm:$0xff]
                %164 = vst [vmem:[%s152 + $0x28] sm:$0xff] %v163
                %v165 = vld [vmem:[%s151 + $0x60] sm:$0xff]
                %166 = vst [vmem:[%s152 + $0x30] sm:$0xff] %v165
                %v167 = vld [vmem:[%s151 + $0x70] sm:$0xff]
                %168 = vst [vmem:[%s152 + $0x38] sm:$0xff] %v167
                %v169 = vld [vmem:[%s151 + $0x80] sm:$0xff]
                %170 = vst [vmem:[%s152 + $0x40] sm:$0xff] %v169
                %v171 = vld [vmem:[%s151 + $0x90] sm:$0xff]
                %172 = vst [vmem:[%s152 + $0x48] sm:$0xff] %v171
                %v173 = vld [vmem:[%s151 + $0xa0] sm:$0xff]
                %174 = vst [vmem:[%s152 + $0x50] sm:$0xff] %v173
                %v175 = vld [vmem:[%s151 + $0xb0] sm:$0xff]
                %176 = vst [vmem:[%s152 + $0x58] sm:$0xff] %v175
                %v177 = vld [vmem:[%s151 + $0xc0] sm:$0xff]
                %178 = vst [vmem:[%s152 + $0x60] sm:$0xff] %v177
                %v179 = vld [vmem:[%s151 + $0xd0] sm:$0xff]
                %180 = vst [vmem:[%s152 + $0x68] sm:$0xff] %v179
                %v181 = vld [vmem:[%s151 + $0xe0] sm:$0xff]
                %182 = vst [vmem:[%s152 + $0x70] sm:$0xff] %v181
                %v183 = vld [vmem:[%s151 + $0xf0] sm:$0xff]
                %184 = vst [vmem:[%s152 + $0x78] sm:$0xff] %v183
                %v185 = vld [vmem:[%s151 + $0x100] sm:$0xff]
                %186 = vst [vmem:[%s152 + $0x80] sm:$0xff] %v185
                %v187 = vld [vmem:[%s151 + $0x110] sm:$0xff]
                %188 = vst [vmem:[%s152 + $0x88] sm:$0xff] %v187
                %v189 = vld [vmem:[%s151 + $0x120] sm:$0xff]
                %190 = vst [vmem:[%s152 + $0x90] sm:$0xff] %v189
                %v191 = vld [vmem:[%s151 + $0x130] sm:$0xff]
                %192 = vst [vmem:[%s152 + $0x98] sm:$0xff] %v191
                %v193 = vld [vmem:[%s151 + $0x140] sm:$0xff]
                %194 = vst [vmem:[%s152 + $0xa0] sm:$0xff] %v193
                %v195 = vld [vmem:[%s151 + $0x150] sm:$0xff]
                %196 = vst [vmem:[%s152 + $0xa8] sm:$0xff] %v195
                %v197 = vld [vmem:[%s151 + $0x160] sm:$0xff]
                %198 = vst [vmem:[%s152 + $0xb0] sm:$0xff] %v197
                %v199 = vld [vmem:[%s151 + $0x170] sm:$0xff]
                %200 = vst [vmem:[%s152 + $0xb8] sm:$0xff] %v199
                %v201 = vld [vmem:[%s151 + $0x180] sm:$0xff]
                %202 = vst [vmem:[%s152 + $0xc0] sm:$0xff] %v201
                %v203 = vld [vmem:[%s151 + $0x190] sm:$0xff]
                %204 = vst [vmem:[%s152 + $0xc8] sm:$0xff] %v203
                %v205 = vld [vmem:[%s151 + $0x1a0] sm:$0xff]
                %206 = vst [vmem:[%s152 + $0xd0] sm:$0xff] %v205
                %v207 = vld [vmem:[%s151 + $0x1b0] sm:$0xff]
                %208 = vst [vmem:[%s152 + $0xd8] sm:$0xff] %v207
                %v209 = vld [vmem:[%s151 + $0x1c0] sm:$0xff]
                %210 = vst [vmem:[%s152 + $0xe0] sm:$0xff] %v209
                %v211 = vld [vmem:[%s151 + $0x1d0] sm:$0xff]
                %212 = vst [vmem:[%s152 + $0xe8] sm:$0xff] %v211
                %v213 = vld [vmem:[%s151 + $0x1e0] sm:$0xff]
                %214 = vst [vmem:[%s152 + $0xf0] sm:$0xff] %v213
                %v215 = vld [vmem:[%s151 + $0x1f0] sm:$0xff]
                %216 = vst [vmem:[%s152 + $0xf8] sm:$0xff] %v215
                %v217 = vld [vmem:[%s151 + $0x200] sm:$0xff]
                %218 = vst [vmem:[%s152 + $0x100] sm:$0xff] %v217
                %v219 = vld [vmem:[%s151 + $0x210] sm:$0xff]
                %220 = vst [vmem:[%s152 + $0x108] sm:$0xff] %v219
                %v221 = vld [vmem:[%s151 + $0x220] sm:$0xff]
                %222 = vst [vmem:[%s152 + $0x110] sm:$0xff] %v221
                %v223 = vld [vmem:[%s151 + $0x230] sm:$0xff]
                %224 = vst [vmem:[%s152 + $0x118] sm:$0xff] %v223
                %v225 = vld [vmem:[%s151 + $0x240] sm:$0xff]
                %226 = vst [vmem:[%s152 + $0x120] sm:$0xff] %v225
                %v227 = vld [vmem:[%s151 + $0x250] sm:$0xff]
                %228 = vst [vmem:[%s152 + $0x128] sm:$0xff] %v227
                %v229 = vld [vmem:[%s151 + $0x260] sm:$0xff]
                %230 = vst [vmem:[%s152 + $0x130] sm:$0xff] %v229
                %v231 = vld [vmem:[%s151 + $0x270] sm:$0xff]
                %232 = vst [vmem:[%s152 + $0x138] sm:$0xff] %v231
                %v233 = vld [vmem:[%s151 + $0x280] sm:$0xff]
                %234 = vst [vmem:[%s152 + $0x140] sm:$0xff] %v233
                %v235 = vld [vmem:[%s151 + $0x290] sm:$0xff]
                %236 = vst [vmem:[%s152 + $0x148] sm:$0xff] %v235
                %v237 = vld [vmem:[%s151 + $0x2a0] sm:$0xff]
                %238 = vst [vmem:[%s152 + $0x150] sm:$0xff] %v237
                %v239 = vld [vmem:[%s151 + $0x2b0] sm:$0xff]
                %240 = vst [vmem:[%s152 + $0x158] sm:$0xff] %v239
                %v241 = vld [vmem:[%s151 + $0x2c0] sm:$0xff]
                %242 = vst [vmem:[%s152 + $0x160] sm:$0xff] %v241
              $region45: #{resnet_forward.8} parent=39 // loop_footer
                %s150 = sadd.s32 1, %s146
              $region46: #{resnet_forward.8} parent=39 // loop_footer_branch
                %145 = sbr.rel target = $region42
              $region47: #{resnet_forward.8} parent=39 // loop_exit
                _
            $region40: #{resnet_forward.8} parent=31 // pred_fallthru
              _
          $region32: #{resnet_forward.8} parent=27 // pred_fallthru
            _
          %345 = vnop
        $region28: #{resnet_forward.8} parent=23 // pred_fallthru
          _
      $region24: #{resnet_forward.8} parent=5 // pred_fallthru
        _
      %p346 = scmp.le.s32.totalorder 1, %s9
      %p347 = scmp.lt.s32.totalorder %s9, 3
      %p348 = pnand %p346, %p347
      %p349 = pneg %p348
      // Predicated region
      $region63: #{resnet_forward.8} parent=5 // pred_check
        _
      $region64: #{resnet_forward.8} parent=5 // pred_check_branch
        %351 = sbr.rel (%p348) target = $region66
      $region65: #{resnet_forward.8} parent=5 // pred_region
        %s352 = ssub.s32 %s9, 1
        %s353 = sand.u32 %s43, 1
        %s354 = sand.u32 %s43, 1
        %s355 = smul.addr %s354, 360
        %s356 = scalar_lea.vmem [#allocation2], %s355
        // Predicated region
        $region67: #{resnet_forward.8} parent=65 // pred_check
          %p357 = pneg %p56
        $region68: #{resnet_forward.8} parent=65 // pred_check_branch
          %359 = sbr.rel (%p357) target = $region70
        $region69: #{resnet_forward.8} parent=65 // pred_region
          _
        $region70: #{resnet_forward.8} parent=65 // pred_fallthru
          _
        %p360 = pneg %p30
        %p361 = pneg %p27
        %s362 = sand.u32 %s43, 1
        %s363 = sand.u32 %s43, 1
        %s364 = smul.addr %s363, 360
        %s365 = scalar_lea.vmem [#allocation2], %s364
        %p366 = pneg %p56
        %p367 = pneg %p53
        %p368 = pneg %p77
        %p369 = pneg %p74
        %p370 = pneg %p103
        %p371 = pneg %p100
        %s372 = smul.u32 2, %s14
        %p373 = scmp.lt.s32.totalorder %s372, 3
        %s374 = scalar_select %p373, %s372, 3
        %s375 = smul.addr %s374, 4
        %s376 = scalar_lea.vmem %s3, %s375
        %s377 = smul.u32 2, %s14
        %s378 = smul.u32 2, %s14
        %p379 = scmp.lt.s32.totalorder %s378, 3
        %s380 = scalar_select %p379, %s378, 3
        %s381 = smul.addr %s380, 4
        %s382 = scalar_lea.vmem %s3, %s381
        %s383 = smul.u32 2, %s14
        %v385 = vld [vmem:[%s0] sm:$0xff]
        %v386 = vld [vmem:[%s0 + $0x8] sm:$0xf]
        %v387 = vld [vmem:[%s356] sm:$0xff]
        %v388 = vld [vmem:[%s356 + $0x8] sm:$0xff]
        %v389 = vld [vmem:[%s356 + $0x10] sm:$0xff]
        %v390 = vld [vmem:[%s356 + $0x18] sm:$0xff]
        %v391 = vld [vmem:[%s356 + $0x20] sm:$0xff]
        %v392 = vld [vmem:[%s356 + $0x28] sm:$0xff]
        %v393 = vld [vmem:[%s356 + $0x30] sm:$0xff]
        %v394 = vld [vmem:[%s356 + $0x38] sm:$0xff]
        %v395 = vld [vmem:[%s356 + $0x40] sm:$0xff]
        %v396 = vld [vmem:[%s356 + $0x48] sm:$0xff]
        %v397 = vld [vmem:[%s356 + $0x50] sm:$0xff]
        %v398 = vld [vmem:[%s356 + $0x58] sm:$0xff]
        %v399 = vld [vmem:[%s356 + $0x60] sm:$0xff]
        %v400 = vld [vmem:[%s356 + $0x68] sm:$0xff]
        %v401 = vld [vmem:[%s356 + $0x70] sm:$0xff]
        %v402 = vld [vmem:[%s356 + $0x78] sm:$0xff]
        %v403 = vld [vmem:[%s356 + $0x80] sm:$0xff]
        %v404 = vld [vmem:[%s356 + $0x88] sm:$0xff]
        %v405 = vld [vmem:[%s356 + $0x90] sm:$0xff]
        %v406 = vld [vmem:[%s356 + $0x98] sm:$0xff]
        %v407 = vld [vmem:[%s356 + $0xa0] sm:$0xff]
        %v408 = vld [vmem:[%s356 + $0xa8] sm:$0xff]
        %v409 = vld [vmem:[%s356 + $0xb0] sm:$0xff]
        %v410 = vld [vmem:[%s356 + $0xb8] sm:$0xff]
        %v411 = vld [vmem:[%s356 + $0xc0] sm:$0xff]
        %v412 = vld [vmem:[%s356 + $0xc8] sm:$0xff]
        %v413 = vld [vmem:[%s356 + $0xd0] sm:$0xff]
        %v414 = vld [vmem:[%s356 + $0xd8] sm:$0xff]
        %v415 = vld [vmem:[%s356 + $0xe0] sm:$0xff]
        %v416 = vld [vmem:[%s356 + $0xe8] sm:$0xff]
        %v417 = vld [vmem:[%s356 + $0xf0] sm:$0xff]
        %v418 = vld [vmem:[%s356 + $0xf8] sm:$0xff]
        %v419 = vld [vmem:[%s356 + $0x100] sm:$0xff]
        %v420 = vld [vmem:[%s356 + $0x108] sm:$0xff]
        %v421 = vld [vmem:[%s356 + $0x110] sm:$0xff]
        %v422 = vld [vmem:[%s356 + $0x118] sm:$0xff]
        %v423 = vld [vmem:[%s356 + $0x120] sm:$0xff]
        %v424 = vld [vmem:[%s356 + $0x128] sm:$0xff]
        %v425 = vld [vmem:[%s356 + $0x130] sm:$0xff]
        %v426 = vld [vmem:[%s356 + $0x138] sm:$0xff]
        %v427 = vld [vmem:[%s356 + $0x140] sm:$0xff]
        %v428 = vld [vmem:[%s356 + $0x148] sm:$0xff]
        %v429 = vld [vmem:[%s356 + $0x150] sm:$0xff]
        %v430 = vld [vmem:[%s356 + $0x158] sm:$0xff]
        %v431 = vld [vmem:[%s356 + $0x160] sm:$0xff]
        %v432 = vld [vmem:[%s2] sm:$0xff]
        %434 = vset.pattern.permute.xlu0 0
        %435 = vperm.xlu0 %434, %v432
        %v436 = vpop.permute.xlu0 %435
        %v440 = vunpack.c.l.b16 %v385
        %v441 = vunpack.c.h.b16 %v385
        %v442 = vunpack.c.l.b16 %v386
        %v443 = vpack.c.b16 %v440, %v440
        %v444 = vpack.c.b16 %v441, %v441
        %v445 = vpack.c.b16 %v442, %v442
        %v493 = vunpack.c.l.b16 %v387
        %v494 = vunpack.c.h.b16 %v387
        %v495 = vunpack.c.l.b16 %v388
        %v496 = vunpack.c.h.b16 %v388
        %v497 = vunpack.c.l.b16 %v389
        %v498 = vunpack.c.h.b16 %v389
        %v499 = vunpack.c.l.b16 %v390
        %v500 = vunpack.c.h.b16 %v390
        %v501 = vunpack.c.l.b16 %v391
        %v502 = vunpack.c.h.b16 %v391
        %v503 = vunpack.c.l.b16 %v392
        %v504 = vunpack.c.h.b16 %v392
        %v505 = vunpack.c.l.b16 %v393
        %v506 = vunpack.c.h.b16 %v393
        %v507 = vunpack.c.l.b16 %v394
        %v508 = vunpack.c.h.b16 %v394
        %v509 = vunpack.c.l.b16 %v395
        %v510 = vunpack.c.h.b16 %v395
        %v511 = vunpack.c.l.b16 %v396
        %v512 = vunpack.c.h.b16 %v396
        %v513 = vunpack.c.l.b16 %v397
        %v514 = vunpack.c.h.b16 %v397
        %v515 = vunpack.c.l.b16 %v398
        %v516 = vunpack.c.h.b16 %v398
        %v517 = vunpack.c.l.b16 %v399
        %v518 = vunpack.c.h.b16 %v399
        %v519 = vunpack.c.l.b16 %v400
        %v520 = vunpack.c.h.b16 %v400
        %v521 = vunpack.c.l.b16 %v401
        %v522 = vunpack.c.h.b16 %v401
        %v523 = vunpack.c.l.b16 %v402
        %v524 = vunpack.c.h.b16 %v402
        %v525 = vunpack.c.l.b16 %v403
        %v526 = vunpack.c.h.b16 %v403
        %v527 = vunpack.c.l.b16 %v404
        %v528 = vunpack.c.h.b16 %v404
        %v529 = vunpack.c.l.b16 %v405
        %v530 = vunpack.c.h.b16 %v405
        %v531 = vunpack.c.l.b16 %v406
        %v532 = vunpack.c.h.b16 %v406
        %v533 = vunpack.c.l.b16 %v407
        %v534 = vunpack.c.h.b16 %v407
        %v535 = vunpack.c.l.b16 %v408
        %v536 = vunpack.c.h.b16 %v408
        %v537 = vunpack.c.l.b16 %v409
        %v538 = vunpack.c.h.b16 %v409
        %v539 = vunpack.c.l.b16 %v410
        %v540 = vunpack.c.h.b16 %v410
        %v541 = vunpack.c.l.b16 %v411
        %v542 = vunpack.c.h.b16 %v411
        %v543 = vunpack.c.l.b16 %v412
        %v544 = vunpack.c.h.b16 %v412
        %v545 = vunpack.c.l.b16 %v413
        %v546 = vunpack.c.h.b16 %v413
        %v547 = vunpack.c.l.b16 %v414
        %v548 = vunpack.c.h.b16 %v414
        %v549 = vunpack.c.l.b16 %v415
        %v550 = vunpack.c.h.b16 %v415
        %v551 = vunpack.c.l.b16 %v416
        %v552 = vunpack.c.h.b16 %v416
        %v553 = vunpack.c.l.b16 %v417
        %v554 = vunpack.c.h.b16 %v417
        %v555 = vunpack.c.l.b16 %v418
        %v556 = vunpack.c.h.b16 %v418
        %v557 = vunpack.c.l.b16 %v419
        %v558 = vunpack.c.h.b16 %v419
        %v559 = vunpack.c.l.b16 %v420
        %v560 = vunpack.c.h.b16 %v420
        %v561 = vunpack.c.l.b16 %v421
        %v562 = vunpack.c.h.b16 %v421
        %v563 = vunpack.c.l.b16 %v422
        %v564 = vunpack.c.h.b16 %v422
        %v565 = vunpack.c.l.b16 %v423
        %v566 = vunpack.c.h.b16 %v423
        %v567 = vunpack.c.l.b16 %v424
        %v568 = vunpack.c.h.b16 %v424
        %v569 = vunpack.c.l.b16 %v425
        %v570 = vunpack.c.h.b16 %v425
        %v571 = vunpack.c.l.b16 %v426
        %v572 = vunpack.c.h.b16 %v426
        %v573 = vunpack.c.l.b16 %v427
        %v574 = vunpack.c.h.b16 %v427
        %v575 = vunpack.c.l.b16 %v428
        %v576 = vunpack.c.h.b16 %v428
        %v577 = vunpack.c.l.b16 %v429
        %v578 = vunpack.c.h.b16 %v429
        %v579 = vunpack.c.l.b16 %v430
        %v580 = vunpack.c.h.b16 %v430
        %v581 = vunpack.c.l.b16 %v431
        %v582 = vunpack.c.h.b16 %v431
        %v583 = vpack.c.b16 %v495, %v493
        %v584 = vpack.c.b16 %v496, %v494
        %v585 = vpack.c.b16 %v499, %v497
        %v586 = vpack.c.b16 %v500, %v498
        %v587 = vpack.c.b16 %v503, %v501
        %v588 = vpack.c.b16 %v504, %v502
        %v589 = vpack.c.b16 %v507, %v505
        %v590 = vpack.c.b16 %v508, %v506
        %v591 = vpack.c.b16 %v511, %v509
        %v592 = vpack.c.b16 %v512, %v510
        %v593 = vpack.c.b16 %v515, %v513
        %v594 = vpack.c.b16 %v516, %v514
        %v595 = vpack.c.b16 %v519, %v517
        %v596 = vpack.c.b16 %v520, %v518
        %v597 = vpack.c.b16 %v523, %v521
        %v598 = vpack.c.b16 %v524, %v522
        %v599 = vpack.c.b16 %v527, %v525
        %v600 = vpack.c.b16 %v528, %v526
        %v601 = vpack.c.b16 %v531, %v529
        %v602 = vpack.c.b16 %v532, %v530
        %v603 = vpack.c.b16 %v535, %v533
        %v604 = vpack.c.b16 %v536, %v534
        %v605 = vpack.c.b16 %v539, %v537
        %v606 = vpack.c.b16 %v540, %v538
        %v607 = vpack.c.b16 %v543, %v541
        %v608 = vpack.c.b16 %v544, %v542
        %v609 = vpack.c.b16 %v547, %v545
        %v610 = vpack.c.b16 %v548, %v546
        %v611 = vpack.c.b16 %v551, %v549
        %v612 = vpack.c.b16 %v552, %v550
        %v613 = vpack.c.b16 %v555, %v553
        %v614 = vpack.c.b16 %v556, %v554
        %v615 = vpack.c.b16 %v559, %v557
        %v616 = vpack.c.b16 %v560, %v558
        %v617 = vpack.c.b16 %v563, %v561
        %v618 = vpack.c.b16 %v564, %v562
        %v619 = vpack.c.b16 %v567, %v565
        %v620 = vpack.c.b16 %v568, %v566
        %v621 = vpack.c.b16 %v571, %v569
        %v622 = vpack.c.b16 %v572, %v570
        %v623 = vpack.c.b16 %v575, %v573
        %v624 = vpack.c.b16 %v576, %v574
        %v625 = vpack.c.b16 %v579, %v577
        %v626 = vpack.c.b16 %v580, %v578
        %v627 = vpack.c.b16 %v581, %v581
        %v628 = vpack.c.b16 %v582, %v582
        %vm673 = vcmask 850944
        %v675 = vsel %vm673, %v445, 0
        %vm677 = vcmask 1043456
        %v679 = vsel %vm677, %v627, 0
        %v682 = vsel %vm677, %v628, 0
        %684 = vmatprep.subr.bf16.mxu0 %v584
        %685 = vmatpush1.bf16.msra.mxu0 %v583
        %686 = vmatprep.subr.bf16.mxu0 %v586
        %687 = vmatpush1.bf16.msra.mxu0 %v585
        %688 = vmatprep.subr.bf16.mxu0 %v588
        %689 = vmatpush1.bf16.msra.mxu0 %v587
        %690 = vmatprep.subr.bf16.mxu0 %v590
        %691 = vmatpush1.bf16.msra.mxu0 %v589
        %692 = vmatprep.subr.bf16.mxu0 %v592
        %693 = vmatpush1.bf16.msra.mxu0 %v591
        %694 = vmatprep.subr.bf16.mxu0 %v594
        %695 = vmatpush1.bf16.msra.mxu0 %v593
        %696 = vmatprep.subr.bf16.mxu0 %v596
        %697 = vmatpush1.bf16.msra.mxu0 %v595
        %698 = vmatprep.subr.bf16.mxu0 %v598
        %699 = vmatpush1.bf16.msra.mxu0 %v597
        %700 = vmatprep.subr.bf16.mxu0 %v600
        %701 = vmatpush1.bf16.msra.mxu0 %v599
        %702 = vmatprep.subr.bf16.mxu0 %v602
        %703 = vmatpush1.bf16.msra.mxu0 %v601
        %704 = vmatprep.subr.bf16.mxu0 %v604
        %705 = vmatpush1.bf16.msra.mxu0 %v603
        %706 = vmatprep.subr.bf16.mxu0 %v606
        %707 = vmatpush1.bf16.msra.mxu0 %v605
        %708 = vmatprep.subr.bf16.mxu0 %v608
        %709 = vmatpush1.bf16.msra.mxu0 %v607
        %710 = vmatprep.subr.bf16.mxu0 %v610
        %711 = vmatpush1.bf16.msra.mxu0 %v609
        %712 = vmatprep.subr.bf16.mxu0 %v612
        %713 = vmatpush1.bf16.msra.mxu0 %v611
        %714 = vmatprep.subr.bf16.mxu0 %v614
        %715 = vmatpush1.bf16.msra.mxu0 %v613
        %716 = vmatprep.mubr.bf16.mxu0 %v444
        %717 = vmatmul.mubr.bf16.gmra.mrb[0].mxu0 %v443
        %v718 = vpop.f32.mrb[0].mxu0
        %v719 = vadd.f32 %v436, %v718
        %v720 = vpop.f32.mrb[0].mxu0
        %v721 = vadd.f32 %v436, %v720
        %v722 = vpop.f32.mrb[0].mxu0
        %v723 = vpop.f32.mrb[0].mxu0
        %724 = vdwg.mxu0
        %725 = vmatprep.subr.bf16.mxu0 %v616
        %726 = vmatpush1.bf16.msra.mxu0 %v615
        %727 = vmatprep.subr.bf16.mxu0 %v618
        %728 = vmatpush1.bf16.msra.mxu0 %v617
        %729 = vmatprep.subr.bf16.mxu0 %v620
        %730 = vmatpush1.bf16.msra.mxu0 %v619
        %731 = vmatprep.subr.bf16.mxu0 %v622
        %732 = vmatpush1.bf16.msra.mxu0 %v621
        %733 = vmatprep.subr.bf16.mxu0 %v624
        %734 = vmatpush1.bf16.msra.mxu0 %v623
        %735 = vmatprep.subr.bf16.mxu0 %v626
        %736 = vmatpush1.bf16.msra.mxu0 %v625
        %737 = vmatprep.subr.bf16.mxu0 %v682
        %738 = vmatpush1.bf16.msra.mxu0 %v679
        %739 = vmatprep.subr.bf16.mxu0 0
        %740 = vmatpush1.bf16.msra.mxu0 0
        %741 = vmatprep.subr.bf16.mxu0 0
        %742 = vmatpush1.bf16.msra.mxu0 0
        %743 = vmatprep.subr.bf16.mxu0 0
        %744 = vmatpush1.bf16.msra.mxu0 0
        %745 = vmatprep.subr.bf16.mxu0 0
        %746 = vmatpush1.bf16.msra.mxu0 0
        %747 = vmatprep.subr.bf16.mxu0 0
        %748 = vmatpush1.bf16.msra.mxu0 0
        %749 = vmatprep.subr.bf16.mxu0 0
        %750 = vmatpush1.bf16.msra.mxu0 0
        %751 = vmatprep.subr.bf16.mxu0 0
        %752 = vmatpush1.bf16.msra.mxu0 0
        %753 = vmatprep.subr.bf16.mxu0 0
        %754 = vmatpush1.bf16.msra.mxu0 0
        %755 = vmatprep.subr.bf16.mxu0 0
        %756 = vmatpush1.bf16.msra.mxu0 0
        %757 = vmatprep.mubr.bf16.mxu0 0
        %758 = vmatmul.mubr.bf16.gmra.mrb[0].mxu0 %v675
        %v759 = vpop.f32.mrb[0].mxu0
        %v760 = vadd.f32 %v719, %v759
        %v761 = vpop.f32.mrb[0].mxu0
        %v762 = vadd.f32 %v721, %v761
        %v763 = vpop.f32.mrb[0].mxu0
        %v764 = vpop.f32.mrb[0].mxu0
        %765 = vdwg.mxu0
        %v766 = vmax.f32 %v760, 0.0
        %v767 = vmax.f32 %v762, 0.0
        %v768 = vpack.c.bf16 %v766, %v766
        %v769 = vpack.c.bf16 %v767, %v767
        %v772 = vunpack.c.l.b16 %v768
        %v773 = vunpack.c.l.b16 %v769
        %v774 = vpack.c.b16 %v773, %v772
        %776 = vst [vmem:[%s382] sm:$0xff] %v774
        %s777 = smul.u32 2, %s14
        %p778 = scmp.lt.s32.totalorder %s777, 3
        %s779 = scalar_select %p778, %s777, 3
        %s780 = smul.addr %s779, 4
        %s781 = scalar_lea.vmem %s3, %s780
        // Predicated region
        $region71: #{resnet_forward.8} parent=65 // pred_check
          %p782 = pneg %p100
        $region72: #{resnet_forward.8} parent=65 // pred_check_branch
          %784 = sbr.rel (%p782) target = $region74
        $region73: #{resnet_forward.8} parent=65 // pred_region
          %s785 = smul.u32 2, %s14
        $region74: #{resnet_forward.8} parent=65 // pred_fallthru
          _
      $region66: #{resnet_forward.8} parent=5 // pred_fallthru
        _
      %p786 = scmp.le.s32.totalorder 2, %s9
      // Predicated region
      $region75: #{resnet_forward.8} parent=5 // pred_check
        %p787 = pneg %p786
      $region76: #{resnet_forward.8} parent=5 // pred_check_branch
        %789 = sbr.rel (%p787) target = $region78
      $region77: #{resnet_forward.8} parent=5 // pred_region
        %s790 = ssub.s32 %s9, 2
        // Predicated region
        $region79: #{resnet_forward.8} parent=77 // pred_check
          %p791 = pneg %p106
        $region80: #{resnet_forward.8} parent=77 // pred_check_branch
          %793 = sbr.rel (%p791) target = $region82
        $region81: #{resnet_forward.8} parent=77 // pred_region
          %s794 = smul.u32 2, %s15
          %p795 = scmp.lt.s32.totalorder %s794, 3
          %s796 = scalar_select %p795, %s794, 3
          %s797 = smul.addr %s796, 4
          %s798 = scalar_lea.vmem %s3, %s797
        $region82: #{resnet_forward.8} parent=77 // pred_fallthru
          _
      $region78: #{resnet_forward.8} parent=5 // pred_fallthru
        _
    $region6: #{resnet_forward.8} parent=1 // loop_footer
      %s13 = sadd.s32 1, %s9
    $region7: #{resnet_forward.8} parent=1 // loop_footer_branch
      %8 = sbr.rel target = $region3
    $region8: #{resnet_forward.8} parent=1 // loop_exit
      _

// kernel: resnet_forward.9
$region0: #{resnet_forward.9}
  #allocation0 [shape = 'u32[]', space=smem, size = 0x4, offset = 0x4, fixed_abs, tag = 'smem constant byte address 0x4 - core index']
  #allocation1 [shape = 'u32[144,128]{1,0:T(1,128)}', space=vmem, size = 0x12000, scoped, tag = 'internal scratch']
  %s0 = inlined_call_operand.vmem [shape: bf16[8,8], index: 0, kind: input, shape index: {}]
  %s1 = inlined_call_operand.vmem [shape: bf16[8,512], index: 1, kind: input, shape index: {}]
  %s2 = inlined_call_operand.vmem [shape: f32[8,1], index: 2, kind: input, shape index: {}]
  %s3 = inlined_call_operand.vmem [shape: bf16[8,512], index: 3, kind: output, shape index: {}]
  %s4 = sld [smem:[#allocation0]]
  $region45: #{resnet_forward.9} parent=0
    _
  %s6 = ssub.s32 1, %s4
  %s7 = scalar_select 0, %s6, %s4
  loop: start=0, step=1, limit=4
  $region2: #{resnet_forward.9} parent=0 // loop_pre_header
    _
  $region3: #{resnet_forward.9} parent=0 // loop_header
    %s9 = sphi 0, %s13
    %p10 = scmp.ge.s32.totalorder %s9, 4
    %s17 = sphi 0, %s17
    %s19 = sphi 0, %s17
    %s20 = sphi 0, %s19
    %s34 = sphi 0, %s20
    %s40 = sphi 0, %s42
    %s43 = sphi 0, %s40
    %s44 = sphi 0, %s43
    %s60 = sphi 0, %s44
    %s64 = sphi 0, %s64
    %s66 = sphi 0, %s64
    %s67 = sphi 0, %s66
    %s81 = sphi 0, %s67
    %s87 = sphi 0, %s89
    %s90 = sphi 0, %s87
    %s91 = sphi 0, %s90
    %s107 = sphi 0, %s91
  $region4: #{resnet_forward.9} parent=0 // loop_header_branch
    %12 = sbr.rel (%p10) target = $region8
  $region5: #{resnet_forward.9} parent=0 // loop_body
    %s14 = ssub.s32 %s9, 1
    %s15 = ssub.s32 %s9, 2
    %s16 = sadd.s32 %s9, 1
    %s18 = sadd.s32 %s17, 1
    %p21 = scmp.eq.s32.totalorder %s9, 1
    %p22 = scmp.ne.s32.totalorder %s17, %s19
    %p23 = scmp.eq.s32.totalorder %s9, 0
    %p24 = por %p22, %p23
    %p25 = scmp.ne.s32.totalorder %s17, %s19
    %p26 = scmp.eq.s32.totalorder %s14, 1
    %p27 = por %p25, %p26
    %p28 = scmp.ne.s32.totalorder %s19, %s20
    %p29 = scmp.eq.s32.totalorder %s14, 0
    %p30 = por %p28, %p29
    %p31 = scmp.ne.s32.totalorder %s19, %s20
    %p32 = scmp.eq.s32.totalorder %s15, 1
    %p33 = por %p31, %p32
    %p35 = scmp.ne.s32.totalorder %s20, %s34
    %p36 = scmp.eq.s32.totalorder %s15, 0
    %p37 = por %p35, %p36
    %s38 = ssub.s32 %s9, %s16
    %p39 = scmp.eq.s32.totalorder %s38, 0
    %s41 = sadd.s32 %s40, 1
    %s42 = scalar_select %p39, %s40, %s41
    %p45 = pneg %p39
    %p46 = scmp.eq.s32.totalorder %s9, 1
    %p47 = por %p45, %p46
    %p48 = scmp.ne.s32.totalorder %s40, %s43
    %p49 = scmp.eq.s32.totalorder %s9, 0
    %p50 = por %p48, %p49
    %p51 = scmp.ne.s32.totalorder %s40, %s43
    %p52 = scmp.eq.s32.totalorder %s14, 1
    %p53 = por %p51, %p52
    %p54 = scmp.ne.s32.totalorder %s43, %s44
    %p55 = scmp.eq.s32.totalorder %s14, 0
    %p56 = por %p54, %p55
    %p57 = scmp.ne.s32.totalorder %s43, %s44
    %p58 = scmp.eq.s32.totalorder %s15, 1
    %p59 = por %p57, %p58
    %p61 = scmp.ne.s32.totalorder %s44, %s60
    %p62 = scmp.eq.s32.totalorder %s15, 0
    %p63 = por %p61, %p62
    %s65 = sadd.s32 %s64, 1
    %p68 = scmp.eq.s32.totalorder %s9, 1
    %p69 = scmp.ne.s32.totalorder %s64, %s66
    %p70 = scmp.eq.s32.totalorder %s9, 0
    %p71 = por %p69, %p70
    %p72 = scmp.ne.s32.totalorder %s64, %s66
    %p73 = scmp.eq.s32.totalorder %s14, 1
    %p74 = por %p72, %p73
    %p75 = scmp.ne.s32.totalorder %s66, %s67
    %p76 = scmp.eq.s32.totalorder %s14, 0
    %p77 = por %p75, %p76
    %p78 = scmp.ne.s32.totalorder %s66, %s67
    %p79 = scmp.eq.s32.totalorder %s15, 1
    %p80 = por %p78, %p79
    %p82 = scmp.ne.s32.totalorder %s67, %s81
    %p83 = scmp.eq.s32.totalorder %s15, 0
    %p84 = por %p82, %p83
    %s85 = ssub.s32 %s9, %s16
    %p86 = scmp.eq.s32.totalorder %s85, 0
    %s88 = sadd.s32 %s87, 1
    %s89 = scalar_select %p86, %s87, %s88
    %p92 = pneg %p86
    %p93 = scmp.eq.s32.totalorder %s9, 1
    %p94 = por %p92, %p93
    %p95 = scmp.ne.s32.totalorder %s87, %s90
    %p96 = scmp.eq.s32.totalorder %s9, 0
    %p97 = por %p95, %p96
    %p98 = scmp.ne.s32.totalorder %s87, %s90
    %p99 = scmp.eq.s32.totalorder %s14, 1
    %p100 = por %p98, %p99
    %p101 = scmp.ne.s32.totalorder %s90, %s91
    %p102 = scmp.eq.s32.totalorder %s14, 0
    %p103 = por %p101, %p102
    %p104 = scmp.ne.s32.totalorder %s90, %s91
    %p105 = scmp.eq.s32.totalorder %s15, 1
    %p106 = por %p104, %p105
    %p108 = scmp.ne.s32.totalorder %s91, %s107
    %p109 = scmp.eq.s32.totalorder %s15, 0
    %p110 = por %p108, %p109
    %p111 = scmp.le.s32.totalorder 1, %s9
    %p112 = scmp.lt.s32.totalorder %s9, 3
    %p113 = pnand %p111, %p112
    %p114 = pneg %p113
    // Predicated region
    $region9: #{resnet_forward.9} parent=5 // pred_check
      _
    $region10: #{resnet_forward.9} parent=5 // pred_check_branch
      %116 = sbr.rel (%p113) target = $region12
    $region11: #{resnet_forward.9} parent=5 // pred_region
      %s117 = ssub.s32 %s9, 1
      // Predicated region
      $region13: #{resnet_forward.9} parent=11 // pred_check
        %p118 = pneg %p30
      $region14: #{resnet_forward.9} parent=11 // pred_check_branch
        %120 = sbr.rel (%p118) target = $region16
      $region15: #{resnet_forward.9} parent=11 // pred_region
        _
      $region16: #{resnet_forward.9} parent=11 // pred_fallthru
        _
      // Predicated region
      $region17: #{resnet_forward.9} parent=11 // pred_check
        %p121 = pneg %p77
      $region18: #{resnet_forward.9} parent=11 // pred_check_branch
        %123 = sbr.rel (%p121) target = $region20
      $region19: #{resnet_forward.9} parent=11 // pred_region
        _
      $region20: #{resnet_forward.9} parent=11 // pred_fallthru
        _
    $region12: #{resnet_forward.9} parent=5 // pred_fallthru
      _
    %p124 = scmp.lt.s32.totalorder %s9, 2
    // Predicated region
    $region21: #{resnet_forward.9} parent=5 // pred_check
      %p125 = pneg %p124
    $region22: #{resnet_forward.9} parent=5 // pred_check_branch
      %127 = sbr.rel (%p125) target = $region24
    $region23: #{resnet_forward.9} parent=5 // pred_region
      // Predicated region
      $region25: #{resnet_forward.9} parent=23 // pred_check
        %p128 = pneg %p50
      $region26: #{resnet_forward.9} parent=23 // pred_check_branch
        %130 = sbr.rel (%p128) target = $region28
      $region27: #{resnet_forward.9} parent=23 // pred_region
        %s131 = smul.u32 2, %s9
        %p132 = scmp.lt.s32.totalorder %s131, 3
        %s133 = scalar_select %p132, %s131, 3
        %s134 = smul.addr %s133, 4
        %s135 = scalar_lea.vmem %s1, %s134
        %s136 = smul.u32 2, %s9
      $region28: #{resnet_forward.9} parent=23 // pred_fallthru
        _
    $region24: #{resnet_forward.9} parent=5 // pred_fallthru
      _
    %p137 = scmp.le.s32.totalorder 1, %s9
    %p138 = scmp.lt.s32.totalorder %s9, 3
    %p139 = pnand %p137, %p138
    %p140 = pneg %p139
    // Predicated region
    $region29: #{resnet_forward.9} parent=5 // pred_check
      _
    $region30: #{resnet_forward.9} parent=5 // pred_check_branch
      %142 = sbr.rel (%p139) target = $region32
    $region31: #{resnet_forward.9} parent=5 // pred_region
      %s143 = ssub.s32 %s9, 1
      %p144 = pneg %p30
      %p145 = pneg %p27
      %s146 = smul.u32 2, %s14
      %p147 = scmp.lt.s32.totalorder %s146, 3
      %s148 = scalar_select %p147, %s146, 3
      %s149 = smul.addr %s148, 4
      %s150 = scalar_lea.vmem %s1, %s149
      %p151 = pneg %p56
      %p152 = pneg %p53
      %p153 = pneg %p77
      %p154 = pneg %p74
      %p155 = pneg %p103
      %p156 = pneg %p100
      %s157 = smul.u32 2, %s14
      %p158 = scmp.lt.s32.totalorder %s157, 3
      %s159 = scalar_select %p158, %s157, 3
      %s160 = smul.addr %s159, 4
      %s161 = scalar_lea.vmem %s3, %s160
      %s162 = smul.u32 2, %s14
      %p163 = scmp.lt.s32.totalorder %s162, 3
      %s164 = scalar_select %p163, %s162, 3
      %s165 = smul.addr %s164, 4
      %s166 = scalar_lea.vmem %s1, %s165
      %s167 = smul.u32 2, %s14
      %s168 = smul.u32 2, %s14
      %p169 = scmp.lt.s32.totalorder %s168, 3
      %s170 = scalar_select %p169, %s168, 3
      %s171 = smul.addr %s170, 4
      %s172 = scalar_lea.vmem %s3, %s171
      %s173 = smul.u32 2, %s14
      %v175 = vld [vmem:[%s0] sm:$0xf]
      %v176 = vld [vmem:[%s166] sm:$0xff]
      %v177 = vld [vmem:[%s2] sm:$0xff]
      %179 = vset.pattern.permute.xlu0 0
      %180 = vperm.xlu0 %179, %v177
      %v181 = vpop.permute.xlu0 %180
      %v184 = vunpack.c.l.b16 %v176
      %v185 = vunpack.c.h.b16 %v176
      %v186 = vpack.c.b16 %v184, %v184
      %v187 = vpack.c.b16 %v185, %v185
      %vm188 = vcmask 64512
      %v190 = vsel %vm188, %v175, 0
      %vm192 = vcmask 1043456
      %v194 = vsel %vm192, %v186, 0
      %v197 = vsel %vm192, %v187, 0
      %199 = vmatprep.subr.bf16.mxu0 %v197
      %200 = vmatpush1.bf16.msra.mxu0 %v194
      %201 = vmatprep.subr.bf16.mxu0 0
      %202 = vmatpush1.bf16.msra.mxu0 0
      %203 = vmatprep.subr.bf16.mxu0 0
      %204 = vmatpush1.bf16.msra.mxu0 0
      %205 = vmatprep.subr.bf16.mxu0 0
      %206 = vmatpush1.bf16.msra.mxu0 0
      %207 = vmatprep.subr.bf16.mxu0 0
      %208 = vmatpush1.bf16.msra.mxu0 0
      %209 = vmatprep.subr.bf16.mxu0 0
      %210 = vmatpush1.bf16.msra.mxu0 0
      %211 = vmatprep.subr.bf16.mxu0 0
      %212 = vmatpush1.bf16.msra.mxu0 0
      %213 = vmatprep.subr.bf16.mxu0 0
      %214 = vmatpush1.bf16.msra.mxu0 0
      %215 = vmatprep.subr.bf16.mxu0 0
      %216 = vmatpush1.bf16.msra.mxu0 0
      %217 = vmatprep.subr.bf16.mxu0 0
      %218 = vmatpush1.bf16.msra.mxu0 0
      %219 = vmatprep.subr.bf16.mxu0 0
      %220 = vmatpush1.bf16.msra.mxu0 0
      %221 = vmatprep.subr.bf16.mxu0 0
      %222 = vmatpush1.bf16.msra.mxu0 0
      %223 = vmatprep.subr.bf16.mxu0 0
      %224 = vmatpush1.bf16.msra.mxu0 0
      %225 = vmatprep.subr.bf16.mxu0 0
      %226 = vmatpush1.bf16.msra.mxu0 0
      %227 = vmatprep.subr.bf16.mxu0 0
      %228 = vmatpush1.bf16.msra.mxu0 0
      %229 = vmatprep.subr.bf16.mxu0 0
      %230 = vmatpush1.bf16.msra.mxu0 0
      %231 = vmatprep.mubr.bf16.mxu0 0
      %232 = vmatmul.mubr.bf16.gmra.mrb[0].mxu0 %v190
      %v233 = vpop.f32.mrb[0].mxu0
      %v234 = vadd.f32 %v181, %v233
      %v235 = vpop.f32.mrb[0].mxu0
      %v236 = vadd.f32 %v181, %v235
      %v237 = vpop.f32.mrb[0].mxu0
      %v238 = vpop.f32.mrb[0].mxu0
      %239 = vdwg.mxu0
      %v240 = vpack.c.bf16 %v234, %v234
      %v241 = vpack.c.bf16 %v236, %v236
      %v244 = vunpack.c.l.b16 %v240
      %v245 = vunpack.c.l.b16 %v241
      %v246 = vpack.c.b16 %v245, %v244
      %248 = vst [vmem:[%s172] sm:$0xff] %v246
      %s249 = smul.u32 2, %s14
      %p250 = scmp.lt.s32.totalorder %s249, 3
      %s251 = scalar_select %p250, %s249, 3
      %s252 = smul.addr %s251, 4
      %s253 = scalar_lea.vmem %s3, %s252
      // Predicated region
      $region33: #{resnet_forward.9} parent=31 // pred_check
        %p254 = pneg %p100
      $region34: #{resnet_forward.9} parent=31 // pred_check_branch
        %256 = sbr.rel (%p254) target = $region36
      $region35: #{resnet_forward.9} parent=31 // pred_region
        %s257 = smul.u32 2, %s14
      $region36: #{resnet_forward.9} parent=31 // pred_fallthru
        _
    $region32: #{resnet_forward.9} parent=5 // pred_fallthru
      _
    %p258 = scmp.le.s32.totalorder 2, %s9
    // Predicated region
    $region37: #{resnet_forward.9} parent=5 // pred_check
      %p259 = pneg %p258
    $region38: #{resnet_forward.9} parent=5 // pred_check_branch
      %261 = sbr.rel (%p259) target = $region40
    $region39: #{resnet_forward.9} parent=5 // pred_region
      %s262 = ssub.s32 %s9, 2
      // Predicated region
      $region41: #{resnet_forward.9} parent=39 // pred_check
        %p263 = pneg %p106
      $region42: #{resnet_forward.9} parent=39 // pred_check_branch
        %265 = sbr.rel (%p263) target = $region44
      $region43: #{resnet_forward.9} parent=39 // pred_region
        %s266 = smul.u32 2, %s15
        %p267 = scmp.lt.s32.totalorder %s266, 3
        %s268 = scalar_select %p267, %s266, 3
        %s269 = smul.addr %s268, 4
        %s270 = scalar_lea.vmem %s3, %s269
      $region44: #{resnet_forward.9} parent=39 // pred_fallthru
        _
    $region40: #{resnet_forward.9} parent=5 // pred_fallthru
      _
  $region6: #{resnet_forward.9} parent=0 // loop_footer
    %s13 = sadd.s32 1, %s9
  $region7: #{resnet_forward.9} parent=0 // loop_footer_branch
    %8 = sbr.rel target = $region3
  $region8: #{resnet_forward.9} parent=0 // loop_exit
    _

// kernel: resnet_forward.10
$region0: #{resnet_forward.10}
  #allocation0 [shape = 'u32[]', space=smem, size = 0x4, offset = 0x4, fixed_abs, tag = 'smem constant byte address 0x4 - core index']
  #allocation1 [shape = 'u32[144,128]{1,0:T(1,128)}', space=vmem, size = 0x12000, scoped, tag = 'internal scratch']
  %s0 = inlined_call_operand.vmem [shape: bf16[8,360], index: 0, kind: input, shape index: {}]
  %s1 = inlined_call_operand.vmem [shape: bf16[360,512], index: 1, kind: input, shape index: {}]
  %s2 = inlined_call_operand.vmem [shape: f32[8,1], index: 2, kind: input, shape index: {}]
  %s3 = inlined_call_operand.vmem [shape: bf16[8,512], index: 3, kind: input, shape index: {}]
  %s4 = inlined_call_operand.vmem [shape: bf16[8,512], index: 4, kind: output, shape index: {}]
  %s5 = sld [smem:[#allocation0]]
  $region87: #{resnet_forward.10} parent=0
    _
  %s7 = ssub.s32 1, %s5
  %s8 = scalar_select 0, %s7, %s5
  $region1: #{resnet_forward.10} parent=0
    #allocation2 [shape = 'u8[368640]{0}', space=vmem, size = 0x5a000, scoped, tag = 'input window, operand 1']
    loop: start=0, step=1, limit=4
    $region2: #{resnet_forward.10} parent=1 // loop_pre_header
      _
    $region3: #{resnet_forward.10} parent=1 // loop_header
      %s10 = sphi 0, %s14
      %p11 = scmp.ge.s32.totalorder %s10, 4
      %s18 = sphi 0, %s18
      %s20 = sphi 0, %s18
      %s21 = sphi 0, %s20
      %s35 = sphi 0, %s21
      %s41 = sphi 0, %s43
      %s44 = sphi 0, %s41
      %s45 = sphi 0, %s44
      %s61 = sphi 0, %s45
      %s65 = sphi 0, %s65
      %s67 = sphi 0, %s65
      %s68 = sphi 0, %s67
      %s82 = sphi 0, %s68
      %s88 = sphi 0, %s90
      %s91 = sphi 0, %s88
      %s92 = sphi 0, %s91
      %s108 = sphi 0, %s92
      %s114 = sphi 0, %s116
      %s117 = sphi 0, %s114
      %s118 = sphi 0, %s117
      %s134 = sphi 0, %s118
    $region4: #{resnet_forward.10} parent=1 // loop_header_branch
      %13 = sbr.rel (%p11) target = $region8
    $region5: #{resnet_forward.10} parent=1 // loop_body
      %s15 = ssub.s32 %s10, 1
      %s16 = ssub.s32 %s10, 2
      %s17 = sadd.s32 %s10, 1
      %s19 = sadd.s32 %s18, 1
      %p22 = scmp.eq.s32.totalorder %s10, 1
      %p23 = scmp.ne.s32.totalorder %s18, %s20
      %p24 = scmp.eq.s32.totalorder %s10, 0
      %p25 = por %p23, %p24
      %p26 = scmp.ne.s32.totalorder %s18, %s20
      %p27 = scmp.eq.s32.totalorder %s15, 1
      %p28 = por %p26, %p27
      %p29 = scmp.ne.s32.totalorder %s20, %s21
      %p30 = scmp.eq.s32.totalorder %s15, 0
      %p31 = por %p29, %p30
      %p32 = scmp.ne.s32.totalorder %s20, %s21
      %p33 = scmp.eq.s32.totalorder %s16, 1
      %p34 = por %p32, %p33
      %p36 = scmp.ne.s32.totalorder %s21, %s35
      %p37 = scmp.eq.s32.totalorder %s16, 0
      %p38 = por %p36, %p37
      %s39 = ssub.s32 %s10, %s17
      %p40 = scmp.eq.s32.totalorder %s39, 0
      %s42 = sadd.s32 %s41, 1
      %s43 = scalar_select %p40, %s41, %s42
      %p46 = pneg %p40
      %p47 = scmp.eq.s32.totalorder %s10, 1
      %p48 = por %p46, %p47
      %p49 = scmp.ne.s32.totalorder %s41, %s44
      %p50 = scmp.eq.s32.totalorder %s10, 0
      %p51 = por %p49, %p50
      %p52 = scmp.ne.s32.totalorder %s41, %s44
      %p53 = scmp.eq.s32.totalorder %s15, 1
      %p54 = por %p52, %p53
      %p55 = scmp.ne.s32.totalorder %s44, %s45
      %p56 = scmp.eq.s32.totalorder %s15, 0
      %p57 = por %p55, %p56
      %p58 = scmp.ne.s32.totalorder %s44, %s45
      %p59 = scmp.eq.s32.totalorder %s16, 1
      %p60 = por %p58, %p59
      %p62 = scmp.ne.s32.totalorder %s45, %s61
      %p63 = scmp.eq.s32.totalorder %s16, 0
      %p64 = por %p62, %p63
      %s66 = sadd.s32 %s65, 1
      %p69 = scmp.eq.s32.totalorder %s10, 1
      %p70 = scmp.ne.s32.totalorder %s65, %s67
      %p71 = scmp.eq.s32.totalorder %s10, 0
      %p72 = por %p70, %p71
      %p73 = scmp.ne.s32.totalorder %s65, %s67
      %p74 = scmp.eq.s32.totalorder %s15, 1
      %p75 = por %p73, %p74
      %p76 = scmp.ne.s32.totalorder %s67, %s68
      %p77 = scmp.eq.s32.totalorder %s15, 0
      %p78 = por %p76, %p77
      %p79 = scmp.ne.s32.totalorder %s67, %s68
      %p80 = scmp.eq.s32.totalorder %s16, 1
      %p81 = por %p79, %p80
      %p83 = scmp.ne.s32.totalorder %s68, %s82
      %p84 = scmp.eq.s32.totalorder %s16, 0
      %p85 = por %p83, %p84
      %s86 = ssub.s32 %s10, %s17
      %p87 = scmp.eq.s32.totalorder %s86, 0
      %s89 = sadd.s32 %s88, 1
      %s90 = scalar_select %p87, %s88, %s89
      %p93 = pneg %p87
      %p94 = scmp.eq.s32.totalorder %s10, 1
      %p95 = por %p93, %p94
      %p96 = scmp.ne.s32.totalorder %s88, %s91
      %p97 = scmp.eq.s32.totalorder %s10, 0
      %p98 = por %p96, %p97
      %p99 = scmp.ne.s32.totalorder %s88, %s91
      %p100 = scmp.eq.s32.totalorder %s15, 1
      %p101 = por %p99, %p100
      %p102 = scmp.ne.s32.totalorder %s91, %s92
      %p103 = scmp.eq.s32.totalorder %s15, 0
      %p104 = por %p102, %p103
      %p105 = scmp.ne.s32.totalorder %s91, %s92
      %p106 = scmp.eq.s32.totalorder %s16, 1
      %p107 = por %p105, %p106
      %p109 = scmp.ne.s32.totalorder %s92, %s108
      %p110 = scmp.eq.s32.totalorder %s16, 0
      %p111 = por %p109, %p110
      %s112 = ssub.s32 %s10, %s17
      %p113 = scmp.eq.s32.totalorder %s112, 0
      %s115 = sadd.s32 %s114, 1
      %s116 = scalar_select %p113, %s114, %s115
      %p119 = pneg %p113
      %p120 = scmp.eq.s32.totalorder %s10, 1
      %p121 = por %p119, %p120
      %p122 = scmp.ne.s32.totalorder %s114, %s117
      %p123 = scmp.eq.s32.totalorder %s10, 0
      %p124 = por %p122, %p123
      %p125 = scmp.ne.s32.totalorder %s114, %s117
      %p126 = scmp.eq.s32.totalorder %s15, 1
      %p127 = por %p125, %p126
      %p128 = scmp.ne.s32.totalorder %s117, %s118
      %p129 = scmp.eq.s32.totalorder %s15, 0
      %p130 = por %p128, %p129
      %p131 = scmp.ne.s32.totalorder %s117, %s118
      %p132 = scmp.eq.s32.totalorder %s16, 1
      %p133 = por %p131, %p132
      %p135 = scmp.ne.s32.totalorder %s118, %s134
      %p136 = scmp.eq.s32.totalorder %s16, 0
      %p137 = por %p135, %p136
      %p138 = scmp.le.s32.totalorder 1, %s10
      %p139 = scmp.lt.s32.totalorder %s10, 3
      %p140 = pnand %p138, %p139
      %p141 = pneg %p140
      // Predicated region
      $region9: #{resnet_forward.10} parent=5 // pred_check
        _
      $region10: #{resnet_forward.10} parent=5 // pred_check_branch
        %143 = sbr.rel (%p140) target = $region12
      $region11: #{resnet_forward.10} parent=5 // pred_region
        %s144 = ssub.s32 %s10, 1
        // Predicated region
        $region13: #{resnet_forward.10} parent=11 // pred_check
          %p145 = pneg %p31
        $region14: #{resnet_forward.10} parent=11 // pred_check_branch
          %147 = sbr.rel (%p145) target = $region16
        $region15: #{resnet_forward.10} parent=11 // pred_region
          _
        $region16: #{resnet_forward.10} parent=11 // pred_fallthru
          _
        // Predicated region
        $region17: #{resnet_forward.10} parent=11 // pred_check
          %p148 = pneg %p78
        $region18: #{resnet_forward.10} parent=11 // pred_check_branch
          %150 = sbr.rel (%p148) target = $region20
        $region19: #{resnet_forward.10} parent=11 // pred_region
          _
        $region20: #{resnet_forward.10} parent=11 // pred_fallthru
          _
      $region12: #{resnet_forward.10} parent=5 // pred_fallthru
        _
      %p151 = scmp.lt.s32.totalorder %s10, 2
      // Predicated region
      $region21: #{resnet_forward.10} parent=5 // pred_check
        %p152 = pneg %p151
      $region22: #{resnet_forward.10} parent=5 // pred_check_branch
        %154 = sbr.rel (%p152) target = $region24
      $region23: #{resnet_forward.10} parent=5 // pred_region
        // Predicated region
        $region25: #{resnet_forward.10} parent=23 // pred_check
          %p155 = pneg %p51
        $region26: #{resnet_forward.10} parent=23 // pred_check_branch
          %157 = sbr.rel (%p155) target = $region28
        $region27: #{resnet_forward.10} parent=23 // pred_region
          %s158 = sand.u32 %s41, 1
          %s159 = sand.u32 %s41, 1
          %s160 = smul.addr %s159, 360
          %s161 = scalar_lea.vmem [#allocation2], %s160
          %s162 = smul.u32 2, %s10
          %s163 = smul.addr %s162, 4
          %s164 = scalar_lea.vmem %s1, %s163
          // Predicated region
          $region29: #{resnet_forward.10} parent=27 // pred_check
            _
          $region30: #{resnet_forward.10} parent=27 // pred_check_branch
            %166 = sbr.rel (0) target = $region32
          $region31: #{resnet_forward.10} parent=27 // pred_region
            // Predicated region
            $region33: #{resnet_forward.10} parent=31 // pred_check
              _
            $region34: #{resnet_forward.10} parent=31 // pred_check_branch
              %168 = sbr.rel (0) target = $region36
            $region35: #{resnet_forward.10} parent=31 // pred_region
              // Predicated region
              $region48: #{resnet_forward.10} parent=35 // pred_check
                _
              $region49: #{resnet_forward.10} parent=35 // pred_check_branch
                %271 = sbr.rel (0) target = $region51
              $region50: #{resnet_forward.10} parent=35 // pred_region
                loop: start=0, step=1, limit=1
                $region52: #{resnet_forward.10} parent=50 // loop_pre_header
                  _
                $region53: #{resnet_forward.10} parent=50 // loop_header
                  %s273 = sphi 0, %s277
                  %p274 = scmp.ge.s32.totalorder %s273, 1
                  %s278 = sphi %s164, %s164
                  %s279 = sphi %s161, %s161
                $region54: #{resnet_forward.10} parent=50 // loop_header_branch
                  %276 = sbr.rel (%p274) target = $region58
                $region55: #{resnet_forward.10} parent=50 // loop_body
                  %v280 = vld [vmem:[%s278] sm:$0xff]
                  %281 = vst [vmem:[%s279] sm:$0xff] %v280
                  %v282 = vld [vmem:[%s278 + $0x10] sm:$0xff]
                  %283 = vst [vmem:[%s279 + $0x8] sm:$0xff] %v282
                  %v284 = vld [vmem:[%s278 + $0x20] sm:$0xff]
                  %285 = vst [vmem:[%s279 + $0x10] sm:$0xff] %v284
                  %v286 = vld [vmem:[%s278 + $0x30] sm:$0xff]
                  %287 = vst [vmem:[%s279 + $0x18] sm:$0xff] %v286
                  %v288 = vld [vmem:[%s278 + $0x40] sm:$0xff]
                  %289 = vst [vmem:[%s279 + $0x20] sm:$0xff] %v288
                  %v290 = vld [vmem:[%s278 + $0x50] sm:$0xff]
                  %291 = vst [vmem:[%s279 + $0x28] sm:$0xff] %v290
                  %v292 = vld [vmem:[%s278 + $0x60] sm:$0xff]
                  %293 = vst [vmem:[%s279 + $0x30] sm:$0xff] %v292
                  %v294 = vld [vmem:[%s278 + $0x70] sm:$0xff]
                  %295 = vst [vmem:[%s279 + $0x38] sm:$0xff] %v294
                  %v296 = vld [vmem:[%s278 + $0x80] sm:$0xff]
                  %297 = vst [vmem:[%s279 + $0x40] sm:$0xff] %v296
                  %v298 = vld [vmem:[%s278 + $0x90] sm:$0xff]
                  %299 = vst [vmem:[%s279 + $0x48] sm:$0xff] %v298
                  %v300 = vld [vmem:[%s278 + $0xa0] sm:$0xff]
                  %301 = vst [vmem:[%s279 + $0x50] sm:$0xff] %v300
                  %v302 = vld [vmem:[%s278 + $0xb0] sm:$0xff]
                  %303 = vst [vmem:[%s279 + $0x58] sm:$0xff] %v302
                  %v304 = vld [vmem:[%s278 + $0xc0] sm:$0xff]
                  %305 = vst [vmem:[%s279 + $0x60] sm:$0xff] %v304
                  %v306 = vld [vmem:[%s278 + $0xd0] sm:$0xff]
                  %307 = vst [vmem:[%s279 + $0x68] sm:$0xff] %v306
                  %v308 = vld [vmem:[%s278 + $0xe0] sm:$0xff]
                  %309 = vst [vmem:[%s279 + $0x70] sm:$0xff] %v308
                  %v310 = vld [vmem:[%s278 + $0xf0] sm:$0xff]
                  %311 = vst [vmem:[%s279 + $0x78] sm:$0xff] %v310
                  %v312 = vld [vmem:[%s278 + $0x100] sm:$0xff]
                  %313 = vst [vmem:[%s279 + $0x80] sm:$0xff] %v312
                  %v314 = vld [vmem:[%s278 + $0x110] sm:$0xff]
                  %315 = vst [vmem:[%s279 + $0x88] sm:$0xff] %v314
                  %v316 = vld [vmem:[%s278 + $0x120] sm:$0xff]
                  %317 = vst [vmem:[%s279 + $0x90] sm:$0xff] %v316
                  %v318 = vld [vmem:[%s278 + $0x130] sm:$0xff]
                  %319 = vst [vmem:[%s279 + $0x98] sm:$0xff] %v318
                  %v320 = vld [vmem:[%s278 + $0x140] sm:$0xff]
                  %321 = vst [vmem:[%s279 + $0xa0] sm:$0xff] %v320
                  %v322 = vld [vmem:[%s278 + $0x150] sm:$0xff]
                  %323 = vst [vmem:[%s279 + $0xa8] sm:$0xff] %v322
                  %v324 = vld [vmem:[%s278 + $0x160] sm:$0xff]
                  %325 = vst [vmem:[%s279 + $0xb0] sm:$0xff] %v324
                  %v326 = vld [vmem:[%s278 + $0x170] sm:$0xff]
                  %327 = vst [vmem:[%s279 + $0xb8] sm:$0xff] %v326
                  %v328 = vld [vmem:[%s278 + $0x180] sm:$0xff]
                  %329 = vst [vmem:[%s279 + $0xc0] sm:$0xff] %v328
                  %v330 = vld [vmem:[%s278 + $0x190] sm:$0xff]
                  %331 = vst [vmem:[%s279 + $0xc8] sm:$0xff] %v330
                  %v332 = vld [vmem:[%s278 + $0x1a0] sm:$0xff]
                  %333 = vst [vmem:[%s279 + $0xd0] sm:$0xff] %v332
                  %v334 = vld [vmem:[%s278 + $0x1b0] sm:$0xff]
                  %335 = vst [vmem:[%s279 + $0xd8] sm:$0xff] %v334
                  %v336 = vld [vmem:[%s278 + $0x1c0] sm:$0xff]
                  %337 = vst [vmem:[%s279 + $0xe0] sm:$0xff] %v336
                  %v338 = vld [vmem:[%s278 + $0x1d0] sm:$0xff]
                  %339 = vst [vmem:[%s279 + $0xe8] sm:$0xff] %v338
                  %v340 = vld [vmem:[%s278 + $0x1e0] sm:$0xff]
                  %341 = vst [vmem:[%s279 + $0xf0] sm:$0xff] %v340
                  %v342 = vld [vmem:[%s278 + $0x1f0] sm:$0xff]
                  %343 = vst [vmem:[%s279 + $0xf8] sm:$0xff] %v342
                  %v344 = vld [vmem:[%s278 + $0x200] sm:$0xff]
                  %345 = vst [vmem:[%s279 + $0x100] sm:$0xff] %v344
                  %v346 = vld [vmem:[%s278 + $0x210] sm:$0xff]
                  %347 = vst [vmem:[%s279 + $0x108] sm:$0xff] %v346
                  %v348 = vld [vmem:[%s278 + $0x220] sm:$0xff]
                  %349 = vst [vmem:[%s279 + $0x110] sm:$0xff] %v348
                  %v350 = vld [vmem:[%s278 + $0x230] sm:$0xff]
                  %351 = vst [vmem:[%s279 + $0x118] sm:$0xff] %v350
                  %v352 = vld [vmem:[%s278 + $0x240] sm:$0xff]
                  %353 = vst [vmem:[%s279 + $0x120] sm:$0xff] %v352
                  %v354 = vld [vmem:[%s278 + $0x250] sm:$0xff]
                  %355 = vst [vmem:[%s279 + $0x128] sm:$0xff] %v354
                  %v356 = vld [vmem:[%s278 + $0x260] sm:$0xff]
                  %357 = vst [vmem:[%s279 + $0x130] sm:$0xff] %v356
                  %v358 = vld [vmem:[%s278 + $0x270] sm:$0xff]
                  %359 = vst [vmem:[%s279 + $0x138] sm:$0xff] %v358
                  %v360 = vld [vmem:[%s278 + $0x280] sm:$0xff]
                  %361 = vst [vmem:[%s279 + $0x140] sm:$0xff] %v360
                  %v362 = vld [vmem:[%s278 + $0x290] sm:$0xff]
                  %363 = vst [vmem:[%s279 + $0x148] sm:$0xff] %v362
                  %v364 = vld [vmem:[%s278 + $0x2a0] sm:$0xff]
                  %365 = vst [vmem:[%s279 + $0x150] sm:$0xff] %v364
                  %v366 = vld [vmem:[%s278 + $0x2b0] sm:$0xff]
                  %367 = vst [vmem:[%s279 + $0x158] sm:$0xff] %v366
                  %v368 = vld [vmem:[%s278 + $0x2c0] sm:$0xff]
                  %369 = vst [vmem:[%s279 + $0x160] sm:$0xff] %v368
                $region56: #{resnet_forward.10} parent=50 // loop_footer
                  %s277 = sadd.s32 1, %s273
                $region57: #{resnet_forward.10} parent=50 // loop_footer_branch
                  %272 = sbr.rel target = $region53
                $region58: #{resnet_forward.10} parent=50 // loop_exit
                  _
              $region51: #{resnet_forward.10} parent=35 // pred_fallthru
                _
              // Predicated region
              $region59: #{resnet_forward.10} parent=35 // pred_check
                _
              $region60: #{resnet_forward.10} parent=35 // pred_check_branch
                %371 = sbr.rel target = $region62
              $region61: #{resnet_forward.10} parent=35 // pred_region
                _
              $region62: #{resnet_forward.10} parent=35 // pred_fallthru
                _
            $region36: #{resnet_forward.10} parent=31 // pred_fallthru
              _
            // Predicated region
            $region37: #{resnet_forward.10} parent=31 // pred_check
              _
            $region38: #{resnet_forward.10} parent=31 // pred_check_branch
              %170 = sbr.rel target = $region40
            $region39: #{resnet_forward.10} parent=31 // pred_region
              loop: start=0, step=1, limit=1
              $region41: #{resnet_forward.10} parent=39 // loop_pre_header
                _
              $region42: #{resnet_forward.10} parent=39 // loop_header
                %s173 = sphi 0, %s177
                %p174 = scmp.ge.s32.totalorder %s173, 1
                %s178 = sphi %s164, %s164
                %s179 = sphi %s161, %s161
              $region43: #{resnet_forward.10} parent=39 // loop_header_branch
                %176 = sbr.rel (%p174) target = $region47
              $region44: #{resnet_forward.10} parent=39 // loop_body
                %v180 = vld [vmem:[%s178] sm:$0xff]
                %181 = vst [vmem:[%s179] sm:$0xff] %v180
                %v182 = vld [vmem:[%s178 + $0x10] sm:$0xff]
                %183 = vst [vmem:[%s179 + $0x8] sm:$0xff] %v182
                %v184 = vld [vmem:[%s178 + $0x20] sm:$0xff]
                %185 = vst [vmem:[%s179 + $0x10] sm:$0xff] %v184
                %v186 = vld [vmem:[%s178 + $0x30] sm:$0xff]
                %187 = vst [vmem:[%s179 + $0x18] sm:$0xff] %v186
                %v188 = vld [vmem:[%s178 + $0x40] sm:$0xff]
                %189 = vst [vmem:[%s179 + $0x20] sm:$0xff] %v188
                %v190 = vld [vmem:[%s178 + $0x50] sm:$0xff]
                %191 = vst [vmem:[%s179 + $0x28] sm:$0xff] %v190
                %v192 = vld [vmem:[%s178 + $0x60] sm:$0xff]
                %193 = vst [vmem:[%s179 + $0x30] sm:$0xff] %v192
                %v194 = vld [vmem:[%s178 + $0x70] sm:$0xff]
                %195 = vst [vmem:[%s179 + $0x38] sm:$0xff] %v194
                %v196 = vld [vmem:[%s178 + $0x80] sm:$0xff]
                %197 = vst [vmem:[%s179 + $0x40] sm:$0xff] %v196
                %v198 = vld [vmem:[%s178 + $0x90] sm:$0xff]
                %199 = vst [vmem:[%s179 + $0x48] sm:$0xff] %v198
                %v200 = vld [vmem:[%s178 + $0xa0] sm:$0xff]
                %201 = vst [vmem:[%s179 + $0x50] sm:$0xff] %v200
                %v202 = vld [vmem:[%s178 + $0xb0] sm:$0xff]
                %203 = vst [vmem:[%s179 + $0x58] sm:$0xff] %v202
                %v204 = vld [vmem:[%s178 + $0xc0] sm:$0xff]
                %205 = vst [vmem:[%s179 + $0x60] sm:$0xff] %v204
                %v206 = vld [vmem:[%s178 + $0xd0] sm:$0xff]
                %207 = vst [vmem:[%s179 + $0x68] sm:$0xff] %v206
                %v208 = vld [vmem:[%s178 + $0xe0] sm:$0xff]
                %209 = vst [vmem:[%s179 + $0x70] sm:$0xff] %v208
                %v210 = vld [vmem:[%s178 + $0xf0] sm:$0xff]
                %211 = vst [vmem:[%s179 + $0x78] sm:$0xff] %v210
                %v212 = vld [vmem:[%s178 + $0x100] sm:$0xff]
                %213 = vst [vmem:[%s179 + $0x80] sm:$0xff] %v212
                %v214 = vld [vmem:[%s178 + $0x110] sm:$0xff]
                %215 = vst [vmem:[%s179 + $0x88] sm:$0xff] %v214
                %v216 = vld [vmem:[%s178 + $0x120] sm:$0xff]
                %217 = vst [vmem:[%s179 + $0x90] sm:$0xff] %v216
                %v218 = vld [vmem:[%s178 + $0x130] sm:$0xff]
                %219 = vst [vmem:[%s179 + $0x98] sm:$0xff] %v218
                %v220 = vld [vmem:[%s178 + $0x140] sm:$0xff]
                %221 = vst [vmem:[%s179 + $0xa0] sm:$0xff] %v220
                %v222 = vld [vmem:[%s178 + $0x150] sm:$0xff]
                %223 = vst [vmem:[%s179 + $0xa8] sm:$0xff] %v222
                %v224 = vld [vmem:[%s178 + $0x160] sm:$0xff]
                %225 = vst [vmem:[%s179 + $0xb0] sm:$0xff] %v224
                %v226 = vld [vmem:[%s178 + $0x170] sm:$0xff]
                %227 = vst [vmem:[%s179 + $0xb8] sm:$0xff] %v226
                %v228 = vld [vmem:[%s178 + $0x180] sm:$0xff]
                %229 = vst [vmem:[%s179 + $0xc0] sm:$0xff] %v228
                %v230 = vld [vmem:[%s178 + $0x190] sm:$0xff]
                %231 = vst [vmem:[%s179 + $0xc8] sm:$0xff] %v230
                %v232 = vld [vmem:[%s178 + $0x1a0] sm:$0xff]
                %233 = vst [vmem:[%s179 + $0xd0] sm:$0xff] %v232
                %v234 = vld [vmem:[%s178 + $0x1b0] sm:$0xff]
                %235 = vst [vmem:[%s179 + $0xd8] sm:$0xff] %v234
                %v236 = vld [vmem:[%s178 + $0x1c0] sm:$0xff]
                %237 = vst [vmem:[%s179 + $0xe0] sm:$0xff] %v236
                %v238 = vld [vmem:[%s178 + $0x1d0] sm:$0xff]
                %239 = vst [vmem:[%s179 + $0xe8] sm:$0xff] %v238
                %v240 = vld [vmem:[%s178 + $0x1e0] sm:$0xff]
                %241 = vst [vmem:[%s179 + $0xf0] sm:$0xff] %v240
                %v242 = vld [vmem:[%s178 + $0x1f0] sm:$0xff]
                %243 = vst [vmem:[%s179 + $0xf8] sm:$0xff] %v242
                %v244 = vld [vmem:[%s178 + $0x200] sm:$0xff]
                %245 = vst [vmem:[%s179 + $0x100] sm:$0xff] %v244
                %v246 = vld [vmem:[%s178 + $0x210] sm:$0xff]
                %247 = vst [vmem:[%s179 + $0x108] sm:$0xff] %v246
                %v248 = vld [vmem:[%s178 + $0x220] sm:$0xff]
                %249 = vst [vmem:[%s179 + $0x110] sm:$0xff] %v248
                %v250 = vld [vmem:[%s178 + $0x230] sm:$0xff]
                %251 = vst [vmem:[%s179 + $0x118] sm:$0xff] %v250
                %v252 = vld [vmem:[%s178 + $0x240] sm:$0xff]
                %253 = vst [vmem:[%s179 + $0x120] sm:$0xff] %v252
                %v254 = vld [vmem:[%s178 + $0x250] sm:$0xff]
                %255 = vst [vmem:[%s179 + $0x128] sm:$0xff] %v254
                %v256 = vld [vmem:[%s178 + $0x260] sm:$0xff]
                %257 = vst [vmem:[%s179 + $0x130] sm:$0xff] %v256
                %v258 = vld [vmem:[%s178 + $0x270] sm:$0xff]
                %259 = vst [vmem:[%s179 + $0x138] sm:$0xff] %v258
                %v260 = vld [vmem:[%s178 + $0x280] sm:$0xff]
                %261 = vst [vmem:[%s179 + $0x140] sm:$0xff] %v260
                %v262 = vld [vmem:[%s178 + $0x290] sm:$0xff]
                %263 = vst [vmem:[%s179 + $0x148] sm:$0xff] %v262
                %v264 = vld [vmem:[%s178 + $0x2a0] sm:$0xff]
                %265 = vst [vmem:[%s179 + $0x150] sm:$0xff] %v264
                %v266 = vld [vmem:[%s178 + $0x2b0] sm:$0xff]
                %267 = vst [vmem:[%s179 + $0x158] sm:$0xff] %v266
                %v268 = vld [vmem:[%s178 + $0x2c0] sm:$0xff]
                %269 = vst [vmem:[%s179 + $0x160] sm:$0xff] %v268
              $region45: #{resnet_forward.10} parent=39 // loop_footer
                %s177 = sadd.s32 1, %s173
              $region46: #{resnet_forward.10} parent=39 // loop_footer_branch
                %172 = sbr.rel target = $region42
              $region47: #{resnet_forward.10} parent=39 // loop_exit
                _
            $region40: #{resnet_forward.10} parent=31 // pred_fallthru
              _
          $region32: #{resnet_forward.10} parent=27 // pred_fallthru
            _
          %372 = vnop
        $region28: #{resnet_forward.10} parent=23 // pred_fallthru
          _
        // Predicated region
        $region63: #{resnet_forward.10} parent=23 // pred_check
          %p373 = pneg %p98
        $region64: #{resnet_forward.10} parent=23 // pred_check_branch
          %375 = sbr.rel (%p373) target = $region66
        $region65: #{resnet_forward.10} parent=23 // pred_region
          %s376 = smul.u32 2, %s10
          %p377 = scmp.lt.s32.totalorder %s376, 3
          %s378 = scalar_select %p377, %s376, 3
          %s379 = smul.addr %s378, 4
          %s380 = scalar_lea.vmem %s3, %s379
          %s381 = smul.u32 2, %s10
        $region66: #{resnet_forward.10} parent=23 // pred_fallthru
          _
      $region24: #{resnet_forward.10} parent=5 // pred_fallthru
        _
      %p382 = scmp.le.s32.totalorder 1, %s10
      %p383 = scmp.lt.s32.totalorder %s10, 3
      %p384 = pnand %p382, %p383
      %p385 = pneg %p384
      // Predicated region
      $region67: #{resnet_forward.10} parent=5 // pred_check
        _
      $region68: #{resnet_forward.10} parent=5 // pred_check_branch
        %387 = sbr.rel (%p384) target = $region70
      $region69: #{resnet_forward.10} parent=5 // pred_region
        %s388 = ssub.s32 %s10, 1
        %s389 = sand.u32 %s44, 1
        %s390 = sand.u32 %s44, 1
        %s391 = smul.addr %s390, 360
        %s392 = scalar_lea.vmem [#allocation2], %s391
        // Predicated region
        $region71: #{resnet_forward.10} parent=69 // pred_check
          %p393 = pneg %p57
        $region72: #{resnet_forward.10} parent=69 // pred_check_branch
          %395 = sbr.rel (%p393) target = $region74
        $region73: #{resnet_forward.10} parent=69 // pred_region
          _
        $region74: #{resnet_forward.10} parent=69 // pred_fallthru
          _
        %p396 = pneg %p31
        %p397 = pneg %p28
        %s398 = sand.u32 %s44, 1
        %s399 = sand.u32 %s44, 1
        %s400 = smul.addr %s399, 360
        %s401 = scalar_lea.vmem [#allocation2], %s400
        %p402 = pneg %p57
        %p403 = pneg %p54
        %p404 = pneg %p78
        %p405 = pneg %p75
        %s406 = smul.u32 2, %s15
        %p407 = scmp.lt.s32.totalorder %s406, 3
        %s408 = scalar_select %p407, %s406, 3
        %s409 = smul.addr %s408, 4
        %s410 = scalar_lea.vmem %s3, %s409
        %p411 = pneg %p104
        %p412 = pneg %p101
        %p413 = pneg %p130
        %p414 = pneg %p127
        %s415 = smul.u32 2, %s15
        %p416 = scmp.lt.s32.totalorder %s415, 3
        %s417 = scalar_select %p416, %s415, 3
        %s418 = smul.addr %s417, 4
        %s419 = scalar_lea.vmem %s4, %s418
        %s420 = smul.u32 2, %s15
        %s421 = smul.u32 2, %s15
        %p422 = scmp.lt.s32.totalorder %s421, 3
        %s423 = scalar_select %p422, %s421, 3
        %s424 = smul.addr %s423, 4
        %s425 = scalar_lea.vmem %s3, %s424
        %s426 = smul.u32 2, %s15
        %s427 = smul.u32 2, %s15
        %p428 = scmp.lt.s32.totalorder %s427, 3
        %s429 = scalar_select %p428, %s427, 3
        %s430 = smul.addr %s429, 4
        %s431 = scalar_lea.vmem %s4, %s430
        %s432 = smul.u32 2, %s15
        %v434 = vld [vmem:[%s0] sm:$0xff]
        %v435 = vld [vmem:[%s0 + $0x8] sm:$0xf]
        %v436 = vld [vmem:[%s392] sm:$0xff]
        %v437 = vld [vmem:[%s392 + $0x8] sm:$0xff]
        %v438 = vld [vmem:[%s392 + $0x10] sm:$0xff]
        %v439 = vld [vmem:[%s392 + $0x18] sm:$0xff]
        %v440 = vld [vmem:[%s392 + $0x20] sm:$0xff]
        %v441 = vld [vmem:[%s392 + $0x28] sm:$0xff]
        %v442 = vld [vmem:[%s392 + $0x30] sm:$0xff]
        %v443 = vld [vmem:[%s392 + $0x38] sm:$0xff]
        %v444 = vld [vmem:[%s392 + $0x40] sm:$0xff]
        %v445 = vld [vmem:[%s392 + $0x48] sm:$0xff]
        %v446 = vld [vmem:[%s392 + $0x50] sm:$0xff]
        %v447 = vld [vmem:[%s392 + $0x58] sm:$0xff]
        %v448 = vld [vmem:[%s392 + $0x60] sm:$0xff]
        %v449 = vld [vmem:[%s392 + $0x68] sm:$0xff]
        %v450 = vld [vmem:[%s392 + $0x70] sm:$0xff]
        %v451 = vld [vmem:[%s392 + $0x78] sm:$0xff]
        %v452 = vld [vmem:[%s392 + $0x80] sm:$0xff]
        %v453 = vld [vmem:[%s392 + $0x88] sm:$0xff]
        %v454 = vld [vmem:[%s392 + $0x90] sm:$0xff]
        %v455 = vld [vmem:[%s392 + $0x98] sm:$0xff]
        %v456 = vld [vmem:[%s392 + $0xa0] sm:$0xff]
        %v457 = vld [vmem:[%s392 + $0xa8] sm:$0xff]
        %v458 = vld [vmem:[%s392 + $0xb0] sm:$0xff]
        %v459 = vld [vmem:[%s392 + $0xb8] sm:$0xff]
        %v460 = vld [vmem:[%s392 + $0xc0] sm:$0xff]
        %v461 = vld [vmem:[%s392 + $0xc8] sm:$0xff]
        %v462 = vld [vmem:[%s392 + $0xd0] sm:$0xff]
        %v463 = vld [vmem:[%s392 + $0xd8] sm:$0xff]
        %v464 = vld [vmem:[%s392 + $0xe0] sm:$0xff]
        %v465 = vld [vmem:[%s392 + $0xe8] sm:$0xff]
        %v466 = vld [vmem:[%s392 + $0xf0] sm:$0xff]
        %v467 = vld [vmem:[%s392 + $0xf8] sm:$0xff]
        %v468 = vld [vmem:[%s392 + $0x100] sm:$0xff]
        %v469 = vld [vmem:[%s392 + $0x108] sm:$0xff]
        %v470 = vld [vmem:[%s392 + $0x110] sm:$0xff]
        %v471 = vld [vmem:[%s392 + $0x118] sm:$0xff]
        %v472 = vld [vmem:[%s392 + $0x120] sm:$0xff]
        %v473 = vld [vmem:[%s392 + $0x128] sm:$0xff]
        %v474 = vld [vmem:[%s392 + $0x130] sm:$0xff]
        %v475 = vld [vmem:[%s392 + $0x138] sm:$0xff]
        %v476 = vld [vmem:[%s392 + $0x140] sm:$0xff]
        %v477 = vld [vmem:[%s392 + $0x148] sm:$0xff]
        %v478 = vld [vmem:[%s392 + $0x150] sm:$0xff]
        %v479 = vld [vmem:[%s392 + $0x158] sm:$0xff]
        %v480 = vld [vmem:[%s392 + $0x160] sm:$0xff]
        %v481 = vld [vmem:[%s2] sm:$0xff]
        %483 = vset.pattern.permute.xlu0 0
        %484 = vperm.xlu0 %483, %v481
        %v485 = vpop.permute.xlu0 %484
        %v489 = vunpack.c.l.b16 %v434
        %v490 = vunpack.c.h.b16 %v434
        %v491 = vunpack.c.l.b16 %v435
        %v492 = vpack.c.b16 %v489, %v489
        %v493 = vpack.c.b16 %v490, %v490
        %v494 = vpack.c.b16 %v491, %v491
        %v542 = vunpack.c.l.b16 %v436
        %v543 = vunpack.c.h.b16 %v436
        %v544 = vunpack.c.l.b16 %v437
        %v545 = vunpack.c.h.b16 %v437
        %v546 = vunpack.c.l.b16 %v438
        %v547 = vunpack.c.h.b16 %v438
        %v548 = vunpack.c.l.b16 %v439
        %v549 = vunpack.c.h.b16 %v439
        %v550 = vunpack.c.l.b16 %v440
        %v551 = vunpack.c.h.b16 %v440
        %v552 = vunpack.c.l.b16 %v441
        %v553 = vunpack.c.h.b16 %v441
        %v554 = vunpack.c.l.b16 %v442
        %v555 = vunpack.c.h.b16 %v442
        %v556 = vunpack.c.l.b16 %v443
        %v557 = vunpack.c.h.b16 %v443
        %v558 = vunpack.c.l.b16 %v444
        %v559 = vunpack.c.h.b16 %v444
        %v560 = vunpack.c.l.b16 %v445
        %v561 = vunpack.c.h.b16 %v445
        %v562 = vunpack.c.l.b16 %v446
        %v563 = vunpack.c.h.b16 %v446
        %v564 = vunpack.c.l.b16 %v447
        %v565 = vunpack.c.h.b16 %v447
        %v566 = vunpack.c.l.b16 %v448
        %v567 = vunpack.c.h.b16 %v448
        %v568 = vunpack.c.l.b16 %v449
        %v569 = vunpack.c.h.b16 %v449
        %v570 = vunpack.c.l.b16 %v450
        %v571 = vunpack.c.h.b16 %v450
        %v572 = vunpack.c.l.b16 %v451
        %v573 = vunpack.c.h.b16 %v451
        %v574 = vunpack.c.l.b16 %v452
        %v575 = vunpack.c.h.b16 %v452
        %v576 = vunpack.c.l.b16 %v453
        %v577 = vunpack.c.h.b16 %v453
        %v578 = vunpack.c.l.b16 %v454
        %v579 = vunpack.c.h.b16 %v454
        %v580 = vunpack.c.l.b16 %v455
        %v581 = vunpack.c.h.b16 %v455
        %v582 = vunpack.c.l.b16 %v456
        %v583 = vunpack.c.h.b16 %v456
        %v584 = vunpack.c.l.b16 %v457
        %v585 = vunpack.c.h.b16 %v457
        %v586 = vunpack.c.l.b16 %v458
        %v587 = vunpack.c.h.b16 %v458
        %v588 = vunpack.c.l.b16 %v459
        %v589 = vunpack.c.h.b16 %v459
        %v590 = vunpack.c.l.b16 %v460
        %v591 = vunpack.c.h.b16 %v460
        %v592 = vunpack.c.l.b16 %v461
        %v593 = vunpack.c.h.b16 %v461
        %v594 = vunpack.c.l.b16 %v462
        %v595 = vunpack.c.h.b16 %v462
        %v596 = vunpack.c.l.b16 %v463
        %v597 = vunpack.c.h.b16 %v463
        %v598 = vunpack.c.l.b16 %v464
        %v599 = vunpack.c.h.b16 %v464
        %v600 = vunpack.c.l.b16 %v465
        %v601 = vunpack.c.h.b16 %v465
        %v602 = vunpack.c.l.b16 %v466
        %v603 = vunpack.c.h.b16 %v466
        %v604 = vunpack.c.l.b16 %v467
        %v605 = vunpack.c.h.b16 %v467
        %v606 = vunpack.c.l.b16 %v468
        %v607 = vunpack.c.h.b16 %v468
        %v608 = vunpack.c.l.b16 %v469
        %v609 = vunpack.c.h.b16 %v469
        %v610 = vunpack.c.l.b16 %v470
        %v611 = vunpack.c.h.b16 %v470
        %v612 = vunpack.c.l.b16 %v471
        %v613 = vunpack.c.h.b16 %v471
        %v614 = vunpack.c.l.b16 %v472
        %v615 = vunpack.c.h.b16 %v472
        %v616 = vunpack.c.l.b16 %v473
        %v617 = vunpack.c.h.b16 %v473
        %v618 = vunpack.c.l.b16 %v474
        %v619 = vunpack.c.h.b16 %v474
        %v620 = vunpack.c.l.b16 %v475
        %v621 = vunpack.c.h.b16 %v475
        %v622 = vunpack.c.l.b16 %v476
        %v623 = vunpack.c.h.b16 %v476
        %v624 = vunpack.c.l.b16 %v477
        %v625 = vunpack.c.h.b16 %v477
        %v626 = vunpack.c.l.b16 %v478
        %v627 = vunpack.c.h.b16 %v478
        %v628 = vunpack.c.l.b16 %v479
        %v629 = vunpack.c.h.b16 %v479
        %v630 = vunpack.c.l.b16 %v480
        %v631 = vunpack.c.h.b16 %v480
        %v632 = vpack.c.b16 %v544, %v542
        %v633 = vpack.c.b16 %v545, %v543
        %v634 = vpack.c.b16 %v548, %v546
        %v635 = vpack.c.b16 %v549, %v547
        %v636 = vpack.c.b16 %v552, %v550
        %v637 = vpack.c.b16 %v553, %v551
        %v638 = vpack.c.b16 %v556, %v554
        %v639 = vpack.c.b16 %v557, %v555
        %v640 = vpack.c.b16 %v560, %v558
        %v641 = vpack.c.b16 %v561, %v559
        %v642 = vpack.c.b16 %v564, %v562
        %v643 = vpack.c.b16 %v565, %v563
        %v644 = vpack.c.b16 %v568, %v566
        %v645 = vpack.c.b16 %v569, %v567
        %v646 = vpack.c.b16 %v572, %v570
        %v647 = vpack.c.b16 %v573, %v571
        %v648 = vpack.c.b16 %v576, %v574
        %v649 = vpack.c.b16 %v577, %v575
        %v650 = vpack.c.b16 %v580, %v578
        %v651 = vpack.c.b16 %v581, %v579
        %v652 = vpack.c.b16 %v584, %v582
        %v653 = vpack.c.b16 %v585, %v583
        %v654 = vpack.c.b16 %v588, %v586
        %v655 = vpack.c.b16 %v589, %v587
        %v656 = vpack.c.b16 %v592, %v590
        %v657 = vpack.c.b16 %v593, %v591
        %v658 = vpack.c.b16 %v596, %v594
        %v659 = vpack.c.b16 %v597, %v595
        %v660 = vpack.c.b16 %v600, %v598
        %v661 = vpack.c.b16 %v601, %v599
        %v662 = vpack.c.b16 %v604, %v602
        %v663 = vpack.c.b16 %v605, %v603
        %v664 = vpack.c.b16 %v608, %v606
        %v665 = vpack.c.b16 %v609, %v607
        %v666 = vpack.c.b16 %v612, %v610
        %v667 = vpack.c.b16 %v613, %v611
        %v668 = vpack.c.b16 %v616, %v614
        %v669 = vpack.c.b16 %v617, %v615
        %v670 = vpack.c.b16 %v620, %v618
        %v671 = vpack.c.b16 %v621, %v619
        %v672 = vpack.c.b16 %v624, %v622
        %v673 = vpack.c.b16 %v625, %v623
        %v674 = vpack.c.b16 %v628, %v626
        %v675 = vpack.c.b16 %v629, %v627
        %v676 = vpack.c.b16 %v630, %v630
        %v677 = vpack.c.b16 %v631, %v631
        %vm722 = vcmask 850944
        %v724 = vsel %vm722, %v494, 0
        %vm726 = vcmask 1043456
        %v728 = vsel %vm726, %v676, 0
        %v731 = vsel %vm726, %v677, 0
        %733 = vmatprep.subr.bf16.mxu0 %v633
        %734 = vmatpush1.bf16.msra.mxu0 %v632
        %735 = vmatprep.subr.bf16.mxu0 %v635
        %736 = vmatpush1.bf16.msra.mxu0 %v634
        %737 = vmatprep.subr.bf16.mxu0 %v637
        %738 = vmatpush1.bf16.msra.mxu0 %v636
        %739 = vmatprep.subr.bf16.mxu0 %v639
        %740 = vmatpush1.bf16.msra.mxu0 %v638
        %741 = vmatprep.subr.bf16.mxu0 %v641
        %742 = vmatpush1.bf16.msra.mxu0 %v640
        %743 = vmatprep.subr.bf16.mxu0 %v643
        %744 = vmatpush1.bf16.msra.mxu0 %v642
        %745 = vmatprep.subr.bf16.mxu0 %v645
        %746 = vmatpush1.bf16.msra.mxu0 %v644
        %747 = vmatprep.subr.bf16.mxu0 %v647
        %748 = vmatpush1.bf16.msra.mxu0 %v646
        %749 = vmatprep.subr.bf16.mxu0 %v649
        %750 = vmatpush1.bf16.msra.mxu0 %v648
        %751 = vmatprep.subr.bf16.mxu0 %v651
        %752 = vmatpush1.bf16.msra.mxu0 %v650
        %753 = vmatprep.subr.bf16.mxu0 %v653
        %754 = vmatpush1.bf16.msra.mxu0 %v652
        %755 = vmatprep.subr.bf16.mxu0 %v655
        %756 = vmatpush1.bf16.msra.mxu0 %v654
        %757 = vmatprep.subr.bf16.mxu0 %v657
        %758 = vmatpush1.bf16.msra.mxu0 %v656
        %759 = vmatprep.subr.bf16.mxu0 %v659
        %760 = vmatpush1.bf16.msra.mxu0 %v658
        %761 = vmatprep.subr.bf16.mxu0 %v661
        %762 = vmatpush1.bf16.msra.mxu0 %v660
        %763 = vmatprep.subr.bf16.mxu0 %v663
        %764 = vmatpush1.bf16.msra.mxu0 %v662
        %765 = vmatprep.mubr.bf16.mxu0 %v493
        %766 = vmatmul.mubr.bf16.gmra.mrb[0].mxu0 %v492
        %v767 = vpop.f32.mrb[0].mxu0
        %v768 = vadd.f32 %v485, %v767
        %v769 = vpop.f32.mrb[0].mxu0
        %v770 = vadd.f32 %v485, %v769
        %v771 = vpop.f32.mrb[0].mxu0
        %v772 = vpop.f32.mrb[0].mxu0
        %773 = vdwg.mxu0
        %774 = vmatprep.subr.bf16.mxu0 %v665
        %775 = vmatpush1.bf16.msra.mxu0 %v664
        %776 = vmatprep.subr.bf16.mxu0 %v667
        %777 = vmatpush1.bf16.msra.mxu0 %v666
        %778 = vmatprep.subr.bf16.mxu0 %v669
        %779 = vmatpush1.bf16.msra.mxu0 %v668
        %780 = vmatprep.subr.bf16.mxu0 %v671
        %781 = vmatpush1.bf16.msra.mxu0 %v670
        %782 = vmatprep.subr.bf16.mxu0 %v673
        %783 = vmatpush1.bf16.msra.mxu0 %v672
        %784 = vmatprep.subr.bf16.mxu0 %v675
        %785 = vmatpush1.bf16.msra.mxu0 %v674
        %786 = vmatprep.subr.bf16.mxu0 %v731
        %787 = vmatpush1.bf16.msra.mxu0 %v728
        %788 = vmatprep.subr.bf16.mxu0 0
        %789 = vmatpush1.bf16.msra.mxu0 0
        %790 = vmatprep.subr.bf16.mxu0 0
        %791 = vmatpush1.bf16.msra.mxu0 0
        %792 = vmatprep.subr.bf16.mxu0 0
        %793 = vmatpush1.bf16.msra.mxu0 0
        %794 = vmatprep.subr.bf16.mxu0 0
        %795 = vmatpush1.bf16.msra.mxu0 0
        %796 = vmatprep.subr.bf16.mxu0 0
        %797 = vmatpush1.bf16.msra.mxu0 0
        %798 = vmatprep.subr.bf16.mxu0 0
        %799 = vmatpush1.bf16.msra.mxu0 0
        %800 = vmatprep.subr.bf16.mxu0 0
        %801 = vmatpush1.bf16.msra.mxu0 0
        %802 = vmatprep.subr.bf16.mxu0 0
        %803 = vmatpush1.bf16.msra.mxu0 0
        %804 = vmatprep.subr.bf16.mxu0 0
        %805 = vmatpush1.bf16.msra.mxu0 0
        %806 = vmatprep.mubr.bf16.mxu0 0
        %807 = vmatmul.mubr.bf16.gmra.mrb[0].mxu0 %v724
        %v808 = vpop.f32.mrb[0].mxu0
        %v809 = vadd.f32 %v768, %v808
        %v810 = vpop.f32.mrb[0].mxu0
        %v811 = vadd.f32 %v770, %v810
        %v812 = vpop.f32.mrb[0].mxu0
        %v813 = vpop.f32.mrb[0].mxu0
        %814 = vdwg.mxu0
        %v815 = vld [vmem:[%s425] sm:$0xff]
        %v816 = vunpack.c.l.bf16 %v815
        %v817 = vunpack.c.h.bf16 %v815
        %v818 = vadd.f32 %v809, %v816
        %v819 = vadd.f32 %v811, %v817
        %v820 = vmax.f32 %v818, 0.0
        %v821 = vmax.f32 %v819, 0.0
        %v822 = vpack.c.bf16 %v820, %v820
        %v823 = vpack.c.bf16 %v821, %v821
        %v826 = vunpack.c.l.b16 %v822
        %v827 = vunpack.c.l.b16 %v823
        %v828 = vpack.c.b16 %v827, %v826
        %830 = vst [vmem:[%s431] sm:$0xff] %v828
        %s831 = smul.u32 2, %s15
        %p832 = scmp.lt.s32.totalorder %s831, 3
        %s833 = scalar_select %p832, %s831, 3
        %s834 = smul.addr %s833, 4
        %s835 = scalar_lea.vmem %s4, %s834
        // Predicated region
        $region75: #{resnet_forward.10} parent=69 // pred_check
          %p836 = pneg %p127
        $region76: #{resnet_forward.10} parent=69 // pred_check_branch
          %838 = sbr.rel (%p836) target = $region78
        $region77: #{resnet_forward.10} parent=69 // pred_region
          %s839 = smul.u32 2, %s15
        $region78: #{resnet_forward.10} parent=69 // pred_fallthru
          _
      $region70: #{resnet_forward.10} parent=5 // pred_fallthru
        _
      %p840 = scmp.le.s32.totalorder 2, %s10
      // Predicated region
      $region79: #{resnet_forward.10} parent=5 // pred_check
        %p841 = pneg %p840
      $region80: #{resnet_forward.10} parent=5 // pred_check_branch
        %843 = sbr.rel (%p841) target = $region82
      $region81: #{resnet_forward.10} parent=5 // pred_region
        %s844 = ssub.s32 %s10, 2
        // Predicated region
        $region83: #{resnet_forward.10} parent=81 // pred_check
          %p845 = pneg %p133
        $region84: #{resnet_forward.10} parent=81 // pred_check_branch
          %847 = sbr.rel (%p845) target = $region86
        $region85: #{resnet_forward.10} parent=81 // pred_region
          %s848 = smul.u32 2, %s16
          %p849 = scmp.lt.s32.totalorder %s848, 3
          %s850 = scalar_select %p849, %s848, 3
          %s851 = smul.addr %s850, 4
          %s852 = scalar_lea.vmem %s4, %s851
        $region86: #{resnet_forward.10} parent=81 // pred_fallthru
          _
      $region82: #{resnet_forward.10} parent=5 // pred_fallthru
        _
    $region6: #{resnet_forward.10} parent=1 // loop_footer
      %s14 = sadd.s32 1, %s10
    $region7: #{resnet_forward.10} parent=1 // loop_footer_branch
      %9 = sbr.rel target = $region3
    $region8: #{resnet_forward.10} parent=1 // loop_exit
      _

// kernel: resnet_forward.11
$region0: #{resnet_forward.11}
  #allocation0 [shape = 'u32[]', space=smem, size = 0x4, offset = 0x4, fixed_abs, tag = 'smem constant byte address 0x4 - core index']
  #allocation1 [shape = 'u32[144,128]{1,0:T(1,128)}', space=vmem, size = 0x12000, scoped, tag = 'internal scratch']
  %s0 = inlined_call_operand.vmem [shape: bf16[16,360], index: 0, kind: input, shape index: {}]
  %s1 = inlined_call_operand.vmem [shape: bf16[360,128], index: 1, kind: input, shape index: {}]
  %s2 = inlined_call_operand.vmem [shape: f32[16,1], index: 2, kind: input, shape index: {}]
  %s3 = inlined_call_operand.vmem [shape: bf16[16,128], index: 3, kind: output, shape index: {}]
  %s4 = sld [smem:[#allocation0]]
  $region22: #{resnet_forward.11} parent=0
    _
  %s6 = ssub.s32 1, %s4
  %s7 = scalar_select 0, %s6, %s4
  // Predicated region
  $region2: #{resnet_forward.11} parent=0 // pred_check
    _
  $region3: #{resnet_forward.11} parent=0 // pred_check_branch
    %9 = sbr.rel (0) target = $region5
  $region4: #{resnet_forward.11} parent=0 // pred_region
    _
  $region5: #{resnet_forward.11} parent=0 // pred_fallthru
    _
  // Predicated region
  $region6: #{resnet_forward.11} parent=0 // pred_check
    _
  $region7: #{resnet_forward.11} parent=0 // pred_check_branch
    %11 = sbr.rel (0) target = $region9
  $region8: #{resnet_forward.11} parent=0 // pred_region
    _
  $region9: #{resnet_forward.11} parent=0 // pred_fallthru
    _
  // Predicated region
  $region10: #{resnet_forward.11} parent=0 // pred_check
    _
  $region11: #{resnet_forward.11} parent=0 // pred_check_branch
    %13 = sbr.rel (0) target = $region13
  $region12: #{resnet_forward.11} parent=0 // pred_region
    _
  $region13: #{resnet_forward.11} parent=0 // pred_fallthru
    _
  %v15 = vld [vmem:[%s0] sm:$0xff]
  %v16 = vld [vmem:[%s0 + $0x8] sm:$0xf]
  %v17 = vld [vmem:[%s0 + $0xc] sm:$0xff]
  %v18 = vld [vmem:[%s0 + $0x14] sm:$0xf]
  %v19 = vld [vmem:[%s1] sm:$0xf]
  %v20 = vld [vmem:[%s1 + $0x4] sm:$0xf]
  %v21 = vld [vmem:[%s1 + $0x8] sm:$0xf]
  %v22 = vld [vmem:[%s1 + $0xc] sm:$0xf]
  %v23 = vld [vmem:[%s1 + $0x10] sm:$0xf]
  %v24 = vld [vmem:[%s1 + $0x14] sm:$0xf]
  %v25 = vld [vmem:[%s1 + $0x18] sm:$0xf]
  %v26 = vld [vmem:[%s1 + $0x1c] sm:$0xf]
  %v27 = vld [vmem:[%s1 + $0x20] sm:$0xf]
  %v28 = vld [vmem:[%s1 + $0x24] sm:$0xf]
  %v29 = vld [vmem:[%s1 + $0x28] sm:$0xf]
  %v30 = vld [vmem:[%s1 + $0x2c] sm:$0xf]
  %v31 = vld [vmem:[%s1 + $0x30] sm:$0xf]
  %v32 = vld [vmem:[%s1 + $0x34] sm:$0xf]
  %v33 = vld [vmem:[%s1 + $0x38] sm:$0xf]
  %v34 = vld [vmem:[%s1 + $0x3c] sm:$0xf]
  %v35 = vld [vmem:[%s1 + $0x40] sm:$0xf]
  %v36 = vld [vmem:[%s1 + $0x44] sm:$0xf]
  %v37 = vld [vmem:[%s1 + $0x48] sm:$0xf]
  %v38 = vld [vmem:[%s1 + $0x4c] sm:$0xf]
  %v39 = vld [vmem:[%s1 + $0x50] sm:$0xf]
  %v40 = vld [vmem:[%s1 + $0x54] sm:$0xf]
  %v41 = vld [vmem:[%s1 + $0x58] sm:$0xf]
  %v42 = vld [vmem:[%s1 + $0x5c] sm:$0xf]
  %v43 = vld [vmem:[%s1 + $0x60] sm:$0xf]
  %v44 = vld [vmem:[%s1 + $0x64] sm:$0xf]
  %v45 = vld [vmem:[%s1 + $0x68] sm:$0xf]
  %v46 = vld [vmem:[%s1 + $0x6c] sm:$0xf]
  %v47 = vld [vmem:[%s1 + $0x70] sm:$0xf]
  %v48 = vld [vmem:[%s1 + $0x74] sm:$0xf]
  %v49 = vld [vmem:[%s1 + $0x78] sm:$0xf]
  %v50 = vld [vmem:[%s1 + $0x7c] sm:$0xf]
  %v51 = vld [vmem:[%s1 + $0x80] sm:$0xf]
  %v52 = vld [vmem:[%s1 + $0x84] sm:$0xf]
  %v53 = vld [vmem:[%s1 + $0x88] sm:$0xf]
  %v54 = vld [vmem:[%s1 + $0x8c] sm:$0xf]
  %v55 = vld [vmem:[%s1 + $0x90] sm:$0xf]
  %v56 = vld [vmem:[%s1 + $0x94] sm:$0xf]
  %v57 = vld [vmem:[%s1 + $0x98] sm:$0xf]
  %v58 = vld [vmem:[%s1 + $0x9c] sm:$0xf]
  %v59 = vld [vmem:[%s1 + $0xa0] sm:$0xf]
  %v60 = vld [vmem:[%s1 + $0xa4] sm:$0xf]
  %v61 = vld [vmem:[%s1 + $0xa8] sm:$0xf]
  %v62 = vld [vmem:[%s1 + $0xac] sm:$0xf]
  %v63 = vld [vmem:[%s1 + $0xb0] sm:$0xf]
  %v64 = vld [vmem:[%s2] sm:$0xff]
  %v65 = vld [vmem:[%s2 + $0x8] sm:$0xff]
  %67 = vset.pattern.permute.xlu0 0
  %68 = vperm.xlu0 %67, %v64
  %v69 = vpop.permute.xlu0 %68
  %72 = vset.pattern.permute.xlu0 0
  %73 = vperm.xlu0 %72, %v65
  %v74 = vpop.permute.xlu0 %73
  %v80 = vunpack.c.l.b16 %v15
  %v81 = vunpack.c.h.b16 %v15
  %v82 = vunpack.c.l.b16 %v16
  %v83 = vunpack.c.l.b16 %v17
  %v84 = vunpack.c.h.b16 %v17
  %v85 = vunpack.c.l.b16 %v18
  %v86 = vpack.c.b16 %v83, %v80
  %v87 = vpack.c.b16 %v84, %v81
  %v88 = vpack.c.b16 %v85, %v82
  %v136 = vunpack.c.l.b16 %v19
  %v137 = vunpack.c.l.b16 %v20
  %v138 = vunpack.c.l.b16 %v21
  %v139 = vunpack.c.l.b16 %v22
  %v140 = vunpack.c.l.b16 %v23
  %v141 = vunpack.c.l.b16 %v24
  %v142 = vunpack.c.l.b16 %v25
  %v143 = vunpack.c.l.b16 %v26
  %v144 = vunpack.c.l.b16 %v27
  %v145 = vunpack.c.l.b16 %v28
  %v146 = vunpack.c.l.b16 %v29
  %v147 = vunpack.c.l.b16 %v30
  %v148 = vunpack.c.l.b16 %v31
  %v149 = vunpack.c.l.b16 %v32
  %v150 = vunpack.c.l.b16 %v33
  %v151 = vunpack.c.l.b16 %v34
  %v152 = vunpack.c.l.b16 %v35
  %v153 = vunpack.c.l.b16 %v36
  %v154 = vunpack.c.l.b16 %v37
  %v155 = vunpack.c.l.b16 %v38
  %v156 = vunpack.c.l.b16 %v39
  %v157 = vunpack.c.l.b16 %v40
  %v158 = vunpack.c.l.b16 %v41
  %v159 = vunpack.c.l.b16 %v42
  %v160 = vunpack.c.l.b16 %v43
  %v161 = vunpack.c.l.b16 %v44
  %v162 = vunpack.c.l.b16 %v45
  %v163 = vunpack.c.l.b16 %v46
  %v164 = vunpack.c.l.b16 %v47
  %v165 = vunpack.c.l.b16 %v48
  %v166 = vunpack.c.l.b16 %v49
  %v167 = vunpack.c.l.b16 %v50
  %v168 = vunpack.c.l.b16 %v51
  %v169 = vunpack.c.l.b16 %v52
  %v170 = vunpack.c.l.b16 %v53
  %v171 = vunpack.c.l.b16 %v54
  %v172 = vunpack.c.l.b16 %v55
  %v173 = vunpack.c.l.b16 %v56
  %v174 = vunpack.c.l.b16 %v57
  %v175 = vunpack.c.l.b16 %v58
  %v176 = vunpack.c.l.b16 %v59
  %v177 = vunpack.c.l.b16 %v60
  %v178 = vunpack.c.l.b16 %v61
  %v179 = vunpack.c.l.b16 %v62
  %v180 = vunpack.c.l.b16 %v63
  %v181 = vpack.c.b16 %v137, %v136
  %v182 = vpack.c.b16 %v139, %v138
  %v183 = vpack.c.b16 %v141, %v140
  %v184 = vpack.c.b16 %v143, %v142
  %v185 = vpack.c.b16 %v145, %v144
  %v186 = vpack.c.b16 %v147, %v146
  %v187 = vpack.c.b16 %v149, %v148
  %v188 = vpack.c.b16 %v151, %v150
  %v189 = vpack.c.b16 %v153, %v152
  %v190 = vpack.c.b16 %v155, %v154
  %v191 = vpack.c.b16 %v157, %v156
  %v192 = vpack.c.b16 %v159, %v158
  %v193 = vpack.c.b16 %v161, %v160
  %v194 = vpack.c.b16 %v163, %v162
  %v195 = vpack.c.b16 %v165, %v164
  %v196 = vpack.c.b16 %v167, %v166
  %v197 = vpack.c.b16 %v169, %v168
  %v198 = vpack.c.b16 %v171, %v170
  %v199 = vpack.c.b16 %v173, %v172
  %v200 = vpack.c.b16 %v175, %v174
  %v201 = vpack.c.b16 %v177, %v176
  %v202 = vpack.c.b16 %v179, %v178
  %v203 = vpack.c.b16 %v180, %v180
  %vm226 = vcmask 850944
  %v228 = vsel %vm226, %v88, 0
  %vm230 = vcmask 1043456
  %v232 = vsel %vm230, %v203, 0
  %234 = vmatprep.subr.bf16.mxu0 0
  %235 = vmatpush1.bf16.msra.mxu0 %v181
  %236 = vmatprep.subr.bf16.mxu0 0
  %237 = vmatpush1.bf16.msra.mxu0 %v182
  %238 = vmatprep.subr.bf16.mxu0 0
  %239 = vmatpush1.bf16.msra.mxu0 %v183
  %240 = vmatprep.subr.bf16.mxu0 0
  %241 = vmatpush1.bf16.msra.mxu0 %v184
  %242 = vmatprep.subr.bf16.mxu0 0
  %243 = vmatpush1.bf16.msra.mxu0 %v185
  %244 = vmatprep.subr.bf16.mxu0 0
  %245 = vmatpush1.bf16.msra.mxu0 %v186
  %246 = vmatprep.subr.bf16.mxu0 0
  %247 = vmatpush1.bf16.msra.mxu0 %v187
  %248 = vmatprep.subr.bf16.mxu0 0
  %249 = vmatpush1.bf16.msra.mxu0 %v188
  %250 = vmatprep.subr.bf16.mxu0 0
  %251 = vmatpush1.bf16.msra.mxu0 %v189
  %252 = vmatprep.subr.bf16.mxu0 0
  %253 = vmatpush1.bf16.msra.mxu0 %v190
  %254 = vmatprep.subr.bf16.mxu0 0
  %255 = vmatpush1.bf16.msra.mxu0 %v191
  %256 = vmatprep.subr.bf16.mxu0 0
  %257 = vmatpush1.bf16.msra.mxu0 %v192
  %258 = vmatprep.subr.bf16.mxu0 0
  %259 = vmatpush1.bf16.msra.mxu0 %v193
  %260 = vmatprep.subr.bf16.mxu0 0
  %261 = vmatpush1.bf16.msra.mxu0 %v194
  %262 = vmatprep.subr.bf16.mxu0 0
  %263 = vmatpush1.bf16.msra.mxu0 %v195
  %264 = vmatprep.subr.bf16.mxu0 0
  %265 = vmatpush1.bf16.msra.mxu0 %v196
  %266 = vmatprep.mubr.bf16.mxu0 %v87
  %267 = vmatmul.mubr.bf16.gmra.mrb[0].mxu0 %v86
  %v268 = vpop.f32.mrb[0].mxu0
  %v269 = vadd.f32 %v69, %v268
  %v270 = vpop.f32.mrb[0].mxu0
  %v271 = vpop.f32.mrb[0].mxu0
  %v272 = vadd.f32 %v74, %v271
  %v273 = vpop.f32.mrb[0].mxu0
  %274 = vdwg.mxu0
  %275 = vmatprep.subr.bf16.mxu0 0
  %276 = vmatpush1.bf16.msra.mxu0 %v197
  %277 = vmatprep.subr.bf16.mxu0 0
  %278 = vmatpush1.bf16.msra.mxu0 %v198
  %279 = vmatprep.subr.bf16.mxu0 0
  %280 = vmatpush1.bf16.msra.mxu0 %v199
  %281 = vmatprep.subr.bf16.mxu0 0
  %282 = vmatpush1.bf16.msra.mxu0 %v200
  %283 = vmatprep.subr.bf16.mxu0 0
  %284 = vmatpush1.bf16.msra.mxu0 %v201
  %285 = vmatprep.subr.bf16.mxu0 0
  %286 = vmatpush1.bf16.msra.mxu0 %v202
  %287 = vmatprep.subr.bf16.mxu0 0
  %288 = vmatpush1.bf16.msra.mxu0 %v232
  %289 = vmatprep.subr.bf16.mxu0 0
  %290 = vmatpush1.bf16.msra.mxu0 0
  %291 = vmatprep.subr.bf16.mxu0 0
  %292 = vmatpush1.bf16.msra.mxu0 0
  %293 = vmatprep.subr.bf16.mxu0 0
  %294 = vmatpush1.bf16.msra.mxu0 0
  %295 = vmatprep.subr.bf16.mxu0 0
  %296 = vmatpush1.bf16.msra.mxu0 0
  %297 = vmatprep.subr.bf16.mxu0 0
  %298 = vmatpush1.bf16.msra.mxu0 0
  %299 = vmatprep.subr.bf16.mxu0 0
  %300 = vmatpush1.bf16.msra.mxu0 0
  %301 = vmatprep.subr.bf16.mxu0 0
  %302 = vmatpush1.bf16.msra.mxu0 0
  %303 = vmatprep.subr.bf16.mxu0 0
  %304 = vmatpush1.bf16.msra.mxu0 0
  %305 = vmatprep.subr.bf16.mxu0 0
  %306 = vmatpush1.bf16.msra.mxu0 0
  %307 = vmatprep.mubr.bf16.mxu0 0
  %308 = vmatmul.mubr.bf16.gmra.mrb[0].mxu0 %v228
  %v309 = vpop.f32.mrb[0].mxu0
  %v310 = vadd.f32 %v269, %v309
  %v311 = vpop.f32.mrb[0].mxu0
  %v312 = vpop.f32.mrb[0].mxu0
  %v313 = vadd.f32 %v272, %v312
  %v314 = vpop.f32.mrb[0].mxu0
  %315 = vdwg.mxu0
  %v316 = vmax.f32 %v310, 0.0
  %v317 = vmax.f32 %v313, 0.0
  %v318 = vpack.c.bf16 %v317, %v316
  %v320 = vunpack.c.l.b16 %v318
  %v321 = vunpack.c.h.b16 %v318
  %v322 = vpack.c.b16 %v320, %v320
  %v323 = vpack.c.b16 %v321, %v321
  %326 = vst [vmem:[%s3] sm:$0xf] %v322
  %327 = vst [vmem:[%s3 + $0x4] sm:$0xf] %v323
  // Predicated region
  $region14: #{resnet_forward.11} parent=0 // pred_check
    _
  $region15: #{resnet_forward.11} parent=0 // pred_check_branch
    %329 = sbr.rel (0) target = $region17
  $region16: #{resnet_forward.11} parent=0 // pred_region
    _
  $region17: #{resnet_forward.11} parent=0 // pred_fallthru
    _
  // Predicated region
  $region18: #{resnet_forward.11} parent=0 // pred_check
    _
  $region19: #{resnet_forward.11} parent=0 // pred_check_branch
    %331 = sbr.rel (0) target = $region21
  $region20: #{resnet_forward.11} parent=0 // pred_region
    _
  $region21: #{resnet_forward.11} parent=0 // pred_fallthru
    _

// kernel: resnet_forward.12
$region0: #{resnet_forward.12}
  #allocation0 [shape = 'u32[]', space=smem, size = 0x4, offset = 0x4, fixed_abs, tag = 'smem constant byte address 0x4 - core index']
  #allocation1 [shape = 'u32[144,128]{1,0:T(1,128)}', space=vmem, size = 0x12000, scoped, tag = 'internal scratch']
  %s0 = inlined_call_operand.vmem [shape: bf16[16,8], index: 0, kind: input, shape index: {}]
  %s1 = inlined_call_operand.vmem [shape: bf16[8,128], index: 1, kind: input, shape index: {}]
  %s2 = inlined_call_operand.vmem [shape: f32[16,1], index: 2, kind: input, shape index: {}]
  %s3 = inlined_call_operand.vmem [shape: bf16[16,128], index: 3, kind: output, shape index: {}]
  %s4 = sld [smem:[#allocation0]]
  $region22: #{resnet_forward.12} parent=0
    _
  %s6 = ssub.s32 1, %s4
  %s7 = scalar_select 0, %s6, %s4
  // Predicated region
  $region2: #{resnet_forward.12} parent=0 // pred_check
    _
  $region3: #{resnet_forward.12} parent=0 // pred_check_branch
    %9 = sbr.rel (0) target = $region5
  $region4: #{resnet_forward.12} parent=0 // pred_region
    _
  $region5: #{resnet_forward.12} parent=0 // pred_fallthru
    _
  // Predicated region
  $region6: #{resnet_forward.12} parent=0 // pred_check
    _
  $region7: #{resnet_forward.12} parent=0 // pred_check_branch
    %11 = sbr.rel (0) target = $region9
  $region8: #{resnet_forward.12} parent=0 // pred_region
    _
  $region9: #{resnet_forward.12} parent=0 // pred_fallthru
    _
  // Predicated region
  $region10: #{resnet_forward.12} parent=0 // pred_check
    _
  $region11: #{resnet_forward.12} parent=0 // pred_check_branch
    %13 = sbr.rel (0) target = $region13
  $region12: #{resnet_forward.12} parent=0 // pred_region
    _
  $region13: #{resnet_forward.12} parent=0 // pred_fallthru
    _
  %v15 = vld [vmem:[%s0] sm:$0xf]
  %v16 = vld [vmem:[%s0 + $0x4] sm:$0xf]
  %v17 = vld [vmem:[%s1] sm:$0xf]
  %v18 = vld [vmem:[%s2] sm:$0xff]
  %v19 = vld [vmem:[%s2 + $0x8] sm:$0xff]
  %21 = vset.pattern.permute.xlu0 0
  %22 = vperm.xlu0 %21, %v18
  %v23 = vpop.permute.xlu0 %22
  %26 = vset.pattern.permute.xlu0 0
  %27 = vperm.xlu0 %26, %v19
  %v28 = vpop.permute.xlu0 %27
  %v32 = vunpack.c.l.b16 %v15
  %v33 = vunpack.c.l.b16 %v16
  %v34 = vpack.c.b16 %v33, %v32
  %vm35 = vcmask 64512
  %v37 = vsel %vm35, %v34, 0
  %vm39 = vcmask 1043456
  %v41 = vsel %vm39, %v17, 0
  %43 = vmatprep.subr.bf16.mxu0 0
  %44 = vmatpush1.bf16.msra.mxu0 %v41
  %45 = vmatprep.subr.bf16.mxu0 0
  %46 = vmatpush1.bf16.msra.mxu0 0
  %47 = vmatprep.subr.bf16.mxu0 0
  %48 = vmatpush1.bf16.msra.mxu0 0
  %49 = vmatprep.subr.bf16.mxu0 0
  %50 = vmatpush1.bf16.msra.mxu0 0
  %51 = vmatprep.subr.bf16.mxu0 0
  %52 = vmatpush1.bf16.msra.mxu0 0
  %53 = vmatprep.subr.bf16.mxu0 0
  %54 = vmatpush1.bf16.msra.mxu0 0
  %55 = vmatprep.subr.bf16.mxu0 0
  %56 = vmatpush1.bf16.msra.mxu0 0
  %57 = vmatprep.subr.bf16.mxu0 0
  %58 = vmatpush1.bf16.msra.mxu0 0
  %59 = vmatprep.subr.bf16.mxu0 0
  %60 = vmatpush1.bf16.msra.mxu0 0
  %61 = vmatprep.subr.bf16.mxu0 0
  %62 = vmatpush1.bf16.msra.mxu0 0
  %63 = vmatprep.subr.bf16.mxu0 0
  %64 = vmatpush1.bf16.msra.mxu0 0
  %65 = vmatprep.subr.bf16.mxu0 0
  %66 = vmatpush1.bf16.msra.mxu0 0
  %67 = vmatprep.subr.bf16.mxu0 0
  %68 = vmatpush1.bf16.msra.mxu0 0
  %69 = vmatprep.subr.bf16.mxu0 0
  %70 = vmatpush1.bf16.msra.mxu0 0
  %71 = vmatprep.subr.bf16.mxu0 0
  %72 = vmatpush1.bf16.msra.mxu0 0
  %73 = vmatprep.subr.bf16.mxu0 0
  %74 = vmatpush1.bf16.msra.mxu0 0
  %75 = vmatprep.mubr.bf16.mxu0 0
  %76 = vmatmul.mubr.bf16.gmra.mrb[0].mxu0 %v37
  %v77 = vpop.f32.mrb[0].mxu0
  %v78 = vadd.f32 %v23, %v77
  %v79 = vpop.f32.mrb[0].mxu0
  %v80 = vpop.f32.mrb[0].mxu0
  %v81 = vadd.f32 %v28, %v80
  %v82 = vpop.f32.mrb[0].mxu0
  %83 = vdwg.mxu0
  %v84 = vpack.c.bf16 %v81, %v78
  %v86 = vunpack.c.l.b16 %v84
  %v87 = vunpack.c.h.b16 %v84
  %v88 = vpack.c.b16 %v86, %v86
  %v89 = vpack.c.b16 %v87, %v87
  %92 = vst [vmem:[%s3] sm:$0xf] %v88
  %93 = vst [vmem:[%s3 + $0x4] sm:$0xf] %v89
  // Predicated region
  $region14: #{resnet_forward.12} parent=0 // pred_check
    _
  $region15: #{resnet_forward.12} parent=0 // pred_check_branch
    %95 = sbr.rel (0) target = $region17
  $region16: #{resnet_forward.12} parent=0 // pred_region
    _
  $region17: #{resnet_forward.12} parent=0 // pred_fallthru
    _
  // Predicated region
  $region18: #{resnet_forward.12} parent=0 // pred_check
    _
  $region19: #{resnet_forward.12} parent=0 // pred_check_branch
    %97 = sbr.rel (0) target = $region21
  $region20: #{resnet_forward.12} parent=0 // pred_region
    _
  $region21: #{resnet_forward.12} parent=0 // pred_fallthru
    _

// kernel: resnet_forward.13
$region0: #{resnet_forward.13}
  #allocation0 [shape = 'u32[]', space=smem, size = 0x4, offset = 0x4, fixed_abs, tag = 'smem constant byte address 0x4 - core index']
  #allocation1 [shape = 'u32[144,128]{1,0:T(1,128)}', space=vmem, size = 0x12000, scoped, tag = 'internal scratch']
  %s0 = inlined_call_operand.vmem [shape: bf16[16,720], index: 0, kind: input, shape index: {}]
  %s1 = inlined_call_operand.vmem [shape: bf16[720,128], index: 1, kind: input, shape index: {}]
  %s2 = inlined_call_operand.vmem [shape: f32[16,1], index: 2, kind: input, shape index: {}]
  %s3 = inlined_call_operand.vmem [shape: bf16[16,128], index: 3, kind: input, shape index: {}]
  %s4 = inlined_call_operand.vmem [shape: bf16[16,128], index: 4, kind: output, shape index: {}]
  %s5 = sld [smem:[#allocation0]]
  $region26: #{resnet_forward.13} parent=0
    _
  %s7 = ssub.s32 1, %s5
  %s8 = scalar_select 0, %s7, %s5
  // Predicated region
  $region2: #{resnet_forward.13} parent=0 // pred_check
    _
  $region3: #{resnet_forward.13} parent=0 // pred_check_branch
    %10 = sbr.rel (0) target = $region5
  $region4: #{resnet_forward.13} parent=0 // pred_region
    _
  $region5: #{resnet_forward.13} parent=0 // pred_fallthru
    _
  // Predicated region
  $region6: #{resnet_forward.13} parent=0 // pred_check
    _
  $region7: #{resnet_forward.13} parent=0 // pred_check_branch
    %12 = sbr.rel (0) target = $region9
  $region8: #{resnet_forward.13} parent=0 // pred_region
    _
  $region9: #{resnet_forward.13} parent=0 // pred_fallthru
    _
  // Predicated region
  $region10: #{resnet_forward.13} parent=0 // pred_check
    _
  $region11: #{resnet_forward.13} parent=0 // pred_check_branch
    %14 = sbr.rel (0) target = $region13
  $region12: #{resnet_forward.13} parent=0 // pred_region
    _
  $region13: #{resnet_forward.13} parent=0 // pred_fallthru
    _
  // Predicated region
  $region14: #{resnet_forward.13} parent=0 // pred_check
    _
  $region15: #{resnet_forward.13} parent=0 // pred_check_branch
    %16 = sbr.rel (0) target = $region17
  $region16: #{resnet_forward.13} parent=0 // pred_region
    _
  $region17: #{resnet_forward.13} parent=0 // pred_fallthru
    _
  %v18 = vld [vmem:[%s0] sm:$0xff]
  %v19 = vld [vmem:[%s0 + $0x8] sm:$0xff]
  %v20 = vld [vmem:[%s0 + $0x10] sm:$0xff]
  %v21 = vld [vmem:[%s0 + $0x18] sm:$0xff]
  %v22 = vld [vmem:[%s0 + $0x20] sm:$0xff]
  %v23 = vld [vmem:[%s0 + $0x28] sm:$0xff]
  %v24 = vld [vmem:[%s1] sm:$0xf]
  %v25 = vld [vmem:[%s1 + $0x4] sm:$0xf]
  %v26 = vld [vmem:[%s1 + $0x8] sm:$0xf]
  %v27 = vld [vmem:[%s1 + $0xc] sm:$0xf]
  %v28 = vld [vmem:[%s1 + $0x10] sm:$0xf]
  %v29 = vld [vmem:[%s1 + $0x14] sm:$0xf]
  %v30 = vld [vmem:[%s1 + $0x18] sm:$0xf]
  %v31 = vld [vmem:[%s1 + $0x1c] sm:$0xf]
  %v32 = vld [vmem:[%s1 + $0x20] sm:$0xf]
  %v33 = vld [vmem:[%s1 + $0x24] sm:$0xf]
  %v34 = vld [vmem:[%s1 + $0x28] sm:$0xf]
  %v35 = vld [vmem:[%s1 + $0x2c] sm:$0xf]
  %v36 = vld [vmem:[%s1 + $0x30] sm:$0xf]
  %v37 = vld [vmem:[%s1 + $0x34] sm:$0xf]
  %v38 = vld [vmem:[%s1 + $0x38] sm:$0xf]
  %v39 = vld [vmem:[%s1 + $0x3c] sm:$0xf]
  %v40 = vld [vmem:[%s1 + $0x40] sm:$0xf]
  %v41 = vld [vmem:[%s1 + $0x44] sm:$0xf]
  %v42 = vld [vmem:[%s1 + $0x48] sm:$0xf]
  %v43 = vld [vmem:[%s1 + $0x4c] sm:$0xf]
  %v44 = vld [vmem:[%s1 + $0x50] sm:$0xf]
  %v45 = vld [vmem:[%s1 + $0x54] sm:$0xf]
  %v46 = vld [vmem:[%s1 + $0x58] sm:$0xf]
  %v47 = vld [vmem:[%s1 + $0x5c] sm:$0xf]
  %v48 = vld [vmem:[%s1 + $0x60] sm:$0xf]
  %v49 = vld [vmem:[%s1 + $0x64] sm:$0xf]
  %v50 = vld [vmem:[%s1 + $0x68] sm:$0xf]
  %v51 = vld [vmem:[%s1 + $0x6c] sm:$0xf]
  %v52 = vld [vmem:[%s1 + $0x70] sm:$0xf]
  %v53 = vld [vmem:[%s1 + $0x74] sm:$0xf]
  %v54 = vld [vmem:[%s1 + $0x78] sm:$0xf]
  %v55 = vld [vmem:[%s1 + $0x7c] sm:$0xf]
  %v56 = vld [vmem:[%s1 + $0x80] sm:$0xf]
  %v57 = vld [vmem:[%s1 + $0x84] sm:$0xf]
  %v58 = vld [vmem:[%s1 + $0x88] sm:$0xf]
  %v59 = vld [vmem:[%s1 + $0x8c] sm:$0xf]
  %v60 = vld [vmem:[%s1 + $0x90] sm:$0xf]
  %v61 = vld [vmem:[%s1 + $0x94] sm:$0xf]
  %v62 = vld [vmem:[%s1 + $0x98] sm:$0xf]
  %v63 = vld [vmem:[%s1 + $0x9c] sm:$0xf]
  %v64 = vld [vmem:[%s1 + $0xa0] sm:$0xf]
  %v65 = vld [vmem:[%s1 + $0xa4] sm:$0xf]
  %v66 = vld [vmem:[%s1 + $0xa8] sm:$0xf]
  %v67 = vld [vmem:[%s1 + $0xac] sm:$0xf]
  %v68 = vld [vmem:[%s1 + $0xb0] sm:$0xf]
  %v69 = vld [vmem:[%s1 + $0xb4] sm:$0xf]
  %v70 = vld [vmem:[%s1 + $0xb8] sm:$0xf]
  %v71 = vld [vmem:[%s1 + $0xbc] sm:$0xf]
  %v72 = vld [vmem:[%s1 + $0xc0] sm:$0xf]
  %v73 = vld [vmem:[%s1 + $0xc4] sm:$0xf]
  %v74 = vld [vmem:[%s1 + $0xc8] sm:$0xf]
  %v75 = vld [vmem:[%s1 + $0xcc] sm:$0xf]
  %v76 = vld [vmem:[%s1 + $0xd0] sm:$0xf]
  %v77 = vld [vmem:[%s1 + $0xd4] sm:$0xf]
  %v78 = vld [vmem:[%s1 + $0xd8] sm:$0xf]
  %v79 = vld [vmem:[%s1 + $0xdc] sm:$0xf]
  %v80 = vld [vmem:[%s1 + $0xe0] sm:$0xf]
  %v81 = vld [vmem:[%s1 + $0xe4] sm:$0xf]
  %v82 = vld [vmem:[%s1 + $0xe8] sm:$0xf]
  %v83 = vld [vmem:[%s1 + $0xec] sm:$0xf]
  %v84 = vld [vmem:[%s1 + $0xf0] sm:$0xf]
  %v85 = vld [vmem:[%s1 + $0xf4] sm:$0xf]
  %v86 = vld [vmem:[%s1 + $0xf8] sm:$0xf]
  %v87 = vld [vmem:[%s1 + $0xfc] sm:$0xf]
  %v88 = vld [vmem:[%s1 + $0x100] sm:$0xf]
  %v89 = vld [vmem:[%s1 + $0x104] sm:$0xf]
  %v90 = vld [vmem:[%s1 + $0x108] sm:$0xf]
  %v91 = vld [vmem:[%s1 + $0x10c] sm:$0xf]
  %v92 = vld [vmem:[%s1 + $0x110] sm:$0xf]
  %v93 = vld [vmem:[%s1 + $0x114] sm:$0xf]
  %v94 = vld [vmem:[%s1 + $0x118] sm:$0xf]
  %v95 = vld [vmem:[%s1 + $0x11c] sm:$0xf]
  %v96 = vld [vmem:[%s1 + $0x120] sm:$0xf]
  %v97 = vld [vmem:[%s1 + $0x124] sm:$0xf]
  %v98 = vld [vmem:[%s1 + $0x128] sm:$0xf]
  %v99 = vld [vmem:[%s1 + $0x12c] sm:$0xf]
  %v100 = vld [vmem:[%s1 + $0x130] sm:$0xf]
  %v101 = vld [vmem:[%s1 + $0x134] sm:$0xf]
  %v102 = vld [vmem:[%s1 + $0x138] sm:$0xf]
  %v103 = vld [vmem:[%s1 + $0x13c] sm:$0xf]
  %v104 = vld [vmem:[%s1 + $0x140] sm:$0xf]
  %v105 = vld [vmem:[%s1 + $0x144] sm:$0xf]
  %v106 = vld [vmem:[%s1 + $0x148] sm:$0xf]
  %v107 = vld [vmem:[%s1 + $0x14c] sm:$0xf]
  %v108 = vld [vmem:[%s1 + $0x150] sm:$0xf]
  %v109 = vld [vmem:[%s1 + $0x154] sm:$0xf]
  %v110 = vld [vmem:[%s1 + $0x158] sm:$0xf]
  %v111 = vld [vmem:[%s1 + $0x15c] sm:$0xf]
  %v112 = vld [vmem:[%s1 + $0x160] sm:$0xf]
  %v113 = vld [vmem:[%s1 + $0x164] sm:$0xf]
  %v114 = vld [vmem:[%s2] sm:$0xff]
  %v115 = vld [vmem:[%s2 + $0x8] sm:$0xff]
  %117 = vset.pattern.permute.xlu0 0
  %118 = vperm.xlu0 %117, %v114
  %v119 = vpop.permute.xlu0 %118
  %122 = vset.pattern.permute.xlu0 0
  %123 = vperm.xlu0 %122, %v115
  %v124 = vpop.permute.xlu0 %123
  %v132 = vunpack.c.l.b16 %v18
  %v133 = vunpack.c.h.b16 %v18
  %v134 = vunpack.c.l.b16 %v19
  %v135 = vunpack.c.h.b16 %v19
  %v136 = vunpack.c.l.b16 %v20
  %v137 = vunpack.c.h.b16 %v20
  %v138 = vunpack.c.l.b16 %v21
  %v139 = vunpack.c.h.b16 %v21
  %v140 = vunpack.c.l.b16 %v22
  %v141 = vunpack.c.h.b16 %v22
  %v142 = vunpack.c.l.b16 %v23
  %v143 = vunpack.c.h.b16 %v23
  %v144 = vpack.c.b16 %v138, %v132
  %v145 = vpack.c.b16 %v139, %v133
  %v146 = vpack.c.b16 %v140, %v134
  %v147 = vpack.c.b16 %v141, %v135
  %v148 = vpack.c.b16 %v142, %v136
  %v149 = vpack.c.b16 %v143, %v137
  %v245 = vunpack.c.l.b16 %v24
  %v246 = vunpack.c.l.b16 %v25
  %v247 = vunpack.c.l.b16 %v26
  %v248 = vunpack.c.l.b16 %v27
  %v249 = vunpack.c.l.b16 %v28
  %v250 = vunpack.c.l.b16 %v29
  %v251 = vunpack.c.l.b16 %v30
  %v252 = vunpack.c.l.b16 %v31
  %v253 = vunpack.c.l.b16 %v32
  %v254 = vunpack.c.l.b16 %v33
  %v255 = vunpack.c.l.b16 %v34
  %v256 = vunpack.c.l.b16 %v35
  %v257 = vunpack.c.l.b16 %v36
  %v258 = vunpack.c.l.b16 %v37
  %v259 = vunpack.c.l.b16 %v38
  %v260 = vunpack.c.l.b16 %v39
  %v261 = vunpack.c.l.b16 %v40
  %v262 = vunpack.c.l.b16 %v41
  %v263 = vunpack.c.l.b16 %v42
  %v264 = vunpack.c.l.b16 %v43
  %v265 = vunpack.c.l.b16 %v44
  %v266 = vunpack.c.l.b16 %v45
  %v267 = vunpack.c.l.b16 %v46
  %v268 = vunpack.c.l.b16 %v47
  %v269 = vunpack.c.l.b16 %v48
  %v270 = vunpack.c.l.b16 %v49
  %v271 = vunpack.c.l.b16 %v50
  %v272 = vunpack.c.l.b16 %v51
  %v273 = vunpack.c.l.b16 %v52
  %v274 = vunpack.c.l.b16 %v53
  %v275 = vunpack.c.l.b16 %v54
  %v276 = vunpack.c.l.b16 %v55
  %v277 = vunpack.c.l.b16 %v56
  %v278 = vunpack.c.l.b16 %v57
  %v279 = vunpack.c.l.b16 %v58
  %v280 = vunpack.c.l.b16 %v59
  %v281 = vunpack.c.l.b16 %v60
  %v282 = vunpack.c.l.b16 %v61
  %v283 = vunpack.c.l.b16 %v62
  %v284 = vunpack.c.l.b16 %v63
  %v285 = vunpack.c.l.b16 %v64
  %v286 = vunpack.c.l.b16 %v65
  %v287 = vunpack.c.l.b16 %v66
  %v288 = vunpack.c.l.b16 %v67
  %v289 = vunpack.c.l.b16 %v68
  %v290 = vunpack.c.l.b16 %v69
  %v291 = vunpack.c.l.b16 %v70
  %v292 = vunpack.c.l.b16 %v71
  %v293 = vunpack.c.l.b16 %v72
  %v294 = vunpack.c.l.b16 %v73
  %v295 = vunpack.c.l.b16 %v74
  %v296 = vunpack.c.l.b16 %v75
  %v297 = vunpack.c.l.b16 %v76
  %v298 = vunpack.c.l.b16 %v77
  %v299 = vunpack.c.l.b16 %v78
  %v300 = vunpack.c.l.b16 %v79
  %v301 = vunpack.c.l.b16 %v80
  %v302 = vunpack.c.l.b16 %v81
  %v303 = vunpack.c.l.b16 %v82
  %v304 = vunpack.c.l.b16 %v83
  %v305 = vunpack.c.l.b16 %v84
  %v306 = vunpack.c.l.b16 %v85
  %v307 = vunpack.c.l.b16 %v86
  %v308 = vunpack.c.l.b16 %v87
  %v309 = vunpack.c.l.b16 %v88
  %v310 = vunpack.c.l.b16 %v89
  %v311 = vunpack.c.l.b16 %v90
  %v312 = vunpack.c.l.b16 %v91
  %v313 = vunpack.c.l.b16 %v92
  %v314 = vunpack.c.l.b16 %v93
  %v315 = vunpack.c.l.b16 %v94
  %v316 = vunpack.c.l.b16 %v95
  %v317 = vunpack.c.l.b16 %v96
  %v318 = vunpack.c.l.b16 %v97
  %v319 = vunpack.c.l.b16 %v98
  %v320 = vunpack.c.l.b16 %v99
  %v321 = vunpack.c.l.b16 %v100
  %v322 = vunpack.c.l.b16 %v101
  %v323 = vunpack.c.l.b16 %v102
  %v324 = vunpack.c.l.b16 %v103
  %v325 = vunpack.c.l.b16 %v104
  %v326 = vunpack.c.l.b16 %v105
  %v327 = vunpack.c.l.b16 %v106
  %v328 = vunpack.c.l.b16 %v107
  %v329 = vunpack.c.l.b16 %v108
  %v330 = vunpack.c.l.b16 %v109
  %v331 = vunpack.c.l.b16 %v110
  %v332 = vunpack.c.l.b16 %v111
  %v333 = vunpack.c.l.b16 %v112
  %v334 = vunpack.c.l.b16 %v113
  %v335 = vpack.c.b16 %v246, %v245
  %v336 = vpack.c.b16 %v248, %v247
  %v337 = vpack.c.b16 %v250, %v249
  %v338 = vpack.c.b16 %v252, %v251
  %v339 = vpack.c.b16 %v254, %v253
  %v340 = vpack.c.b16 %v256, %v255
  %v341 = vpack.c.b16 %v258, %v257
  %v342 = vpack.c.b16 %v260, %v259
  %v343 = vpack.c.b16 %v262, %v261
  %v344 = vpack.c.b16 %v264, %v263
  %v345 = vpack.c.b16 %v266, %v265
  %v346 = vpack.c.b16 %v268, %v267
  %v347 = vpack.c.b16 %v270, %v269
  %v348 = vpack.c.b16 %v272, %v271
  %v349 = vpack.c.b16 %v274, %v273
  %v350 = vpack.c.b16 %v276, %v275
  %v351 = vpack.c.b16 %v278, %v277
  %v352 = vpack.c.b16 %v280, %v279
  %v353 = vpack.c.b16 %v282, %v281
  %v354 = vpack.c.b16 %v284, %v283
  %v355 = vpack.c.b16 %v286, %v285
  %v356 = vpack.c.b16 %v288, %v287
  %v357 = vpack.c.b16 %v290, %v289
  %v358 = vpack.c.b16 %v292, %v291
  %v359 = vpack.c.b16 %v294, %v293
  %v360 = vpack.c.b16 %v296, %v295
  %v361 = vpack.c.b16 %v298, %v297
  %v362 = vpack.c.b16 %v300, %v299
  %v363 = vpack.c.b16 %v302, %v301
  %v364 = vpack.c.b16 %v304, %v303
  %v365 = vpack.c.b16 %v306, %v305
  %v366 = vpack.c.b16 %v308, %v307
  %v367 = vpack.c.b16 %v310, %v309
  %v368 = vpack.c.b16 %v312, %v311
  %v369 = vpack.c.b16 %v314, %v313
  %v370 = vpack.c.b16 %v316, %v315
  %v371 = vpack.c.b16 %v318, %v317
  %v372 = vpack.c.b16 %v320, %v319
  %v373 = vpack.c.b16 %v322, %v321
  %v374 = vpack.c.b16 %v324, %v323
  %v375 = vpack.c.b16 %v326, %v325
  %v376 = vpack.c.b16 %v328, %v327
  %v377 = vpack.c.b16 %v330, %v329
  %v378 = vpack.c.b16 %v332, %v331
  %v379 = vpack.c.b16 %v334, %v333
  %vm425 = vcmask 654336
  %v427 = vsel %vm425, %v149, 0
  %429 = vmatprep.subr.bf16.mxu0 0
  %430 = vmatpush1.bf16.msra.mxu0 %v335
  %431 = vmatprep.subr.bf16.mxu0 0
  %432 = vmatpush1.bf16.msra.mxu0 %v336
  %433 = vmatprep.subr.bf16.mxu0 0
  %434 = vmatpush1.bf16.msra.mxu0 %v337
  %435 = vmatprep.subr.bf16.mxu0 0
  %436 = vmatpush1.bf16.msra.mxu0 %v338
  %437 = vmatprep.subr.bf16.mxu0 0
  %438 = vmatpush1.bf16.msra.mxu0 %v339
  %439 = vmatprep.subr.bf16.mxu0 0
  %440 = vmatpush1.bf16.msra.mxu0 %v340
  %441 = vmatprep.subr.bf16.mxu0 0
  %442 = vmatpush1.bf16.msra.mxu0 %v341
  %443 = vmatprep.subr.bf16.mxu0 0
  %444 = vmatpush1.bf16.msra.mxu0 %v342
  %445 = vmatprep.subr.bf16.mxu0 0
  %446 = vmatpush1.bf16.msra.mxu0 %v343
  %447 = vmatprep.subr.bf16.mxu0 0
  %448 = vmatpush1.bf16.msra.mxu0 %v344
  %449 = vmatprep.subr.bf16.mxu0 0
  %450 = vmatpush1.bf16.msra.mxu0 %v345
  %451 = vmatprep.subr.bf16.mxu0 0
  %452 = vmatpush1.bf16.msra.mxu0 %v346
  %453 = vmatprep.subr.bf16.mxu0 0
  %454 = vmatpush1.bf16.msra.mxu0 %v347
  %455 = vmatprep.subr.bf16.mxu0 0
  %456 = vmatpush1.bf16.msra.mxu0 %v348
  %457 = vmatprep.subr.bf16.mxu0 0
  %458 = vmatpush1.bf16.msra.mxu0 %v349
  %459 = vmatprep.subr.bf16.mxu0 0
  %460 = vmatpush1.bf16.msra.mxu0 %v350
  %461 = vmatprep.mubr.bf16.mxu0 %v145
  %462 = vmatmul.mubr.bf16.gmra.mrb[0].mxu0 %v144
  %v463 = vpop.f32.mrb[0].mxu0
  %v464 = vadd.f32 %v119, %v463
  %v465 = vpop.f32.mrb[0].mxu0
  %v466 = vpop.f32.mrb[0].mxu0
  %v467 = vadd.f32 %v124, %v466
  %v468 = vpop.f32.mrb[0].mxu0
  %469 = vdwg.mxu0
  %470 = vmatprep.subr.bf16.mxu0 0
  %471 = vmatpush1.bf16.msra.mxu0 %v351
  %472 = vmatprep.subr.bf16.mxu0 0
  %473 = vmatpush1.bf16.msra.mxu0 %v352
  %474 = vmatprep.subr.bf16.mxu0 0
  %475 = vmatpush1.bf16.msra.mxu0 %v353
  %476 = vmatprep.subr.bf16.mxu0 0
  %477 = vmatpush1.bf16.msra.mxu0 %v354
  %478 = vmatprep.subr.bf16.mxu0 0
  %479 = vmatpush1.bf16.msra.mxu0 %v355
  %480 = vmatprep.subr.bf16.mxu0 0
  %481 = vmatpush1.bf16.msra.mxu0 %v356
  %482 = vmatprep.subr.bf16.mxu0 0
  %483 = vmatpush1.bf16.msra.mxu0 %v357
  %484 = vmatprep.subr.bf16.mxu0 0
  %485 = vmatpush1.bf16.msra.mxu0 %v358
  %486 = vmatprep.subr.bf16.mxu0 0
  %487 = vmatpush1.bf16.msra.mxu0 %v359
  %488 = vmatprep.subr.bf16.mxu0 0
  %489 = vmatpush1.bf16.msra.mxu0 %v360
  %490 = vmatprep.subr.bf16.mxu0 0
  %491 = vmatpush1.bf16.msra.mxu0 %v361
  %492 = vmatprep.subr.bf16.mxu0 0
  %493 = vmatpush1.bf16.msra.mxu0 %v362
  %494 = vmatprep.subr.bf16.mxu0 0
  %495 = vmatpush1.bf16.msra.mxu0 %v363
  %496 = vmatprep.subr.bf16.mxu0 0
  %497 = vmatpush1.bf16.msra.mxu0 %v364
  %498 = vmatprep.subr.bf16.mxu0 0
  %499 = vmatpush1.bf16.msra.mxu0 %v365
  %500 = vmatprep.subr.bf16.mxu0 0
  %501 = vmatpush1.bf16.msra.mxu0 %v366
  %502 = vmatprep.mubr.bf16.mxu0 %v147
  %503 = vmatmul.mubr.bf16.gmra.mrb[0].mxu0 %v146
  %v504 = vpop.f32.mrb[0].mxu0
  %v505 = vadd.f32 %v464, %v504
  %v506 = vpop.f32.mrb[0].mxu0
  %v507 = vpop.f32.mrb[0].mxu0
  %v508 = vadd.f32 %v467, %v507
  %v509 = vpop.f32.mrb[0].mxu0
  %510 = vdwg.mxu0
  %511 = vmatprep.subr.bf16.mxu0 0
  %512 = vmatpush1.bf16.msra.mxu0 %v367
  %513 = vmatprep.subr.bf16.mxu0 0
  %514 = vmatpush1.bf16.msra.mxu0 %v368
  %515 = vmatprep.subr.bf16.mxu0 0
  %516 = vmatpush1.bf16.msra.mxu0 %v369
  %517 = vmatprep.subr.bf16.mxu0 0
  %518 = vmatpush1.bf16.msra.mxu0 %v370
  %519 = vmatprep.subr.bf16.mxu0 0
  %520 = vmatpush1.bf16.msra.mxu0 %v371
  %521 = vmatprep.subr.bf16.mxu0 0
  %522 = vmatpush1.bf16.msra.mxu0 %v372
  %523 = vmatprep.subr.bf16.mxu0 0
  %524 = vmatpush1.bf16.msra.mxu0 %v373
  %525 = vmatprep.subr.bf16.mxu0 0
  %526 = vmatpush1.bf16.msra.mxu0 %v374
  %527 = vmatprep.subr.bf16.mxu0 0
  %528 = vmatpush1.bf16.msra.mxu0 %v375
  %529 = vmatprep.subr.bf16.mxu0 0
  %530 = vmatpush1.bf16.msra.mxu0 %v376
  %531 = vmatprep.subr.bf16.mxu0 0
  %532 = vmatpush1.bf16.msra.mxu0 %v377
  %533 = vmatprep.subr.bf16.mxu0 0
  %534 = vmatpush1.bf16.msra.mxu0 %v378
  %535 = vmatprep.subr.bf16.mxu0 0
  %536 = vmatpush1.bf16.msra.mxu0 %v379
  %537 = vmatprep.subr.bf16.mxu0 0
  %538 = vmatpush1.bf16.msra.mxu0 0
  %539 = vmatprep.subr.bf16.mxu0 0
  %540 = vmatpush1.bf16.msra.mxu0 0
  %541 = vmatprep.subr.bf16.mxu0 0
  %542 = vmatpush1.bf16.msra.mxu0 0
  %543 = vmatprep.mubr.bf16.mxu0 %v427
  %544 = vmatmul.mubr.bf16.gmra.mrb[0].mxu0 %v148
  %v545 = vpop.f32.mrb[0].mxu0
  %v546 = vadd.f32 %v505, %v545
  %v547 = vpop.f32.mrb[0].mxu0
  %v548 = vpop.f32.mrb[0].mxu0
  %v549 = vadd.f32 %v508, %v548
  %v550 = vpop.f32.mrb[0].mxu0
  %551 = vdwg.mxu0
  %v552 = vld [vmem:[%s3] sm:$0xf]
  %v553 = vld [vmem:[%s3 + $0x4] sm:$0xf]
  %v554 = vunpack.c.l.bf16 %v552
  %v555 = vunpack.c.l.bf16 %v553
  %v556 = vadd.f32 %v546, %v554
  %v557 = vadd.f32 %v549, %v555
  %v558 = vmax.f32 %v556, 0.0
  %v559 = vmax.f32 %v557, 0.0
  %v560 = vpack.c.bf16 %v559, %v558
  %v562 = vunpack.c.l.b16 %v560
  %v563 = vunpack.c.h.b16 %v560
  %v564 = vpack.c.b16 %v562, %v562
  %v565 = vpack.c.b16 %v563, %v563
  %568 = vst [vmem:[%s4] sm:$0xf] %v564
  %569 = vst [vmem:[%s4 + $0x4] sm:$0xf] %v565
  // Predicated region
  $region18: #{resnet_forward.13} parent=0 // pred_check
    _
  $region19: #{resnet_forward.13} parent=0 // pred_check_branch
    %571 = sbr.rel (0) target = $region21
  $region20: #{resnet_forward.13} parent=0 // pred_region
    _
  $region21: #{resnet_forward.13} parent=0 // pred_fallthru
    _
  // Predicated region
  $region22: #{resnet_forward.13} parent=0 // pred_check
    _
  $region23: #{resnet_forward.13} parent=0 // pred_check_branch
    %573 = sbr.rel (0) target = $region25
  $region24: #{resnet_forward.13} parent=0 // pred_region
    _
  $region25: #{resnet_forward.13} parent=0 // pred_fallthru
    _

</llo_original>
